<compile_context>
chip_gen: v6e
topology: v6e:2x2x1
jax: 0.10.0
libtpu: 0.0.40
codegen_flags: <defaults>
</compile_context>

<pallas_src>
import jax
import jax.numpy as jnp
from jax.experimental import pallas as pl
from jax.experimental.pallas import tpu as pltpu


# ----------------------------------------------------------------------------
# Fused forward kernel.
#   xcol_ref:  (L1*B, 3F)   conv1 im2col rows (row = t*B + b), f32
#   cw1s_ref:  (3F, 64)     tap-stacked conv1 weight (f32), cb1: (1, 64)
#   cw2_ref:   (3, 64, 64)  conv2 weight (f32),             cb2: (1, 64)
#   wih1c_ref: (64, 4*Hp)   layer-1 input gate weight (bf16, g-gate x2)
#   lb1_ref:   (1, 4*Hp)    layer-1 combined bias (f32, g-gate x2)
#   wh1_ref:   (64, 8*Hp)   fused [whh1c | wih2c] (bf16)
#   lb2_ref:   (1, 4*Hp)    layer-2 combined bias (f32)
#   wh2_ref:   (L2, 64, 4*Hp+128)  fused per-timestep [whh2c | wf1[t]] (bf16)
#   bf1_ref:   (1, 128), wf2r_ref: (1, 128), bf2_ref: (1, 1)   (f32)
#   o_ref:     (B, 1)
#   xp1_s:     VMEM scratch (L2*B, 4*Hp) for the hoisted layer-1 projection
# ----------------------------------------------------------------------------
def _fused_kernel(xcol_ref, cw1s_ref, cb1_ref, cw2_ref, cb2_ref,
                  wih1c_ref, lb1_ref, wh1_ref, lb2_ref, wh2_ref,
                  bf1_ref, wf2r_ref, bf2_ref,
                  o_ref, xp1_s):
    K = cw2_ref.shape[0]                  # conv kernel size (3)
    Hp = wh1_ref.shape[0]                 # padded hidden (64)
    G = 4 * Hp                            # concatenated gate width (256)
    L2 = wh2_ref.shape[0]                 # T - 4 (conv2 / LSTM length)
    L1 = L2 + K - 1                       # T - 2
    B = xcol_ref.shape[0] // L1           # padded batch (multiple of 8)

    # ---- conv1 + ReLU: single im2col dot ------------------------------------
    y1 = jnp.maximum(
        jnp.dot(xcol_ref[...], cw1s_ref[...],
                preferred_element_type=jnp.float32) + cb1_ref[...], 0.0)

    # ---- conv2 + ReLU: 3 aligned tap dots ------------------------------------
    acc2 = jnp.zeros((L2 * B, cw2_ref.shape[2]), jnp.float32) + cb2_ref[...]
    for k in range(K):
        acc2 = acc2 + jnp.dot(y1[k * B:k * B + L2 * B, :], cw2_ref[k],
                              preferred_element_type=jnp.float32)
    y2 = jnp.maximum(acc2, 0.0)                                 # (L2*B, 64)

    # ---- LSTM layer-1 input projection hoisted out of the recurrence --------
    xp1_s[...] = (jnp.dot(y2.astype(jnp.bfloat16), wih1c_ref[...],
                          preferred_element_type=jnp.float32)
                  + lb1_ref[...])                               # (L2*B, 4*Hp)

    def lstm_update(gates, c):
        # PyTorch gate order i|f|g|o.  g-gate pre-activations were pre-scaled
        # x2 in the weights, so ONE full-width sigmoid gives all gates and
        # g = tanh(z) = 2*sigmoid(2z) - 1 is a cheap VALU affine.
        s = jax.nn.sigmoid(gates)
        i = s[:, 0 * Hp:1 * Hp]
        f = s[:, 1 * Hp:2 * Hp]
        g = 2.0 * s[:, 2 * Hp:3 * Hp] - 1.0
        o = s[:, 3 * Hp:4 * Hp]
        c_new = f * c + i * g
        return o * jnp.tanh(c_new), c_new

    c1 = c2 = jnp.zeros((B, Hp), jnp.float32)
    rec1 = jnp.zeros((B, G), jnp.float32)        # h1_{t-1} @ whh1c (carried)
    rec2 = jnp.zeros((B, G), jnp.float32)        # h2_{t-1} @ whh2c (carried)
    acc_fc = jnp.zeros((B, bf1_ref.shape[-1]), jnp.float32)     # fc1 accum

    # ---- unrolled recurrence: 2 fused MXU dots per step ----------------------
    for t in range(L2):
        # layer-1 cell (input projection read from VMEM scratch)
        h1, c1 = lstm_update(xp1_s[t * B:(t + 1) * B, :] + rec1, c1)
        # one fused dot on h1 -> [next-step rec1 | layer-2 input gates]
        p1 = jnp.dot(h1.astype(jnp.bfloat16), wh1_ref[...],
                     preferred_element_type=jnp.float32)        # (B, 2G)
        # layer-2 cell
        h2, c2 = lstm_update(lb2_ref[...] + p1[:, G:] + rec2, c2)
        # one fused dot on h2 -> [next-step rec2 | fc1 contribution of step t]
        p2 = jnp.dot(h2.astype(jnp.bfloat16), wh2_ref[t],
                     preferred_element_type=jnp.float32)        # (B, G+128)
        acc_fc = acc_fc + p2[:, G:]
        rec1 = p1[:, :G]
        rec2 = p2[:, :G]

    # ---- fc1 ReLU -> (dropout = identity) -> fc2 -----------------------------
    hfc = jnp.maximum(acc_fc + bf1_ref[...], 0.0)               # (B, 128)
    o_ref[...] = (jnp.sum(hfc * wf2r_ref[...], axis=-1, keepdims=True)
                  + bf2_ref[...])                               # (B, 1)


# ----------------------------------------------------------------------------
# Parameter re-layout (plain JAX, run once): gate-concat with g-gate x2 scale,
# zero-pad hidden to 64, build the fused [whh1c|wih2c] and per-timestep
# [whh2c|wf1[t]] weights (bf16), tap-stack conv1, pad fc widths to 128 lanes.
# ----------------------------------------------------------------------------
def prepare_params(p):
    H = p["whh1"].shape[-1]
    Hp = -(-H // 64) * 64
    n_fc1 = p["b_fc1"].shape[-1]
    Fp = -(-n_fc1 // 128) * 128
    t_out = p["w_fc1"].shape[0] // H
    g_scale = jnp.array([1.0, 1.0, 2.0, 1.0], jnp.float32)      # x2 on g-gate

    def gate_cat(w, din_pad):                # (4, din, H) -> (din_pad, 4*Hp)
        w = w * g_scale[:, None, None]
        w = jnp.pad(w, ((0, 0), (0, din_pad - w.shape[1]), (0, Hp - H)))
        return jnp.concatenate([w[g] for g in range(4)], axis=-1)

    def bias_cat(b):                         # (4, 1, H) -> (1, 4*Hp)
        b = b * g_scale[:, None, None]
        b = jnp.pad(b, ((0, 0), (0, 0), (0, Hp - H)))
        return jnp.concatenate([b[g] for g in range(4)], axis=-1)

    wih1c = gate_cat(p["wih1"], p["wih1"].shape[1])
    whh1c = gate_cat(p["whh1"], Hp)
    wih2c = gate_cat(p["wih2"], Hp)
    whh2c = gate_cat(p["whh2"], Hp)

    # fc1 weight per timestep, zero-padded rows (H->Hp) and cols (100->128)
    wf1 = p["w_fc1"].reshape(t_out, H, n_fc1)
    wf1 = jnp.pad(wf1, ((0, 0), (0, Hp - H), (0, Fp - n_fc1)))

    # Fused h1-consumer: [whh1c | wih2c]  (Hp, 8*Hp)
    wh1 = jnp.concatenate([whh1c, wih2c], axis=-1)
    # Fused per-timestep h2-consumer: [whh2c | wf1[t]]  (t_out, Hp, 4*Hp+Fp)
    wh2 = jnp.concatenate(
        [jnp.broadcast_to(whh2c[None], (t_out, Hp, 4 * Hp)), wf1], axis=-1)

    bf16 = jnp.bfloat16
    return {
        "cw1s": p["w_c1"].reshape(-1, p["w_c1"].shape[-1]),     # (3F, 64) f32
        "cb1": p["b_c1"],
        "cw2": p["w_c2"],                                       # (3,64,64) f32
        "cb2": p["b_c2"],
        "wih1c": wih1c.astype(bf16),                            # (64, 256)
        "lb1": bias_cat(p["b1"]),                               # (1, 256) f32
        "wh1": wh1.astype(bf16),                                # (64, 512)
        "lb2": bias_cat(p["b2"]),                               # (1, 256) f32
        "wh2": wh2.astype(bf16),                                # (12, 64, 384)
        "bf1": jnp.pad(p["b_fc1"], ((0, 0), (0, Fp - n_fc1))),  # (1, 128)
        "wf2r": jnp.pad(p["w_fc2"].T, ((0, 0), (0, Fp - n_fc1))),
        "bf2": p["b_fc2"],
    }


# ----------------------------------------------------------------------------
# Wrapper: pad batch to 8 sublanes, flatten time-major, build conv1 im2col,
# single pallas_call with everything resident in VMEM.
# ----------------------------------------------------------------------------
def cnn_lstm_forward(x, kp):
    B, T, F = x.shape
    L2 = kp["wh2"].shape[0]            # T - 4
    L1 = L2 + 2                        # T - 2
    G = kp["wih1c"].shape[1]           # 4*Hp
    B_pad = max(8, -(-B // 8) * 8)
    xp = jnp.pad(x, ((0, B_pad - B), (0, 0), (0, 0)))
    # time-major flattened rows: row = t * B_pad + b
    x2d = jnp.transpose(xp, (1, 0, 2)).reshape(T * B_pad, F)
    # conv1 im2col: 3 row-shifted copies concatenated on the feature axis
    xcol = jnp.concatenate(
        [x2d[k * B_pad:k * B_pad + L1 * B_pad] for k in range(3)], axis=-1)

    vmem = pl.BlockSpec(memory_space=pltpu.MemorySpace.VMEM)
    out = pl.pallas_call(
        _fused_kernel,
        out_shape=jax.ShapeDtypeStruct((B_pad, 1), jnp.float32),
        in_specs=[vmem] * 13,
        out_specs=vmem,
        scratch_shapes=[pltpu.VMEM((L2 * B_pad, G), jnp.float32)],
    )(xcol, kp["cw1s"], kp["cb1"], kp["cw2"], kp["cb2"],
      kp["wih1c"], kp["lb1"], kp["wh1"], kp["lb2"], kp["wh2"],
      kp["bf1"], kp["wf2r"], kp["bf2"])
    return out[:B]


# ----------------------------------------------------------------------------
# Pure-JAX f32 reference (same math, unpadded per-gate weights).
# ----------------------------------------------------------------------------
def _ref_forward(x, p):
    def conv(x, w, b):
        K = w.shape[0]
        L_out = x.shape[1] - K + 1
        y = jnp.zeros((x.shape[0], L_out, w.shape[2]), jnp.float32) + b[None]
        for k in range(K):
            y = y + jnp.einsum("blc,cd->bld", x[:, k:k + L_out, :], w[k])
        return jnp.maximum(y, 0.0)

    def cell(xt, h, c, wih, whh, b):
        gi = jax.nn.sigmoid(xt @ wih[0] + h @ whh[0] + b[0])
        gf = jax.nn.sigmoid(xt @ wih[1] + h @ whh[1] + b[1])
        gg = jnp.tanh(xt @ wih[2] + h @ whh[2] + b[2])
        go = jax.nn.sigmoid(xt @ wih[3] + h @ whh[3] + b[3])
        c = gf * c + gi * gg
        return go * jnp.tanh(c), c

    y = conv(x, p["w_c1"], p["b_c1"])
    y = conv(y, p["w_c2"], p["b_c2"])
    B, T, _ = y.shape
    H = p["whh1"].shape[-1]
    h1 = c1 = h2 = c2 = jnp.zeros((B, H), jnp.float32)
    outs = []
    for t in range(T):
        h1, c1 = cell(y[:, t], h1, c1, p["wih1"], p["whh1"], p["b1"])
        h2, c2 = cell(h1, h2, c2, p["wih2"], p["whh2"], p["b2"])
        outs.append(h2)
    seq = jnp.stack(outs, axis=1).reshape(B, -1)
    fc1 = jnp.maximum(seq @ p["w_fc1"] + p["b_fc1"], 0.0)
    return fc1 @ p["w_fc2"] + p["b_fc2"]


def init_params(key, num_features, num_timesteps, hidden):
    ks = jax.random.split(key, 16)
    u = lambda k, shape, bound: jax.random.uniform(
        k, shape, jnp.float32, -bound, bound)
    c1_b = 1.0 / jnp.sqrt(num_features * 3.0)
    c2_b = 1.0 / jnp.sqrt(64.0 * 3.0)
    l_b = 1.0 / jnp.sqrt(float(hidden))
    d1 = hidden * (num_timesteps - 4)
    fc1_b = 1.0 / jnp.sqrt(float(d1))
    fc2_b = 1.0 / jnp.sqrt(100.0)
    return {
        "w_c1": u(ks[0], (3, num_features, 64), c1_b),
        "b_c1": u(ks[1], (1, 64), c1_b),
        "w_c2": u(ks[2], (3, 64, 64), c2_b),
        "b_c2": u(ks[3], (1, 64), c2_b),
        "wih1": u(ks[4], (4, 64, hidden), l_b),
        "whh1": u(ks[5], (4, hidden, hidden), l_b),
        "b1":   u(ks[6], (4, 1, hidden), 2.0 * l_b),   # b_ih + b_hh combined
        "wih2": u(ks[7], (4, hidden, hidden), l_b),
        "whh2": u(ks[8], (4, hidden, hidden), l_b),
        "b2":   u(ks[9], (4, 1, hidden), 2.0 * l_b),
        "w_fc1": u(ks[10], (d1, 100), fc1_b),
        "b_fc1": u(ks[11], (1, 100), fc1_b),
        "w_fc2": u(ks[12], (100, 1), fc2_b),
        "b_fc2": u(ks[13], (1, 1), fc2_b),
    }


if __name__ == "__main__":
    B = 2
    num_features = 4
    num_timesteps = 16
    hidden = 50

    key = jax.random.PRNGKey(0)
    kx, kp_key = jax.random.split(key)
    x = jax.random.normal(kx, (B, num_timesteps, num_features), jnp.float32)
    params = init_params(kp_key, num_features, num_timesteps, hidden)

    kparams = prepare_params(params)
    fwd = jax.jit(cnn_lstm_forward)
    out = jax.block_until_ready(fwd(x, kparams))

    ref = jax.block_until_ready(_ref_forward(x, params))
    assert out.shape == (B, 1), out.shape
    # bf16 MXU operands on the recurrence -> compare against f32 reference
    # with a mixed-precision tolerance.
    assert jnp.allclose(out, ref, rtol=2e-2, atol=2e-2), (out, ref)

    print("KERNEL_OK")
</pallas_src>

<mosaic_0001>
module attributes {stable_mosaic.version = 11 : i64} {
  func.func @_fused_kernel(%arg0: memref<112x12xf32, #tpu.memory_space<vmem>>, %arg1: memref<12x64xf32, #tpu.memory_space<vmem>>, %arg2: memref<1x64xf32, #tpu.memory_space<vmem>>, %arg3: memref<3x64x64xf32, #tpu.memory_space<vmem>>, %arg4: memref<1x64xf32, #tpu.memory_space<vmem>>, %arg5: memref<64x256xbf16, #tpu.memory_space<vmem>>, %arg6: memref<1x256xf32, #tpu.memory_space<vmem>>, %arg7: memref<64x512xbf16, #tpu.memory_space<vmem>>, %arg8: memref<1x256xf32, #tpu.memory_space<vmem>>, %arg9: memref<12x64x384xbf16, #tpu.memory_space<vmem>>, %arg10: memref<1x128xf32, #tpu.memory_space<vmem>>, %arg11: memref<1x128xf32, #tpu.memory_space<vmem>>, %arg12: memref<1x1xf32, #tpu.memory_space<vmem>>, %arg13: memref<8x1xf32, #tpu.memory_space<vmem>>, %arg14: memref<96x256xf32, #tpu.memory_space<vmem>>) attributes {dimension_semantics = [], scalar_prefetch = 0 : i64, scratch_operands = 1 : i64, tpu.core_type = #tpu.core_type<tc>} {
    %c0 = arith.constant 0 : index
    %c0_0 = arith.constant 0 : index
    %0 = vector.load %arg0[%c0, %c0_0] : memref<112x12xf32, #tpu.memory_space<vmem>>, vector<112x12xf32>
    %c0_1 = arith.constant 0 : index
    %c0_2 = arith.constant 0 : index
    %1 = vector.load %arg1[%c0_1, %c0_2] : memref<12x64xf32, #tpu.memory_space<vmem>>, vector<12x64xf32>
    %cst = arith.constant dense<0.000000e+00> : vector<112x64xf32>
    %2 = tpu.matmul %0, %1, %cst {dimension_numbers = #tpu.dot_dimension_numbers<[1], [0], [0], [1], [0, 0, 1, 1], [], []>} : vector<112x12xf32>, vector<12x64xf32>, vector<112x64xf32> -> vector<112x64xf32>
    %c0_3 = arith.constant 0 : index
    %c0_4 = arith.constant 0 : index
    %3 = vector.load %arg2[%c0_3, %c0_4] : memref<1x64xf32, #tpu.memory_space<vmem>>, vector<1x64xf32>
    %4 = vector.broadcast %3 : vector<1x64xf32> to vector<112x64xf32>
    %5 = arith.addf %2, %4 : vector<112x64xf32>
    %cst_5 = arith.constant 0.000000e+00 : f32
    %6 = vector.broadcast %cst_5 : f32 to vector<112x64xf32>
    %7 = arith.maximumf %5, %6 : vector<112x64xf32>
    %cst_6 = arith.constant 0.000000e+00 : f32
    %8 = vector.broadcast %cst_6 : f32 to vector<96x64xf32>
    %c0_7 = arith.constant 0 : index
    %c0_8 = arith.constant 0 : index
    %9 = vector.load %arg4[%c0_7, %c0_8] : memref<1x64xf32, #tpu.memory_space<vmem>>, vector<1x64xf32>
    %10 = vector.broadcast %9 : vector<1x64xf32> to vector<96x64xf32>
    %11 = arith.addf %8, %10 : vector<96x64xf32>
    %12 = vector.extract_strided_slice %7 {offsets = [0, 0], sizes = [96, 64], strides = [1, 1]} : vector<112x64xf32> to vector<96x64xf32>
    %c0_9 = arith.constant 0 : index
    %c0_10 = arith.constant 0 : index
    %c0_11 = arith.constant 0 : index
    %13 = vector.load %arg3[%c0_9, %c0_10, %c0_11] : memref<3x64x64xf32, #tpu.memory_space<vmem>>, vector<1x64x64xf32>
    %14 = vector.shape_cast %13 : vector<1x64x64xf32> to vector<64x64xf32>
    %cst_12 = arith.constant dense<0.000000e+00> : vector<96x64xf32>
    %15 = tpu.matmul %12, %14, %cst_12 {dimension_numbers = #tpu.dot_dimension_numbers<[1], [0], [0], [1], [0, 0, 1, 1], [], []>} : vector<96x64xf32>, vector<64x64xf32>, vector<96x64xf32> -> vector<96x64xf32>
    %16 = arith.addf %11, %15 : vector<96x64xf32>
    %17 = vector.extract_strided_slice %7 {offsets = [8, 0], sizes = [96, 64], strides = [1, 1]} : vector<112x64xf32> to vector<96x64xf32>
    %c1 = arith.constant 1 : index
    %c0_13 = arith.constant 0 : index
    %c0_14 = arith.constant 0 : index
    %18 = vector.load %arg3[%c1, %c0_13, %c0_14] : memref<3x64x64xf32, #tpu.memory_space<vmem>>, vector<1x64x64xf32>
    %19 = vector.shape_cast %18 : vector<1x64x64xf32> to vector<64x64xf32>
    %cst_15 = arith.constant dense<0.000000e+00> : vector<96x64xf32>
    %20 = tpu.matmul %17, %19, %cst_15 {dimension_numbers = #tpu.dot_dimension_numbers<[1], [0], [0], [1], [0, 0, 1, 1], [], []>} : vector<96x64xf32>, vector<64x64xf32>, vector<96x64xf32> -> vector<96x64xf32>
    %21 = arith.addf %16, %20 : vector<96x64xf32>
    %22 = vector.extract_strided_slice %7 {offsets = [16, 0], sizes = [96, 64], strides = [1, 1]} : vector<112x64xf32> to vector<96x64xf32>
    %c2 = arith.constant 2 : index
    %c0_16 = arith.constant 0 : index
    %c0_17 = arith.constant 0 : index
    %23 = vector.load %arg3[%c2, %c0_16, %c0_17] : memref<3x64x64xf32, #tpu.memory_space<vmem>>, vector<1x64x64xf32>
    %24 = vector.shape_cast %23 : vector<1x64x64xf32> to vector<64x64xf32>
    %cst_18 = arith.constant dense<0.000000e+00> : vector<96x64xf32>
    %25 = tpu.matmul %22, %24, %cst_18 {dimension_numbers = #tpu.dot_dimension_numbers<[1], [0], [0], [1], [0, 0, 1, 1], [], []>} : vector<96x64xf32>, vector<64x64xf32>, vector<96x64xf32> -> vector<96x64xf32>
    %26 = arith.addf %21, %25 : vector<96x64xf32>
    %cst_19 = arith.constant 0.000000e+00 : f32
    %27 = vector.broadcast %cst_19 : f32 to vector<96x64xf32>
    %28 = arith.maximumf %26, %27 : vector<96x64xf32>
    %29 = arith.truncf %28 : vector<96x64xf32> to vector<96x64xbf16>
    %c0_20 = arith.constant 0 : index
    %c0_21 = arith.constant 0 : index
    %30 = vector.load %arg5[%c0_20, %c0_21] : memref<64x256xbf16, #tpu.memory_space<vmem>>, vector<64x256xbf16>
    %cst_22 = arith.constant dense<0.000000e+00> : vector<96x256xf32>
    %31 = tpu.matmul %29, %30, %cst_22 {dimension_numbers = #tpu.dot_dimension_numbers<[1], [0], [0], [1], [0, 0, 1, 1], [], []>} : vector<96x64xbf16>, vector<64x256xbf16>, vector<96x256xf32> -> vector<96x256xf32>
    %c0_23 = arith.constant 0 : index
    %c0_24 = arith.constant 0 : index
    %32 = vector.load %arg6[%c0_23, %c0_24] : memref<1x256xf32, #tpu.memory_space<vmem>>, vector<1x256xf32>
    %33 = vector.broadcast %32 : vector<1x256xf32> to vector<96x256xf32>
    %34 = arith.addf %31, %33 : vector<96x256xf32>
    %c0_25 = arith.constant 0 : index
    %c0_26 = arith.constant 0 : index
    %35 = vector.load %arg14[%c0_25, %c0_26] : memref<96x256xf32, #tpu.memory_space<vmem>>, vector<96x256xf32>
    tpu.vector_store %arg14[%c0_25, %c0_26], %34 {strides = array<i32>} : memref<96x256xf32, #tpu.memory_space<vmem>>, vector<96x256xf32>,
    %cst_27 = arith.constant 0.000000e+00 : f32
    %36 = vector.broadcast %cst_27 : f32 to vector<8x64xf32>
    %cst_28 = arith.constant 0.000000e+00 : f32
    %37 = vector.broadcast %cst_28 : f32 to vector<8x256xf32>
    %cst_29 = arith.constant 0.000000e+00 : f32
    %38 = vector.broadcast %cst_29 : f32 to vector<8x256xf32>
    %cst_30 = arith.constant 0.000000e+00 : f32
    %39 = vector.broadcast %cst_30 : f32 to vector<8x128xf32>
    %c0_31 = arith.constant 0 : index
    %c0_32 = arith.constant 0 : index
    %40 = vector.load %arg14[%c0_31, %c0_32] : memref<96x256xf32, #tpu.memory_space<vmem>>, vector<8x256xf32>
    %41 = arith.addf %40, %37 : vector<8x256xf32>
    %42 = arith.negf %41 : vector<8x256xf32>
    %43 = math.exp %42 : vector<8x256xf32>
    %cst_33 = arith.constant 1.000000e+00 : f32
    %44 = vector.broadcast %cst_33 : f32 to vector<8x256xf32>
    %45 = arith.addf %44, %43 : vector<8x256xf32>
    %46 = arith.divf %44, %45 : vector<8x256xf32>
    %47 = vector.extract_strided_slice %46 {offsets = [0, 0], sizes = [8, 64], strides = [1, 1]} : vector<8x256xf32> to vector<8x64xf32>
    %48 = vector.extract_strided_slice %46 {offsets = [0, 64], sizes = [8, 64], strides = [1, 1]} : vector<8x256xf32> to vector<8x64xf32>
    %49 = vector.extract_strided_slice %46 {offsets = [0, 128], sizes = [8, 64], strides = [1, 1]} : vector<8x256xf32> to vector<8x64xf32>
    %cst_34 = arith.constant 2.000000e+00 : f32
    %50 = vector.broadcast %cst_34 : f32 to vector<8x64xf32>
    %51 = arith.mulf %50, %49 : vector<8x64xf32>
    %cst_35 = arith.constant 1.000000e+00 : f32
    %52 = vector.broadcast %cst_35 : f32 to vector<8x64xf32>
    %53 = arith.subf %51, %52 : vector<8x64xf32>
    %54 = vector.extract_strided_slice %46 {offsets = [0, 192], sizes = [8, 64], strides = [1, 1]} : vector<8x256xf32> to vector<8x64xf32>
    %55 = arith.mulf %48, %36 : vector<8x64xf32>
    %56 = arith.mulf %47, %53 : vector<8x64xf32>
    %57 = arith.addf %55, %56 : vector<8x64xf32>
    %58 = math.tanh %57 : vector<8x64xf32>
    %59 = arith.mulf %54, %58 : vector<8x64xf32>
    %60 = arith.truncf %59 : vector<8x64xf32> to vector<8x64xbf16>
    %c0_36 = arith.constant 0 : index
    %c0_37 = arith.constant 0 : index
    %61 = vector.load %arg7[%c0_36, %c0_37] : memref<64x512xbf16, #tpu.memory_space<vmem>>, vector<64x512xbf16>
    %cst_38 = arith.constant dense<0.000000e+00> : vector<8x512xf32>
    %62 = tpu.matmul %60, %61, %cst_38 {dimension_numbers = #tpu.dot_dimension_numbers<[1], [0], [0], [1], [0, 0, 1, 1], [], []>} : vector<8x64xbf16>, vector<64x512xbf16>, vector<8x512xf32> -> vector<8x512xf32>
    %c0_39 = arith.constant 0 : index
    %c0_40 = arith.constant 0 : index
    %63 = vector.load %arg8[%c0_39, %c0_40] : memref<1x256xf32, #tpu.memory_space<vmem>>, vector<1x256xf32>
    %64 = vector.extract_strided_slice %62 {offsets = [0, 256], sizes = [8, 256], strides = [1, 1]} : vector<8x512xf32> to vector<8x256xf32>
    %65 = vector.broadcast %63 : vector<1x256xf32> to vector<8x256xf32>
    %66 = arith.addf %65, %64 : vector<8x256xf32>
    %67 = arith.addf %66, %38 : vector<8x256xf32>
    %68 = arith.negf %67 : vector<8x256xf32>
    %69 = math.exp %68 : vector<8x256xf32>
    %cst_41 = arith.constant 1.000000e+00 : f32
    %70 = vector.broadcast %cst_41 : f32 to vector<8x256xf32>
    %71 = arith.addf %70, %69 : vector<8x256xf32>
    %72 = arith.divf %70, %71 : vector<8x256xf32>
    %73 = vector.extract_strided_slice %72 {offsets = [0, 0], sizes = [8, 64], strides = [1, 1]} : vector<8x256xf32> to vector<8x64xf32>
    %74 = vector.extract_strided_slice %72 {offsets = [0, 64], sizes = [8, 64], strides = [1, 1]} : vector<8x256xf32> to vector<8x64xf32>
    %75 = vector.extract_strided_slice %72 {offsets = [0, 128], sizes = [8, 64], strides = [1, 1]} : vector<8x256xf32> to vector<8x64xf32>
    %cst_42 = arith.constant 2.000000e+00 : f32
    %76 = vector.broadcast %cst_42 : f32 to vector<8x64xf32>
    %77 = arith.mulf %76, %75 : vector<8x64xf32>
    %cst_43 = arith.constant 1.000000e+00 : f32
    %78 = vector.broadcast %cst_43 : f32 to vector<8x64xf32>
    %79 = arith.subf %77, %78 : vector<8x64xf32>
    %80 = vector.extract_strided_slice %72 {offsets = [0, 192], sizes = [8, 64], strides = [1, 1]} : vector<8x256xf32> to vector<8x64xf32>
    %81 = arith.mulf %74, %36 : vector<8x64xf32>
    %82 = arith.mulf %73, %79 : vector<8x64xf32>
    %83 = arith.addf %81, %82 : vector<8x64xf32>
    %84 = math.tanh %83 : vector<8x64xf32>
    %85 = arith.mulf %80, %84 : vector<8x64xf32>
    %86 = arith.truncf %85 : vector<8x64xf32> to vector<8x64xbf16>
    %c0_44 = arith.constant 0 : index
    %c0_45 = arith.constant 0 : index
    %c0_46 = arith.constant 0 : index
    %87 = vector.load %arg9[%c0_44, %c0_45, %c0_46] : memref<12x64x384xbf16, #tpu.memory_space<vmem>>, vector<1x64x384xbf16>
    %88 = vector.shape_cast %87 : vector<1x64x384xbf16> to vector<64x384xbf16>
    %cst_47 = arith.constant dense<0.000000e+00> : vector<8x384xf32>
    %89 = tpu.matmul %86, %88, %cst_47 {dimension_numbers = #tpu.dot_dimension_numbers<[1], [0], [0], [1], [0, 0, 1, 1], [], []>} : vector<8x64xbf16>, vector<64x384xbf16>, vector<8x384xf32> -> vector<8x384xf32>
    %90 = vector.extract_strided_slice %89 {offsets = [0, 256], sizes = [8, 128], strides = [1, 1]} : vector<8x384xf32> to vector<8x128xf32>
    %91 = arith.addf %39, %90 : vector<8x128xf32>
    %92 = vector.extract_strided_slice %62 {offsets = [0, 0], sizes = [8, 256], strides = [1, 1]} : vector<8x512xf32> to vector<8x256xf32>
    %93 = vector.extract_strided_slice %89 {offsets = [0, 0], sizes = [8, 256], strides = [1, 1]} : vector<8x384xf32> to vector<8x256xf32>
    %c8 = arith.constant 8 : index
    %c0_48 = arith.constant 0 : index
    %94 = vector.load %arg14[%c8, %c0_48] : memref<96x256xf32, #tpu.memory_space<vmem>>, vector<8x256xf32>
    %95 = arith.addf %94, %92 : vector<8x256xf32>
    %96 = arith.negf %95 : vector<8x256xf32>
    %97 = math.exp %96 : vector<8x256xf32>
    %cst_49 = arith.constant 1.000000e+00 : f32
    %98 = vector.broadcast %cst_49 : f32 to vector<8x256xf32>
    %99 = arith.addf %98, %97 : vector<8x256xf32>
    %100 = arith.divf %98, %99 : vector<8x256xf32>
    %101 = vector.extract_strided_slice %100 {offsets = [0, 0], sizes = [8, 64], strides = [1, 1]} : vector<8x256xf32> to vector<8x64xf32>
    %102 = vector.extract_strided_slice %100 {offsets = [0, 64], sizes = [8, 64], strides = [1, 1]} : vector<8x256xf32> to vector<8x64xf32>
    %103 = vector.extract_strided_slice %100 {offsets = [0, 128], sizes = [8, 64], strides = [1, 1]} : vector<8x256xf32> to vector<8x64xf32>
    %cst_50 = arith.constant 2.000000e+00 : f32
    %104 = vector.broadcast %cst_50 : f32 to vector<8x64xf32>
    %105 = arith.mulf %104, %103 : vector<8x64xf32>
    %cst_51 = arith.constant 1.000000e+00 : f32
    %106 = vector.broadcast %cst_51 : f32 to vector<8x64xf32>
    %107 = arith.subf %105, %106 : vector<8x64xf32>
    %108 = vector.extract_strided_slice %100 {offsets = [0, 192], sizes = [8, 64], strides = [1, 1]} : vector<8x256xf32> to vector<8x64xf32>
    %109 = arith.mulf %102, %57 : vector<8x64xf32>
    %110 = arith.mulf %101, %107 : vector<8x64xf32>
    %111 = arith.addf %109, %110 : vector<8x64xf32>
    %112 = math.tanh %111 : vector<8x64xf32>
    %113 = arith.mulf %108, %112 : vector<8x64xf32>
    %114 = arith.truncf %113 : vector<8x64xf32> to vector<8x64xbf16>
    %c0_52 = arith.constant 0 : index
    %c0_53 = arith.constant 0 : index
    %115 = vector.load %arg7[%c0_52, %c0_53] : memref<64x512xbf16, #tpu.memory_space<vmem>>, vector<64x512xbf16>
    %cst_54 = arith.constant dense<0.000000e+00> : vector<8x512xf32>
    %116 = tpu.matmul %114, %115, %cst_54 {dimension_numbers = #tpu.dot_dimension_numbers<[1], [0], [0], [1], [0, 0, 1, 1], [], []>} : vector<8x64xbf16>, vector<64x512xbf16>, vector<8x512xf32> -> vector<8x512xf32>
    %c0_55 = arith.constant 0 : index
    %c0_56 = arith.constant 0 : index
    %117 = vector.load %arg8[%c0_55, %c0_56] : memref<1x256xf32, #tpu.memory_space<vmem>>, vector<1x256xf32>
    %118 = vector.extract_strided_slice %116 {offsets = [0, 256], sizes = [8, 256], strides = [1, 1]} : vector<8x512xf32> to vector<8x256xf32>
    %119 = vector.broadcast %117 : vector<1x256xf32> to vector<8x256xf32>
    %120 = arith.addf %119, %118 : vector<8x256xf32>
    %121 = arith.addf %120, %93 : vector<8x256xf32>
    %122 = arith.negf %121 : vector<8x256xf32>
    %123 = math.exp %122 : vector<8x256xf32>
    %cst_57 = arith.constant 1.000000e+00 : f32
    %124 = vector.broadcast %cst_57 : f32 to vector<8x256xf32>
    %125 = arith.addf %124, %123 : vector<8x256xf32>
    %126 = arith.divf %124, %125 : vector<8x256xf32>
    %127 = vector.extract_strided_slice %126 {offsets = [0, 0], sizes = [8, 64], strides = [1, 1]} : vector<8x256xf32> to vector<8x64xf32>
    %128 = vector.extract_strided_slice %126 {offsets = [0, 64], sizes = [8, 64], strides = [1, 1]} : vector<8x256xf32> to vector<8x64xf32>
    %129 = vector.extract_strided_slice %126 {offsets = [0, 128], sizes = [8, 64], strides = [1, 1]} : vector<8x256xf32> to vector<8x64xf32>
    %cst_58 = arith.constant 2.000000e+00 : f32
    %130 = vector.broadcast %cst_58 : f32 to vector<8x64xf32>
    %131 = arith.mulf %130, %129 : vector<8x64xf32>
    %cst_59 = arith.constant 1.000000e+00 : f32
    %132 = vector.broadcast %cst_59 : f32 to vector<8x64xf32>
    %133 = arith.subf %131, %132 : vector<8x64xf32>
    %134 = vector.extract_strided_slice %126 {offsets = [0, 192], sizes = [8, 64], strides = [1, 1]} : vector<8x256xf32> to vector<8x64xf32>
    %135 = arith.mulf %128, %83 : vector<8x64xf32>
    %136 = arith.mulf %127, %133 : vector<8x64xf32>
    %137 = arith.addf %135, %136 : vector<8x64xf32>
    %138 = math.tanh %137 : vector<8x64xf32>
    %139 = arith.mulf %134, %138 : vector<8x64xf32>
    %140 = arith.truncf %139 : vector<8x64xf32> to vector<8x64xbf16>
    %c1_60 = arith.constant 1 : index
    %c0_61 = arith.constant 0 : index
    %c0_62 = arith.constant 0 : index
    %141 = vector.load %arg9[%c1_60, %c0_61, %c0_62] : memref<12x64x384xbf16, #tpu.memory_space<vmem>>, vector<1x64x384xbf16>
    %142 = vector.shape_cast %141 : vector<1x64x384xbf16> to vector<64x384xbf16>
    %cst_63 = arith.constant dense<0.000000e+00> : vector<8x384xf32>
    %143 = tpu.matmul %140, %142, %cst_63 {dimension_numbers = #tpu.dot_dimension_numbers<[1], [0], [0], [1], [0, 0, 1, 1], [], []>} : vector<8x64xbf16>, vector<64x384xbf16>, vector<8x384xf32> -> vector<8x384xf32>
    %144 = vector.extract_strided_slice %143 {offsets = [0, 256], sizes = [8, 128], strides = [1, 1]} : vector<8x384xf32> to vector<8x128xf32>
    %145 = arith.addf %91, %144 : vector<8x128xf32>
    %146 = vector.extract_strided_slice %116 {offsets = [0, 0], sizes = [8, 256], strides = [1, 1]} : vector<8x512xf32> to vector<8x256xf32>
    %147 = vector.extract_strided_slice %143 {offsets = [0, 0], sizes = [8, 256], strides = [1, 1]} : vector<8x384xf32> to vector<8x256xf32>
    %c16 = arith.constant 16 : index
    %c0_64 = arith.constant 0 : index
    %148 = vector.load %arg14[%c16, %c0_64] : memref<96x256xf32, #tpu.memory_space<vmem>>, vector<8x256xf32>
    %149 = arith.addf %148, %146 : vector<8x256xf32>
    %150 = arith.negf %149 : vector<8x256xf32>
    %151 = math.exp %150 : vector<8x256xf32>
    %cst_65 = arith.constant 1.000000e+00 : f32
    %152 = vector.broadcast %cst_65 : f32 to vector<8x256xf32>
    %153 = arith.addf %152, %151 : vector<8x256xf32>
    %154 = arith.divf %152, %153 : vector<8x256xf32>
    %155 = vector.extract_strided_slice %154 {offsets = [0, 0], sizes = [8, 64], strides = [1, 1]} : vector<8x256xf32> to vector<8x64xf32>
    %156 = vector.extract_strided_slice %154 {offsets = [0, 64], sizes = [8, 64], strides = [1, 1]} : vector<8x256xf32> to vector<8x64xf32>
    %157 = vector.extract_strided_slice %154 {offsets = [0, 128], sizes = [8, 64], strides = [1, 1]} : vector<8x256xf32> to vector<8x64xf32>
    %cst_66 = arith.constant 2.000000e+00 : f32
    %158 = vector.broadcast %cst_66 : f32 to vector<8x64xf32>
    %159 = arith.mulf %158, %157 : vector<8x64xf32>
    %cst_67 = arith.constant 1.000000e+00 : f32
    %160 = vector.broadcast %cst_67 : f32 to vector<8x64xf32>
    %161 = arith.subf %159, %160 : vector<8x64xf32>
    %162 = vector.extract_strided_slice %154 {offsets = [0, 192], sizes = [8, 64], strides = [1, 1]} : vector<8x256xf32> to vector<8x64xf32>
    %163 = arith.mulf %156, %111 : vector<8x64xf32>
    %164 = arith.mulf %155, %161 : vector<8x64xf32>
    %165 = arith.addf %163, %164 : vector<8x64xf32>
    %166 = math.tanh %165 : vector<8x64xf32>
    %167 = arith.mulf %162, %166 : vector<8x64xf32>
    %168 = arith.truncf %167 : vector<8x64xf32> to vector<8x64xbf16>
    %c0_68 = arith.constant 0 : index
    %c0_69 = arith.constant 0 : index
    %169 = vector.load %arg7[%c0_68, %c0_69] : memref<64x512xbf16, #tpu.memory_space<vmem>>, vector<64x512xbf16>
    %cst_70 = arith.constant dense<0.000000e+00> : vector<8x512xf32>
    %170 = tpu.matmul %168, %169, %cst_70 {dimension_numbers = #tpu.dot_dimension_numbers<[1], [0], [0], [1], [0, 0, 1, 1], [], []>} : vector<8x64xbf16>, vector<64x512xbf16>, vector<8x512xf32> -> vector<8x512xf32>
    %c0_71 = arith.constant 0 : index
    %c0_72 = arith.constant 0 : index
    %171 = vector.load %arg8[%c0_71, %c0_72] : memref<1x256xf32, #tpu.memory_space<vmem>>, vector<1x256xf32>
    %172 = vector.extract_strided_slice %170 {offsets = [0, 256], sizes = [8, 256], strides = [1, 1]} : vector<8x512xf32> to vector<8x256xf32>
    %173 = vector.broadcast %171 : vector<1x256xf32> to vector<8x256xf32>
    %174 = arith.addf %173, %172 : vector<8x256xf32>
    %175 = arith.addf %174, %147 : vector<8x256xf32>
    %176 = arith.negf %175 : vector<8x256xf32>
    %177 = math.exp %176 : vector<8x256xf32>
    %cst_73 = arith.constant 1.000000e+00 : f32
    %178 = vector.broadcast %cst_73 : f32 to vector<8x256xf32>
    %179 = arith.addf %178, %177 : vector<8x256xf32>
    %180 = arith.divf %178, %179 : vector<8x256xf32>
    %181 = vector.extract_strided_slice %180 {offsets = [0, 0], sizes = [8, 64], strides = [1, 1]} : vector<8x256xf32> to vector<8x64xf32>
    %182 = vector.extract_strided_slice %180 {offsets = [0, 64], sizes = [8, 64], strides = [1, 1]} : vector<8x256xf32> to vector<8x64xf32>
    %183 = vector.extract_strided_slice %180 {offsets = [0, 128], sizes = [8, 64], strides = [1, 1]} : vector<8x256xf32> to vector<8x64xf32>
    %cst_74 = arith.constant 2.000000e+00 : f32
    %184 = vector.broadcast %cst_74 : f32 to vector<8x64xf32>
    %185 = arith.mulf %184, %183 : vector<8x64xf32>
    %cst_75 = arith.constant 1.000000e+00 : f32
    %186 = vector.broadcast %cst_75 : f32 to vector<8x64xf32>
    %187 = arith.subf %185, %186 : vector<8x64xf32>
    %188 = vector.extract_strided_slice %180 {offsets = [0, 192], sizes = [8, 64], strides = [1, 1]} : vector<8x256xf32> to vector<8x64xf32>
    %189 = arith.mulf %182, %137 : vector<8x64xf32>
    %190 = arith.mulf %181, %187 : vector<8x64xf32>
    %191 = arith.addf %189, %190 : vector<8x64xf32>
    %192 = math.tanh %191 : vector<8x64xf32>
    %193 = arith.mulf %188, %192 : vector<8x64xf32>
    %194 = arith.truncf %193 : vector<8x64xf32> to vector<8x64xbf16>
    %c2_76 = arith.constant 2 : index
    %c0_77 = arith.constant 0 : index
    %c0_78 = arith.constant 0 : index
    %195 = vector.load %arg9[%c2_76, %c0_77, %c0_78] : memref<12x64x384xbf16, #tpu.memory_space<vmem>>, vector<1x64x384xbf16>
    %196 = vector.shape_cast %195 : vector<1x64x384xbf16> to vector<64x384xbf16>
    %cst_79 = arith.constant dense<0.000000e+00> : vector<8x384xf32>
    %197 = tpu.matmul %194, %196, %cst_79 {dimension_numbers = #tpu.dot_dimension_numbers<[1], [0], [0], [1], [0, 0, 1, 1], [], []>} : vector<8x64xbf16>, vector<64x384xbf16>, vector<8x384xf32> -> vector<8x384xf32>
    %198 = vector.extract_strided_slice %197 {offsets = [0, 256], sizes = [8, 128], strides = [1, 1]} : vector<8x384xf32> to vector<8x128xf32>
    %199 = arith.addf %145, %198 : vector<8x128xf32>
    %200 = vector.extract_strided_slice %170 {offsets = [0, 0], sizes = [8, 256], strides = [1, 1]} : vector<8x512xf32> to vector<8x256xf32>
    %201 = vector.extract_strided_slice %197 {offsets = [0, 0], sizes = [8, 256], strides = [1, 1]} : vector<8x384xf32> to vector<8x256xf32>
    %c24 = arith.constant 24 : index
    %c0_80 = arith.constant 0 : index
    %202 = vector.load %arg14[%c24, %c0_80] : memref<96x256xf32, #tpu.memory_space<vmem>>, vector<8x256xf32>
    %203 = arith.addf %202, %200 : vector<8x256xf32>
    %204 = arith.negf %203 : vector<8x256xf32>
    %205 = math.exp %204 : vector<8x256xf32>
    %cst_81 = arith.constant 1.000000e+00 : f32
    %206 = vector.broadcast %cst_81 : f32 to vector<8x256xf32>
    %207 = arith.addf %206, %205 : vector<8x256xf32>
    %208 = arith.divf %206, %207 : vector<8x256xf32>
    %209 = vector.extract_strided_slice %208 {offsets = [0, 0], sizes = [8, 64], strides = [1, 1]} : vector<8x256xf32> to vector<8x64xf32>
    %210 = vector.extract_strided_slice %208 {offsets = [0, 64], sizes = [8, 64], strides = [1, 1]} : vector<8x256xf32> to vector<8x64xf32>
    %211 = vector.extract_strided_slice %208 {offsets = [0, 128], sizes = [8, 64], strides = [1, 1]} : vector<8x256xf32> to vector<8x64xf32>
    %cst_82 = arith.constant 2.000000e+00 : f32
    %212 = vector.broadcast %cst_82 : f32 to vector<8x64xf32>
    %213 = arith.mulf %212, %211 : vector<8x64xf32>
    %cst_83 = arith.constant 1.000000e+00 : f32
    %214 = vector.broadcast %cst_83 : f32 to vector<8x64xf32>
    %215 = arith.subf %213, %214 : vector<8x64xf32>
    %216 = vector.extract_strided_slice %208 {offsets = [0, 192], sizes = [8, 64], strides = [1, 1]} : vector<8x256xf32> to vector<8x64xf32>
    %217 = arith.mulf %210, %165 : vector<8x64xf32>
    %218 = arith.mulf %209, %215 : vector<8x64xf32>
    %219 = arith.addf %217, %218 : vector<8x64xf32>
    %220 = math.tanh %219 : vector<8x64xf32>
    %221 = arith.mulf %216, %220 : vector<8x64xf32>
    %222 = arith.truncf %221 : vector<8x64xf32> to vector<8x64xbf16>
    %c0_84 = arith.constant 0 : index
    %c0_85 = arith.constant 0 : index
    %223 = vector.load %arg7[%c0_84, %c0_85] : memref<64x512xbf16, #tpu.memory_space<vmem>>, vector<64x512xbf16>
    %cst_86 = arith.constant dense<0.000000e+00> : vector<8x512xf32>
    %224 = tpu.matmul %222, %223, %cst_86 {dimension_numbers = #tpu.dot_dimension_numbers<[1], [0], [0], [1], [0, 0, 1, 1], [], []>} : vector<8x64xbf16>, vector<64x512xbf16>, vector<8x512xf32> -> vector<8x512xf32>
    %c0_87 = arith.constant 0 : index
    %c0_88 = arith.constant 0 : index
    %225 = vector.load %arg8[%c0_87, %c0_88] : memref<1x256xf32, #tpu.memory_space<vmem>>, vector<1x256xf32>
    %226 = vector.extract_strided_slice %224 {offsets = [0, 256], sizes = [8, 256], strides = [1, 1]} : vector<8x512xf32> to vector<8x256xf32>
    %227 = vector.broadcast %225 : vector<1x256xf32> to vector<8x256xf32>
    %228 = arith.addf %227, %226 : vector<8x256xf32>
    %229 = arith.addf %228, %201 : vector<8x256xf32>
    %230 = arith.negf %229 : vector<8x256xf32>
    %231 = math.exp %230 : vector<8x256xf32>
    %cst_89 = arith.constant 1.000000e+00 : f32
    %232 = vector.broadcast %cst_89 : f32 to vector<8x256xf32>
    %233 = arith.addf %232, %231 : vector<8x256xf32>
    %234 = arith.divf %232, %233 : vector<8x256xf32>
    %235 = vector.extract_strided_slice %234 {offsets = [0, 0], sizes = [8, 64], strides = [1, 1]} : vector<8x256xf32> to vector<8x64xf32>
    %236 = vector.extract_strided_slice %234 {offsets = [0, 64], sizes = [8, 64], strides = [1, 1]} : vector<8x256xf32> to vector<8x64xf32>
    %237 = vector.extract_strided_slice %234 {offsets = [0, 128], sizes = [8, 64], strides = [1, 1]} : vector<8x256xf32> to vector<8x64xf32>
    %cst_90 = arith.constant 2.000000e+00 : f32
    %238 = vector.broadcast %cst_90 : f32 to vector<8x64xf32>
    %239 = arith.mulf %238, %237 : vector<8x64xf32>
    %cst_91 = arith.constant 1.000000e+00 : f32
    %240 = vector.broadcast %cst_91 : f32 to vector<8x64xf32>
    %241 = arith.subf %239, %240 : vector<8x64xf32>
    %242 = vector.extract_strided_slice %234 {offsets = [0, 192], sizes = [8, 64], strides = [1, 1]} : vector<8x256xf32> to vector<8x64xf32>
    %243 = arith.mulf %236, %191 : vector<8x64xf32>
    %244 = arith.mulf %235, %241 : vector<8x64xf32>
    %245 = arith.addf %243, %244 : vector<8x64xf32>
    %246 = math.tanh %245 : vector<8x64xf32>
    %247 = arith.mulf %242, %246 : vector<8x64xf32>
    %248 = arith.truncf %247 : vector<8x64xf32> to vector<8x64xbf16>
    %c3 = arith.constant 3 : index
    %c0_92 = arith.constant 0 : index
    %c0_93 = arith.constant 0 : index
    %249 = vector.load %arg9[%c3, %c0_92, %c0_93] : memref<12x64x384xbf16, #tpu.memory_space<vmem>>, vector<1x64x384xbf16>
    %250 = vector.shape_cast %249 : vector<1x64x384xbf16> to vector<64x384xbf16>
    %cst_94 = arith.constant dense<0.000000e+00> : vector<8x384xf32>
    %251 = tpu.matmul %248, %250, %cst_94 {dimension_numbers = #tpu.dot_dimension_numbers<[1], [0], [0], [1], [0, 0, 1, 1], [], []>} : vector<8x64xbf16>, vector<64x384xbf16>, vector<8x384xf32> -> vector<8x384xf32>
    %252 = vector.extract_strided_slice %251 {offsets = [0, 256], sizes = [8, 128], strides = [1, 1]} : vector<8x384xf32> to vector<8x128xf32>
    %253 = arith.addf %199, %252 : vector<8x128xf32>
    %254 = vector.extract_strided_slice %224 {offsets = [0, 0], sizes = [8, 256], strides = [1, 1]} : vector<8x512xf32> to vector<8x256xf32>
    %255 = vector.extract_strided_slice %251 {offsets = [0, 0], sizes = [8, 256], strides = [1, 1]} : vector<8x384xf32> to vector<8x256xf32>
    %c32 = arith.constant 32 : index
    %c0_95 = arith.constant 0 : index
    %256 = vector.load %arg14[%c32, %c0_95] : memref<96x256xf32, #tpu.memory_space<vmem>>, vector<8x256xf32>
    %257 = arith.addf %256, %254 : vector<8x256xf32>
    %258 = arith.negf %257 : vector<8x256xf32>
    %259 = math.exp %258 : vector<8x256xf32>
    %cst_96 = arith.constant 1.000000e+00 : f32
    %260 = vector.broadcast %cst_96 : f32 to vector<8x256xf32>
    %261 = arith.addf %260, %259 : vector<8x256xf32>
    %262 = arith.divf %260, %261 : vector<8x256xf32>
    %263 = vector.extract_strided_slice %262 {offsets = [0, 0], sizes = [8, 64], strides = [1, 1]} : vector<8x256xf32> to vector<8x64xf32>
    %264 = vector.extract_strided_slice %262 {offsets = [0, 64], sizes = [8, 64], strides = [1, 1]} : vector<8x256xf32> to vector<8x64xf32>
    %265 = vector.extract_strided_slice %262 {offsets = [0, 128], sizes = [8, 64], strides = [1, 1]} : vector<8x256xf32> to vector<8x64xf32>
    %cst_97 = arith.constant 2.000000e+00 : f32
    %266 = vector.broadcast %cst_97 : f32 to vector<8x64xf32>
    %267 = arith.mulf %266, %265 : vector<8x64xf32>
    %cst_98 = arith.constant 1.000000e+00 : f32
    %268 = vector.broadcast %cst_98 : f32 to vector<8x64xf32>
    %269 = arith.subf %267, %268 : vector<8x64xf32>
    %270 = vector.extract_strided_slice %262 {offsets = [0, 192], sizes = [8, 64], strides = [1, 1]} : vector<8x256xf32> to vector<8x64xf32>
    %271 = arith.mulf %264, %219 : vector<8x64xf32>
    %272 = arith.mulf %263, %269 : vector<8x64xf32>
    %273 = arith.addf %271, %272 : vector<8x64xf32>
    %274 = math.tanh %273 : vector<8x64xf32>
    %275 = arith.mulf %270, %274 : vector<8x64xf32>
    %276 = arith.truncf %275 : vector<8x64xf32> to vector<8x64xbf16>
    %c0_99 = arith.constant 0 : index
    %c0_100 = arith.constant 0 : index
    %277 = vector.load %arg7[%c0_99, %c0_100] : memref<64x512xbf16, #tpu.memory_space<vmem>>, vector<64x512xbf16>
    %cst_101 = arith.constant dense<0.000000e+00> : vector<8x512xf32>
    %278 = tpu.matmul %276, %277, %cst_101 {dimension_numbers = #tpu.dot_dimension_numbers<[1], [0], [0], [1], [0, 0, 1, 1], [], []>} : vector<8x64xbf16>, vector<64x512xbf16>, vector<8x512xf32> -> vector<8x512xf32>
    %c0_102 = arith.constant 0 : index
    %c0_103 = arith.constant 0 : index
    %279 = vector.load %arg8[%c0_102, %c0_103] : memref<1x256xf32, #tpu.memory_space<vmem>>, vector<1x256xf32>
    %280 = vector.extract_strided_slice %278 {offsets = [0, 256], sizes = [8, 256], strides = [1, 1]} : vector<8x512xf32> to vector<8x256xf32>
    %281 = vector.broadcast %279 : vector<1x256xf32> to vector<8x256xf32>
    %282 = arith.addf %281, %280 : vector<8x256xf32>
    %283 = arith.addf %282, %255 : vector<8x256xf32>
    %284 = arith.negf %283 : vector<8x256xf32>
    %285 = math.exp %284 : vector<8x256xf32>
    %cst_104 = arith.constant 1.000000e+00 : f32
    %286 = vector.broadcast %cst_104 : f32 to vector<8x256xf32>
    %287 = arith.addf %286, %285 : vector<8x256xf32>
    %288 = arith.divf %286, %287 : vector<8x256xf32>
    %289 = vector.extract_strided_slice %288 {offsets = [0, 0], sizes = [8, 64], strides = [1, 1]} : vector<8x256xf32> to vector<8x64xf32>
    %290 = vector.extract_strided_slice %288 {offsets = [0, 64], sizes = [8, 64], strides = [1, 1]} : vector<8x256xf32> to vector<8x64xf32>
    %291 = vector.extract_strided_slice %288 {offsets = [0, 128], sizes = [8, 64], strides = [1, 1]} : vector<8x256xf32> to vector<8x64xf32>
    %cst_105 = arith.constant 2.000000e+00 : f32
    %292 = vector.broadcast %cst_105 : f32 to vector<8x64xf32>
    %293 = arith.mulf %292, %291 : vector<8x64xf32>
    %cst_106 = arith.constant 1.000000e+00 : f32
    %294 = vector.broadcast %cst_106 : f32 to vector<8x64xf32>
    %295 = arith.subf %293, %294 : vector<8x64xf32>
    %296 = vector.extract_strided_slice %288 {offsets = [0, 192], sizes = [8, 64], strides = [1, 1]} : vector<8x256xf32> to vector<8x64xf32>
    %297 = arith.mulf %290, %245 : vector<8x64xf32>
    %298 = arith.mulf %289, %295 : vector<8x64xf32>
    %299 = arith.addf %297, %298 : vector<8x64xf32>
    %300 = math.tanh %299 : vector<8x64xf32>
    %301 = arith.mulf %296, %300 : vector<8x64xf32>
    %302 = arith.truncf %301 : vector<8x64xf32> to vector<8x64xbf16>
    %c4 = arith.constant 4 : index
    %c0_107 = arith.constant 0 : index
    %c0_108 = arith.constant 0 : index
    %303 = vector.load %arg9[%c4, %c0_107, %c0_108] : memref<12x64x384xbf16, #tpu.memory_space<vmem>>, vector<1x64x384xbf16>
    %304 = vector.shape_cast %303 : vector<1x64x384xbf16> to vector<64x384xbf16>
    %cst_109 = arith.constant dense<0.000000e+00> : vector<8x384xf32>
    %305 = tpu.matmul %302, %304, %cst_109 {dimension_numbers = #tpu.dot_dimension_numbers<[1], [0], [0], [1], [0, 0, 1, 1], [], []>} : vector<8x64xbf16>, vector<64x384xbf16>, vector<8x384xf32> -> vector<8x384xf32>
    %306 = vector.extract_strided_slice %305 {offsets = [0, 256], sizes = [8, 128], strides = [1, 1]} : vector<8x384xf32> to vector<8x128xf32>
    %307 = arith.addf %253, %306 : vector<8x128xf32>
    %308 = vector.extract_strided_slice %278 {offsets = [0, 0], sizes = [8, 256], strides = [1, 1]} : vector<8x512xf32> to vector<8x256xf32>
    %309 = vector.extract_strided_slice %305 {offsets = [0, 0], sizes = [8, 256], strides = [1, 1]} : vector<8x384xf32> to vector<8x256xf32>
    %c40 = arith.constant 40 : index
    %c0_110 = arith.constant 0 : index
    %310 = vector.load %arg14[%c40, %c0_110] : memref<96x256xf32, #tpu.memory_space<vmem>>, vector<8x256xf32>
    %311 = arith.addf %310, %308 : vector<8x256xf32>
    %312 = arith.negf %311 : vector<8x256xf32>
    %313 = math.exp %312 : vector<8x256xf32>
    %cst_111 = arith.constant 1.000000e+00 : f32
    %314 = vector.broadcast %cst_111 : f32 to vector<8x256xf32>
    %315 = arith.addf %314, %313 : vector<8x256xf32>
    %316 = arith.divf %314, %315 : vector<8x256xf32>
    %317 = vector.extract_strided_slice %316 {offsets = [0, 0], sizes = [8, 64], strides = [1, 1]} : vector<8x256xf32> to vector<8x64xf32>
    %318 = vector.extract_strided_slice %316 {offsets = [0, 64], sizes = [8, 64], strides = [1, 1]} : vector<8x256xf32> to vector<8x64xf32>
    %319 = vector.extract_strided_slice %316 {offsets = [0, 128], sizes = [8, 64], strides = [1, 1]} : vector<8x256xf32> to vector<8x64xf32>
    %cst_112 = arith.constant 2.000000e+00 : f32
    %320 = vector.broadcast %cst_112 : f32 to vector<8x64xf32>
    %321 = arith.mulf %320, %319 : vector<8x64xf32>
    %cst_113 = arith.constant 1.000000e+00 : f32
    %322 = vector.broadcast %cst_113 : f32 to vector<8x64xf32>
    %323 = arith.subf %321, %322 : vector<8x64xf32>
    %324 = vector.extract_strided_slice %316 {offsets = [0, 192], sizes = [8, 64], strides = [1, 1]} : vector<8x256xf32> to vector<8x64xf32>
    %325 = arith.mulf %318, %273 : vector<8x64xf32>
    %326 = arith.mulf %317, %323 : vector<8x64xf32>
    %327 = arith.addf %325, %326 : vector<8x64xf32>
    %328 = math.tanh %327 : vector<8x64xf32>
    %329 = arith.mulf %324, %328 : vector<8x64xf32>
    %330 = arith.truncf %329 : vector<8x64xf32> to vector<8x64xbf16>
    %c0_114 = arith.constant 0 : index
    %c0_115 = arith.constant 0 : index
    %331 = vector.load %arg7[%c0_114, %c0_115] : memref<64x512xbf16, #tpu.memory_space<vmem>>, vector<64x512xbf16>
    %cst_116 = arith.constant dense<0.000000e+00> : vector<8x512xf32>
    %332 = tpu.matmul %330, %331, %cst_116 {dimension_numbers = #tpu.dot_dimension_numbers<[1], [0], [0], [1], [0, 0, 1, 1], [], []>} : vector<8x64xbf16>, vector<64x512xbf16>, vector<8x512xf32> -> vector<8x512xf32>
    %c0_117 = arith.constant 0 : index
    %c0_118 = arith.constant 0 : index
    %333 = vector.load %arg8[%c0_117, %c0_118] : memref<1x256xf32, #tpu.memory_space<vmem>>, vector<1x256xf32>
    %334 = vector.extract_strided_slice %332 {offsets = [0, 256], sizes = [8, 256], strides = [1, 1]} : vector<8x512xf32> to vector<8x256xf32>
    %335 = vector.broadcast %333 : vector<1x256xf32> to vector<8x256xf32>
    %336 = arith.addf %335, %334 : vector<8x256xf32>
    %337 = arith.addf %336, %309 : vector<8x256xf32>
    %338 = arith.negf %337 : vector<8x256xf32>
    %339 = math.exp %338 : vector<8x256xf32>
    %cst_119 = arith.constant 1.000000e+00 : f32
    %340 = vector.broadcast %cst_119 : f32 to vector<8x256xf32>
    %341 = arith.addf %340, %339 : vector<8x256xf32>
    %342 = arith.divf %340, %341 : vector<8x256xf32>
    %343 = vector.extract_strided_slice %342 {offsets = [0, 0], sizes = [8, 64], strides = [1, 1]} : vector<8x256xf32> to vector<8x64xf32>
    %344 = vector.extract_strided_slice %342 {offsets = [0, 64], sizes = [8, 64], strides = [1, 1]} : vector<8x256xf32> to vector<8x64xf32>
    %345 = vector.extract_strided_slice %342 {offsets = [0, 128], sizes = [8, 64], strides = [1, 1]} : vector<8x256xf32> to vector<8x64xf32>
    %cst_120 = arith.constant 2.000000e+00 : f32
    %346 = vector.broadcast %cst_120 : f32 to vector<8x64xf32>
    %347 = arith.mulf %346, %345 : vector<8x64xf32>
    %cst_121 = arith.constant 1.000000e+00 : f32
    %348 = vector.broadcast %cst_121 : f32 to vector<8x64xf32>
    %349 = arith.subf %347, %348 : vector<8x64xf32>
    %350 = vector.extract_strided_slice %342 {offsets = [0, 192], sizes = [8, 64], strides = [1, 1]} : vector<8x256xf32> to vector<8x64xf32>
    %351 = arith.mulf %344, %299 : vector<8x64xf32>
    %352 = arith.mulf %343, %349 : vector<8x64xf32>
    %353 = arith.addf %351, %352 : vector<8x64xf32>
    %354 = math.tanh %353 : vector<8x64xf32>
    %355 = arith.mulf %350, %354 : vector<8x64xf32>
    %356 = arith.truncf %355 : vector<8x64xf32> to vector<8x64xbf16>
    %c5 = arith.constant 5 : index
    %c0_122 = arith.constant 0 : index
    %c0_123 = arith.constant 0 : index
    %357 = vector.load %arg9[%c5, %c0_122, %c0_123] : memref<12x64x384xbf16, #tpu.memory_space<vmem>>, vector<1x64x384xbf16>
    %358 = vector.shape_cast %357 : vector<1x64x384xbf16> to vector<64x384xbf16>
    %cst_124 = arith.constant dense<0.000000e+00> : vector<8x384xf32>
    %359 = tpu.matmul %356, %358, %cst_124 {dimension_numbers = #tpu.dot_dimension_numbers<[1], [0], [0], [1], [0, 0, 1, 1], [], []>} : vector<8x64xbf16>, vector<64x384xbf16>, vector<8x384xf32> -> vector<8x384xf32>
    %360 = vector.extract_strided_slice %359 {offsets = [0, 256], sizes = [8, 128], strides = [1, 1]} : vector<8x384xf32> to vector<8x128xf32>
    %361 = arith.addf %307, %360 : vector<8x128xf32>
    %362 = vector.extract_strided_slice %332 {offsets = [0, 0], sizes = [8, 256], strides = [1, 1]} : vector<8x512xf32> to vector<8x256xf32>
    %363 = vector.extract_strided_slice %359 {offsets = [0, 0], sizes = [8, 256], strides = [1, 1]} : vector<8x384xf32> to vector<8x256xf32>
    %c48 = arith.constant 48 : index
    %c0_125 = arith.constant 0 : index
    %364 = vector.load %arg14[%c48, %c0_125] : memref<96x256xf32, #tpu.memory_space<vmem>>, vector<8x256xf32>
    %365 = arith.addf %364, %362 : vector<8x256xf32>
    %366 = arith.negf %365 : vector<8x256xf32>
    %367 = math.exp %366 : vector<8x256xf32>
    %cst_126 = arith.constant 1.000000e+00 : f32
    %368 = vector.broadcast %cst_126 : f32 to vector<8x256xf32>
    %369 = arith.addf %368, %367 : vector<8x256xf32>
    %370 = arith.divf %368, %369 : vector<8x256xf32>
    %371 = vector.extract_strided_slice %370 {offsets = [0, 0], sizes = [8, 64], strides = [1, 1]} : vector<8x256xf32> to vector<8x64xf32>
    %372 = vector.extract_strided_slice %370 {offsets = [0, 64], sizes = [8, 64], strides = [1, 1]} : vector<8x256xf32> to vector<8x64xf32>
    %373 = vector.extract_strided_slice %370 {offsets = [0, 128], sizes = [8, 64], strides = [1, 1]} : vector<8x256xf32> to vector<8x64xf32>
    %cst_127 = arith.constant 2.000000e+00 : f32
    %374 = vector.broadcast %cst_127 : f32 to vector<8x64xf32>
    %375 = arith.mulf %374, %373 : vector<8x64xf32>
    %cst_128 = arith.constant 1.000000e+00 : f32
    %376 = vector.broadcast %cst_128 : f32 to vector<8x64xf32>
    %377 = arith.subf %375, %376 : vector<8x64xf32>
    %378 = vector.extract_strided_slice %370 {offsets = [0, 192], sizes = [8, 64], strides = [1, 1]} : vector<8x256xf32> to vector<8x64xf32>
    %379 = arith.mulf %372, %327 : vector<8x64xf32>
    %380 = arith.mulf %371, %377 : vector<8x64xf32>
    %381 = arith.addf %379, %380 : vector<8x64xf32>
    %382 = math.tanh %381 : vector<8x64xf32>
    %383 = arith.mulf %378, %382 : vector<8x64xf32>
    %384 = arith.truncf %383 : vector<8x64xf32> to vector<8x64xbf16>
    %c0_129 = arith.constant 0 : index
    %c0_130 = arith.constant 0 : index
    %385 = vector.load %arg7[%c0_129, %c0_130] : memref<64x512xbf16, #tpu.memory_space<vmem>>, vector<64x512xbf16>
    %cst_131 = arith.constant dense<0.000000e+00> : vector<8x512xf32>
    %386 = tpu.matmul %384, %385, %cst_131 {dimension_numbers = #tpu.dot_dimension_numbers<[1], [0], [0], [1], [0, 0, 1, 1], [], []>} : vector<8x64xbf16>, vector<64x512xbf16>, vector<8x512xf32> -> vector<8x512xf32>
    %c0_132 = arith.constant 0 : index
    %c0_133 = arith.constant 0 : index
    %387 = vector.load %arg8[%c0_132, %c0_133] : memref<1x256xf32, #tpu.memory_space<vmem>>, vector<1x256xf32>
    %388 = vector.extract_strided_slice %386 {offsets = [0, 256], sizes = [8, 256], strides = [1, 1]} : vector<8x512xf32> to vector<8x256xf32>
    %389 = vector.broadcast %387 : vector<1x256xf32> to vector<8x256xf32>
    %390 = arith.addf %389, %388 : vector<8x256xf32>
    %391 = arith.addf %390, %363 : vector<8x256xf32>
    %392 = arith.negf %391 : vector<8x256xf32>
    %393 = math.exp %392 : vector<8x256xf32>
    %cst_134 = arith.constant 1.000000e+00 : f32
    %394 = vector.broadcast %cst_134 : f32 to vector<8x256xf32>
    %395 = arith.addf %394, %393 : vector<8x256xf32>
    %396 = arith.divf %394, %395 : vector<8x256xf32>
    %397 = vector.extract_strided_slice %396 {offsets = [0, 0], sizes = [8, 64], strides = [1, 1]} : vector<8x256xf32> to vector<8x64xf32>
    %398 = vector.extract_strided_slice %396 {offsets = [0, 64], sizes = [8, 64], strides = [1, 1]} : vector<8x256xf32> to vector<8x64xf32>
    %399 = vector.extract_strided_slice %396 {offsets = [0, 128], sizes = [8, 64], strides = [1, 1]} : vector<8x256xf32> to vector<8x64xf32>
    %cst_135 = arith.constant 2.000000e+00 : f32
    %400 = vector.broadcast %cst_135 : f32 to vector<8x64xf32>
    %401 = arith.mulf %400, %399 : vector<8x64xf32>
    %cst_136 = arith.constant 1.000000e+00 : f32
    %402 = vector.broadcast %cst_136 : f32 to vector<8x64xf32>
    %403 = arith.subf %401, %402 : vector<8x64xf32>
    %404 = vector.extract_strided_slice %396 {offsets = [0, 192], sizes = [8, 64], strides = [1, 1]} : vector<8x256xf32> to vector<8x64xf32>
    %405 = arith.mulf %398, %353 : vector<8x64xf32>
    %406 = arith.mulf %397, %403 : vector<8x64xf32>
    %407 = arith.addf %405, %406 : vector<8x64xf32>
    %408 = math.tanh %407 : vector<8x64xf32>
    %409 = arith.mulf %404, %408 : vector<8x64xf32>
    %410 = arith.truncf %409 : vector<8x64xf32> to vector<8x64xbf16>
    %c6 = arith.constant 6 : index
    %c0_137 = arith.constant 0 : index
    %c0_138 = arith.constant 0 : index
    %411 = vector.load %arg9[%c6, %c0_137, %c0_138] : memref<12x64x384xbf16, #tpu.memory_space<vmem>>, vector<1x64x384xbf16>
    %412 = vector.shape_cast %411 : vector<1x64x384xbf16> to vector<64x384xbf16>
    %cst_139 = arith.constant dense<0.000000e+00> : vector<8x384xf32>
    %413 = tpu.matmul %410, %412, %cst_139 {dimension_numbers = #tpu.dot_dimension_numbers<[1], [0], [0], [1], [0, 0, 1, 1], [], []>} : vector<8x64xbf16>, vector<64x384xbf16>, vector<8x384xf32> -> vector<8x384xf32>
    %414 = vector.extract_strided_slice %413 {offsets = [0, 256], sizes = [8, 128], strides = [1, 1]} : vector<8x384xf32> to vector<8x128xf32>
    %415 = arith.addf %361, %414 : vector<8x128xf32>
    %416 = vector.extract_strided_slice %386 {offsets = [0, 0], sizes = [8, 256], strides = [1, 1]} : vector<8x512xf32> to vector<8x256xf32>
    %417 = vector.extract_strided_slice %413 {offsets = [0, 0], sizes = [8, 256], strides = [1, 1]} : vector<8x384xf32> to vector<8x256xf32>
    %c56 = arith.constant 56 : index
    %c0_140 = arith.constant 0 : index
    %418 = vector.load %arg14[%c56, %c0_140] : memref<96x256xf32, #tpu.memory_space<vmem>>, vector<8x256xf32>
    %419 = arith.addf %418, %416 : vector<8x256xf32>
    %420 = arith.negf %419 : vector<8x256xf32>
    %421 = math.exp %420 : vector<8x256xf32>
    %cst_141 = arith.constant 1.000000e+00 : f32
    %422 = vector.broadcast %cst_141 : f32 to vector<8x256xf32>
    %423 = arith.addf %422, %421 : vector<8x256xf32>
    %424 = arith.divf %422, %423 : vector<8x256xf32>
    %425 = vector.extract_strided_slice %424 {offsets = [0, 0], sizes = [8, 64], strides = [1, 1]} : vector<8x256xf32> to vector<8x64xf32>
    %426 = vector.extract_strided_slice %424 {offsets = [0, 64], sizes = [8, 64], strides = [1, 1]} : vector<8x256xf32> to vector<8x64xf32>
    %427 = vector.extract_strided_slice %424 {offsets = [0, 128], sizes = [8, 64], strides = [1, 1]} : vector<8x256xf32> to vector<8x64xf32>
    %cst_142 = arith.constant 2.000000e+00 : f32
    %428 = vector.broadcast %cst_142 : f32 to vector<8x64xf32>
    %429 = arith.mulf %428, %427 : vector<8x64xf32>
    %cst_143 = arith.constant 1.000000e+00 : f32
    %430 = vector.broadcast %cst_143 : f32 to vector<8x64xf32>
    %431 = arith.subf %429, %430 : vector<8x64xf32>
    %432 = vector.extract_strided_slice %424 {offsets = [0, 192], sizes = [8, 64], strides = [1, 1]} : vector<8x256xf32> to vector<8x64xf32>
    %433 = arith.mulf %426, %381 : vector<8x64xf32>
    %434 = arith.mulf %425, %431 : vector<8x64xf32>
    %435 = arith.addf %433, %434 : vector<8x64xf32>
    %436 = math.tanh %435 : vector<8x64xf32>
    %437 = arith.mulf %432, %436 : vector<8x64xf32>
    %438 = arith.truncf %437 : vector<8x64xf32> to vector<8x64xbf16>
    %c0_144 = arith.constant 0 : index
    %c0_145 = arith.constant 0 : index
    %439 = vector.load %arg7[%c0_144, %c0_145] : memref<64x512xbf16, #tpu.memory_space<vmem>>, vector<64x512xbf16>
    %cst_146 = arith.constant dense<0.000000e+00> : vector<8x512xf32>
    %440 = tpu.matmul %438, %439, %cst_146 {dimension_numbers = #tpu.dot_dimension_numbers<[1], [0], [0], [1], [0, 0, 1, 1], [], []>} : vector<8x64xbf16>, vector<64x512xbf16>, vector<8x512xf32> -> vector<8x512xf32>
    %c0_147 = arith.constant 0 : index
    %c0_148 = arith.constant 0 : index
    %441 = vector.load %arg8[%c0_147, %c0_148] : memref<1x256xf32, #tpu.memory_space<vmem>>, vector<1x256xf32>
    %442 = vector.extract_strided_slice %440 {offsets = [0, 256], sizes = [8, 256], strides = [1, 1]} : vector<8x512xf32> to vector<8x256xf32>
    %443 = vector.broadcast %441 : vector<1x256xf32> to vector<8x256xf32>
    %444 = arith.addf %443, %442 : vector<8x256xf32>
    %445 = arith.addf %444, %417 : vector<8x256xf32>
    %446 = arith.negf %445 : vector<8x256xf32>
    %447 = math.exp %446 : vector<8x256xf32>
    %cst_149 = arith.constant 1.000000e+00 : f32
    %448 = vector.broadcast %cst_149 : f32 to vector<8x256xf32>
    %449 = arith.addf %448, %447 : vector<8x256xf32>
    %450 = arith.divf %448, %449 : vector<8x256xf32>
    %451 = vector.extract_strided_slice %450 {offsets = [0, 0], sizes = [8, 64], strides = [1, 1]} : vector<8x256xf32> to vector<8x64xf32>
    %452 = vector.extract_strided_slice %450 {offsets = [0, 64], sizes = [8, 64], strides = [1, 1]} : vector<8x256xf32> to vector<8x64xf32>
    %453 = vector.extract_strided_slice %450 {offsets = [0, 128], sizes = [8, 64], strides = [1, 1]} : vector<8x256xf32> to vector<8x64xf32>
    %cst_150 = arith.constant 2.000000e+00 : f32
    %454 = vector.broadcast %cst_150 : f32 to vector<8x64xf32>
    %455 = arith.mulf %454, %453 : vector<8x64xf32>
    %cst_151 = arith.constant 1.000000e+00 : f32
    %456 = vector.broadcast %cst_151 : f32 to vector<8x64xf32>
    %457 = arith.subf %455, %456 : vector<8x64xf32>
    %458 = vector.extract_strided_slice %450 {offsets = [0, 192], sizes = [8, 64], strides = [1, 1]} : vector<8x256xf32> to vector<8x64xf32>
    %459 = arith.mulf %452, %407 : vector<8x64xf32>
    %460 = arith.mulf %451, %457 : vector<8x64xf32>
    %461 = arith.addf %459, %460 : vector<8x64xf32>
    %462 = math.tanh %461 : vector<8x64xf32>
    %463 = arith.mulf %458, %462 : vector<8x64xf32>
    %464 = arith.truncf %463 : vector<8x64xf32> to vector<8x64xbf16>
    %c7 = arith.constant 7 : index
    %c0_152 = arith.constant 0 : index
    %c0_153 = arith.constant 0 : index
    %465 = vector.load %arg9[%c7, %c0_152, %c0_153] : memref<12x64x384xbf16, #tpu.memory_space<vmem>>, vector<1x64x384xbf16>
    %466 = vector.shape_cast %465 : vector<1x64x384xbf16> to vector<64x384xbf16>
    %cst_154 = arith.constant dense<0.000000e+00> : vector<8x384xf32>
    %467 = tpu.matmul %464, %466, %cst_154 {dimension_numbers = #tpu.dot_dimension_numbers<[1], [0], [0], [1], [0, 0, 1, 1], [], []>} : vector<8x64xbf16>, vector<64x384xbf16>, vector<8x384xf32> -> vector<8x384xf32>
    %468 = vector.extract_strided_slice %467 {offsets = [0, 256], sizes = [8, 128], strides = [1, 1]} : vector<8x384xf32> to vector<8x128xf32>
    %469 = arith.addf %415, %468 : vector<8x128xf32>
    %470 = vector.extract_strided_slice %440 {offsets = [0, 0], sizes = [8, 256], strides = [1, 1]} : vector<8x512xf32> to vector<8x256xf32>
    %471 = vector.extract_strided_slice %467 {offsets = [0, 0], sizes = [8, 256], strides = [1, 1]} : vector<8x384xf32> to vector<8x256xf32>
    %c64 = arith.constant 64 : index
    %c0_155 = arith.constant 0 : index
    %472 = vector.load %arg14[%c64, %c0_155] : memref<96x256xf32, #tpu.memory_space<vmem>>, vector<8x256xf32>
    %473 = arith.addf %472, %470 : vector<8x256xf32>
    %474 = arith.negf %473 : vector<8x256xf32>
    %475 = math.exp %474 : vector<8x256xf32>
    %cst_156 = arith.constant 1.000000e+00 : f32
    %476 = vector.broadcast %cst_156 : f32 to vector<8x256xf32>
    %477 = arith.addf %476, %475 : vector<8x256xf32>
    %478 = arith.divf %476, %477 : vector<8x256xf32>
    %479 = vector.extract_strided_slice %478 {offsets = [0, 0], sizes = [8, 64], strides = [1, 1]} : vector<8x256xf32> to vector<8x64xf32>
    %480 = vector.extract_strided_slice %478 {offsets = [0, 64], sizes = [8, 64], strides = [1, 1]} : vector<8x256xf32> to vector<8x64xf32>
    %481 = vector.extract_strided_slice %478 {offsets = [0, 128], sizes = [8, 64], strides = [1, 1]} : vector<8x256xf32> to vector<8x64xf32>
    %cst_157 = arith.constant 2.000000e+00 : f32
    %482 = vector.broadcast %cst_157 : f32 to vector<8x64xf32>
    %483 = arith.mulf %482, %481 : vector<8x64xf32>
    %cst_158 = arith.constant 1.000000e+00 : f32
    %484 = vector.broadcast %cst_158 : f32 to vector<8x64xf32>
    %485 = arith.subf %483, %484 : vector<8x64xf32>
    %486 = vector.extract_strided_slice %478 {offsets = [0, 192], sizes = [8, 64], strides = [1, 1]} : vector<8x256xf32> to vector<8x64xf32>
    %487 = arith.mulf %480, %435 : vector<8x64xf32>
    %488 = arith.mulf %479, %485 : vector<8x64xf32>
    %489 = arith.addf %487, %488 : vector<8x64xf32>
    %490 = math.tanh %489 : vector<8x64xf32>
    %491 = arith.mulf %486, %490 : vector<8x64xf32>
    %492 = arith.truncf %491 : vector<8x64xf32> to vector<8x64xbf16>
    %c0_159 = arith.constant 0 : index
    %c0_160 = arith.constant 0 : index
    %493 = vector.load %arg7[%c0_159, %c0_160] : memref<64x512xbf16, #tpu.memory_space<vmem>>, vector<64x512xbf16>
    %cst_161 = arith.constant dense<0.000000e+00> : vector<8x512xf32>
    %494 = tpu.matmul %492, %493, %cst_161 {dimension_numbers = #tpu.dot_dimension_numbers<[1], [0], [0], [1], [0, 0, 1, 1], [], []>} : vector<8x64xbf16>, vector<64x512xbf16>, vector<8x512xf32> -> vector<8x512xf32>
    %c0_162 = arith.constant 0 : index
    %c0_163 = arith.constant 0 : index
    %495 = vector.load %arg8[%c0_162, %c0_163] : memref<1x256xf32, #tpu.memory_space<vmem>>, vector<1x256xf32>
    %496 = vector.extract_strided_slice %494 {offsets = [0, 256], sizes = [8, 256], strides = [1, 1]} : vector<8x512xf32> to vector<8x256xf32>
    %497 = vector.broadcast %495 : vector<1x256xf32> to vector<8x256xf32>
    %498 = arith.addf %497, %496 : vector<8x256xf32>
    %499 = arith.addf %498, %471 : vector<8x256xf32>
    %500 = arith.negf %499 : vector<8x256xf32>
    %501 = math.exp %500 : vector<8x256xf32>
    %cst_164 = arith.constant 1.000000e+00 : f32
    %502 = vector.broadcast %cst_164 : f32 to vector<8x256xf32>
    %503 = arith.addf %502, %501 : vector<8x256xf32>
    %504 = arith.divf %502, %503 : vector<8x256xf32>
    %505 = vector.extract_strided_slice %504 {offsets = [0, 0], sizes = [8, 64], strides = [1, 1]} : vector<8x256xf32> to vector<8x64xf32>
    %506 = vector.extract_strided_slice %504 {offsets = [0, 64], sizes = [8, 64], strides = [1, 1]} : vector<8x256xf32> to vector<8x64xf32>
    %507 = vector.extract_strided_slice %504 {offsets = [0, 128], sizes = [8, 64], strides = [1, 1]} : vector<8x256xf32> to vector<8x64xf32>
    %cst_165 = arith.constant 2.000000e+00 : f32
    %508 = vector.broadcast %cst_165 : f32 to vector<8x64xf32>
    %509 = arith.mulf %508, %507 : vector<8x64xf32>
    %cst_166 = arith.constant 1.000000e+00 : f32
    %510 = vector.broadcast %cst_166 : f32 to vector<8x64xf32>
    %511 = arith.subf %509, %510 : vector<8x64xf32>
    %512 = vector.extract_strided_slice %504 {offsets = [0, 192], sizes = [8, 64], strides = [1, 1]} : vector<8x256xf32> to vector<8x64xf32>
    %513 = arith.mulf %506, %461 : vector<8x64xf32>
    %514 = arith.mulf %505, %511 : vector<8x64xf32>
    %515 = arith.addf %513, %514 : vector<8x64xf32>
    %516 = math.tanh %515 : vector<8x64xf32>
    %517 = arith.mulf %512, %516 : vector<8x64xf32>
    %518 = arith.truncf %517 : vector<8x64xf32> to vector<8x64xbf16>
    %c8_167 = arith.constant 8 : index
    %c0_168 = arith.constant 0 : index
    %c0_169 = arith.constant 0 : index
    %519 = vector.load %arg9[%c8_167, %c0_168, %c0_169] : memref<12x64x384xbf16, #tpu.memory_space<vmem>>, vector<1x64x384xbf16>
    %520 = vector.shape_cast %519 : vector<1x64x384xbf16> to vector<64x384xbf16>
    %cst_170 = arith.constant dense<0.000000e+00> : vector<8x384xf32>
    %521 = tpu.matmul %518, %520, %cst_170 {dimension_numbers = #tpu.dot_dimension_numbers<[1], [0], [0], [1], [0, 0, 1, 1], [], []>} : vector<8x64xbf16>, vector<64x384xbf16>, vector<8x384xf32> -> vector<8x384xf32>
    %522 = vector.extract_strided_slice %521 {offsets = [0, 256], sizes = [8, 128], strides = [1, 1]} : vector<8x384xf32> to vector<8x128xf32>
    %523 = arith.addf %469, %522 : vector<8x128xf32>
    %524 = vector.extract_strided_slice %494 {offsets = [0, 0], sizes = [8, 256], strides = [1, 1]} : vector<8x512xf32> to vector<8x256xf32>
    %525 = vector.extract_strided_slice %521 {offsets = [0, 0], sizes = [8, 256], strides = [1, 1]} : vector<8x384xf32> to vector<8x256xf32>
    %c72 = arith.constant 72 : index
    %c0_171 = arith.constant 0 : index
    %526 = vector.load %arg14[%c72, %c0_171] : memref<96x256xf32, #tpu.memory_space<vmem>>, vector<8x256xf32>
    %527 = arith.addf %526, %524 : vector<8x256xf32>
    %528 = arith.negf %527 : vector<8x256xf32>
    %529 = math.exp %528 : vector<8x256xf32>
    %cst_172 = arith.constant 1.000000e+00 : f32
    %530 = vector.broadcast %cst_172 : f32 to vector<8x256xf32>
    %531 = arith.addf %530, %529 : vector<8x256xf32>
    %532 = arith.divf %530, %531 : vector<8x256xf32>
    %533 = vector.extract_strided_slice %532 {offsets = [0, 0], sizes = [8, 64], strides = [1, 1]} : vector<8x256xf32> to vector<8x64xf32>
    %534 = vector.extract_strided_slice %532 {offsets = [0, 64], sizes = [8, 64], strides = [1, 1]} : vector<8x256xf32> to vector<8x64xf32>
    %535 = vector.extract_strided_slice %532 {offsets = [0, 128], sizes = [8, 64], strides = [1, 1]} : vector<8x256xf32> to vector<8x64xf32>
    %cst_173 = arith.constant 2.000000e+00 : f32
    %536 = vector.broadcast %cst_173 : f32 to vector<8x64xf32>
    %537 = arith.mulf %536, %535 : vector<8x64xf32>
    %cst_174 = arith.constant 1.000000e+00 : f32
    %538 = vector.broadcast %cst_174 : f32 to vector<8x64xf32>
    %539 = arith.subf %537, %538 : vector<8x64xf32>
    %540 = vector.extract_strided_slice %532 {offsets = [0, 192], sizes = [8, 64], strides = [1, 1]} : vector<8x256xf32> to vector<8x64xf32>
    %541 = arith.mulf %534, %489 : vector<8x64xf32>
    %542 = arith.mulf %533, %539 : vector<8x64xf32>
    %543 = arith.addf %541, %542 : vector<8x64xf32>
    %544 = math.tanh %543 : vector<8x64xf32>
    %545 = arith.mulf %540, %544 : vector<8x64xf32>
    %546 = arith.truncf %545 : vector<8x64xf32> to vector<8x64xbf16>
    %c0_175 = arith.constant 0 : index
    %c0_176 = arith.constant 0 : index
    %547 = vector.load %arg7[%c0_175, %c0_176] : memref<64x512xbf16, #tpu.memory_space<vmem>>, vector<64x512xbf16>
    %cst_177 = arith.constant dense<0.000000e+00> : vector<8x512xf32>
    %548 = tpu.matmul %546, %547, %cst_177 {dimension_numbers = #tpu.dot_dimension_numbers<[1], [0], [0], [1], [0, 0, 1, 1], [], []>} : vector<8x64xbf16>, vector<64x512xbf16>, vector<8x512xf32> -> vector<8x512xf32>
    %c0_178 = arith.constant 0 : index
    %c0_179 = arith.constant 0 : index
    %549 = vector.load %arg8[%c0_178, %c0_179] : memref<1x256xf32, #tpu.memory_space<vmem>>, vector<1x256xf32>
    %550 = vector.extract_strided_slice %548 {offsets = [0, 256], sizes = [8, 256], strides = [1, 1]} : vector<8x512xf32> to vector<8x256xf32>
    %551 = vector.broadcast %549 : vector<1x256xf32> to vector<8x256xf32>
    %552 = arith.addf %551, %550 : vector<8x256xf32>
    %553 = arith.addf %552, %525 : vector<8x256xf32>
    %554 = arith.negf %553 : vector<8x256xf32>
    %555 = math.exp %554 : vector<8x256xf32>
    %cst_180 = arith.constant 1.000000e+00 : f32
    %556 = vector.broadcast %cst_180 : f32 to vector<8x256xf32>
    %557 = arith.addf %556, %555 : vector<8x256xf32>
    %558 = arith.divf %556, %557 : vector<8x256xf32>
    %559 = vector.extract_strided_slice %558 {offsets = [0, 0], sizes = [8, 64], strides = [1, 1]} : vector<8x256xf32> to vector<8x64xf32>
    %560 = vector.extract_strided_slice %558 {offsets = [0, 64], sizes = [8, 64], strides = [1, 1]} : vector<8x256xf32> to vector<8x64xf32>
    %561 = vector.extract_strided_slice %558 {offsets = [0, 128], sizes = [8, 64], strides = [1, 1]} : vector<8x256xf32> to vector<8x64xf32>
    %cst_181 = arith.constant 2.000000e+00 : f32
    %562 = vector.broadcast %cst_181 : f32 to vector<8x64xf32>
    %563 = arith.mulf %562, %561 : vector<8x64xf32>
    %cst_182 = arith.constant 1.000000e+00 : f32
    %564 = vector.broadcast %cst_182 : f32 to vector<8x64xf32>
    %565 = arith.subf %563, %564 : vector<8x64xf32>
    %566 = vector.extract_strided_slice %558 {offsets = [0, 192], sizes = [8, 64], strides = [1, 1]} : vector<8x256xf32> to vector<8x64xf32>
    %567 = arith.mulf %560, %515 : vector<8x64xf32>
    %568 = arith.mulf %559, %565 : vector<8x64xf32>
    %569 = arith.addf %567, %568 : vector<8x64xf32>
    %570 = math.tanh %569 : vector<8x64xf32>
    %571 = arith.mulf %566, %570 : vector<8x64xf32>
    %572 = arith.truncf %571 : vector<8x64xf32> to vector<8x64xbf16>
    %c9 = arith.constant 9 : index
    %c0_183 = arith.constant 0 : index
    %c0_184 = arith.constant 0 : index
    %573 = vector.load %arg9[%c9, %c0_183, %c0_184] : memref<12x64x384xbf16, #tpu.memory_space<vmem>>, vector<1x64x384xbf16>
    %574 = vector.shape_cast %573 : vector<1x64x384xbf16> to vector<64x384xbf16>
    %cst_185 = arith.constant dense<0.000000e+00> : vector<8x384xf32>
    %575 = tpu.matmul %572, %574, %cst_185 {dimension_numbers = #tpu.dot_dimension_numbers<[1], [0], [0], [1], [0, 0, 1, 1], [], []>} : vector<8x64xbf16>, vector<64x384xbf16>, vector<8x384xf32> -> vector<8x384xf32>
    %576 = vector.extract_strided_slice %575 {offsets = [0, 256], sizes = [8, 128], strides = [1, 1]} : vector<8x384xf32> to vector<8x128xf32>
    %577 = arith.addf %523, %576 : vector<8x128xf32>
    %578 = vector.extract_strided_slice %548 {offsets = [0, 0], sizes = [8, 256], strides = [1, 1]} : vector<8x512xf32> to vector<8x256xf32>
    %579 = vector.extract_strided_slice %575 {offsets = [0, 0], sizes = [8, 256], strides = [1, 1]} : vector<8x384xf32> to vector<8x256xf32>
    %c80 = arith.constant 80 : index
    %c0_186 = arith.constant 0 : index
    %580 = vector.load %arg14[%c80, %c0_186] : memref<96x256xf32, #tpu.memory_space<vmem>>, vector<8x256xf32>
    %581 = arith.addf %580, %578 : vector<8x256xf32>
    %582 = arith.negf %581 : vector<8x256xf32>
    %583 = math.exp %582 : vector<8x256xf32>
    %cst_187 = arith.constant 1.000000e+00 : f32
    %584 = vector.broadcast %cst_187 : f32 to vector<8x256xf32>
    %585 = arith.addf %584, %583 : vector<8x256xf32>
    %586 = arith.divf %584, %585 : vector<8x256xf32>
    %587 = vector.extract_strided_slice %586 {offsets = [0, 0], sizes = [8, 64], strides = [1, 1]} : vector<8x256xf32> to vector<8x64xf32>
    %588 = vector.extract_strided_slice %586 {offsets = [0, 64], sizes = [8, 64], strides = [1, 1]} : vector<8x256xf32> to vector<8x64xf32>
    %589 = vector.extract_strided_slice %586 {offsets = [0, 128], sizes = [8, 64], strides = [1, 1]} : vector<8x256xf32> to vector<8x64xf32>
    %cst_188 = arith.constant 2.000000e+00 : f32
    %590 = vector.broadcast %cst_188 : f32 to vector<8x64xf32>
    %591 = arith.mulf %590, %589 : vector<8x64xf32>
    %cst_189 = arith.constant 1.000000e+00 : f32
    %592 = vector.broadcast %cst_189 : f32 to vector<8x64xf32>
    %593 = arith.subf %591, %592 : vector<8x64xf32>
    %594 = vector.extract_strided_slice %586 {offsets = [0, 192], sizes = [8, 64], strides = [1, 1]} : vector<8x256xf32> to vector<8x64xf32>
    %595 = arith.mulf %588, %543 : vector<8x64xf32>
    %596 = arith.mulf %587, %593 : vector<8x64xf32>
    %597 = arith.addf %595, %596 : vector<8x64xf32>
    %598 = math.tanh %597 : vector<8x64xf32>
    %599 = arith.mulf %594, %598 : vector<8x64xf32>
    %600 = arith.truncf %599 : vector<8x64xf32> to vector<8x64xbf16>
    %c0_190 = arith.constant 0 : index
    %c0_191 = arith.constant 0 : index
    %601 = vector.load %arg7[%c0_190, %c0_191] : memref<64x512xbf16, #tpu.memory_space<vmem>>, vector<64x512xbf16>
    %cst_192 = arith.constant dense<0.000000e+00> : vector<8x512xf32>
    %602 = tpu.matmul %600, %601, %cst_192 {dimension_numbers = #tpu.dot_dimension_numbers<[1], [0], [0], [1], [0, 0, 1, 1], [], []>} : vector<8x64xbf16>, vector<64x512xbf16>, vector<8x512xf32> -> vector<8x512xf32>
    %c0_193 = arith.constant 0 : index
    %c0_194 = arith.constant 0 : index
    %603 = vector.load %arg8[%c0_193, %c0_194] : memref<1x256xf32, #tpu.memory_space<vmem>>, vector<1x256xf32>
    %604 = vector.extract_strided_slice %602 {offsets = [0, 256], sizes = [8, 256], strides = [1, 1]} : vector<8x512xf32> to vector<8x256xf32>
    %605 = vector.broadcast %603 : vector<1x256xf32> to vector<8x256xf32>
    %606 = arith.addf %605, %604 : vector<8x256xf32>
    %607 = arith.addf %606, %579 : vector<8x256xf32>
    %608 = arith.negf %607 : vector<8x256xf32>
    %609 = math.exp %608 : vector<8x256xf32>
    %cst_195 = arith.constant 1.000000e+00 : f32
    %610 = vector.broadcast %cst_195 : f32 to vector<8x256xf32>
    %611 = arith.addf %610, %609 : vector<8x256xf32>
    %612 = arith.divf %610, %611 : vector<8x256xf32>
    %613 = vector.extract_strided_slice %612 {offsets = [0, 0], sizes = [8, 64], strides = [1, 1]} : vector<8x256xf32> to vector<8x64xf32>
    %614 = vector.extract_strided_slice %612 {offsets = [0, 64], sizes = [8, 64], strides = [1, 1]} : vector<8x256xf32> to vector<8x64xf32>
    %615 = vector.extract_strided_slice %612 {offsets = [0, 128], sizes = [8, 64], strides = [1, 1]} : vector<8x256xf32> to vector<8x64xf32>
    %cst_196 = arith.constant 2.000000e+00 : f32
    %616 = vector.broadcast %cst_196 : f32 to vector<8x64xf32>
    %617 = arith.mulf %616, %615 : vector<8x64xf32>
    %cst_197 = arith.constant 1.000000e+00 : f32
    %618 = vector.broadcast %cst_197 : f32 to vector<8x64xf32>
    %619 = arith.subf %617, %618 : vector<8x64xf32>
    %620 = vector.extract_strided_slice %612 {offsets = [0, 192], sizes = [8, 64], strides = [1, 1]} : vector<8x256xf32> to vector<8x64xf32>
    %621 = arith.mulf %614, %569 : vector<8x64xf32>
    %622 = arith.mulf %613, %619 : vector<8x64xf32>
    %623 = arith.addf %621, %622 : vector<8x64xf32>
    %624 = math.tanh %623 : vector<8x64xf32>
    %625 = arith.mulf %620, %624 : vector<8x64xf32>
    %626 = arith.truncf %625 : vector<8x64xf32> to vector<8x64xbf16>
    %c10 = arith.constant 10 : index
    %c0_198 = arith.constant 0 : index
    %c0_199 = arith.constant 0 : index
    %627 = vector.load %arg9[%c10, %c0_198, %c0_199] : memref<12x64x384xbf16, #tpu.memory_space<vmem>>, vector<1x64x384xbf16>
    %628 = vector.shape_cast %627 : vector<1x64x384xbf16> to vector<64x384xbf16>
    %cst_200 = arith.constant dense<0.000000e+00> : vector<8x384xf32>
    %629 = tpu.matmul %626, %628, %cst_200 {dimension_numbers = #tpu.dot_dimension_numbers<[1], [0], [0], [1], [0, 0, 1, 1], [], []>} : vector<8x64xbf16>, vector<64x384xbf16>, vector<8x384xf32> -> vector<8x384xf32>
    %630 = vector.extract_strided_slice %629 {offsets = [0, 256], sizes = [8, 128], strides = [1, 1]} : vector<8x384xf32> to vector<8x128xf32>
    %631 = arith.addf %577, %630 : vector<8x128xf32>
    %632 = vector.extract_strided_slice %602 {offsets = [0, 0], sizes = [8, 256], strides = [1, 1]} : vector<8x512xf32> to vector<8x256xf32>
    %633 = vector.extract_strided_slice %629 {offsets = [0, 0], sizes = [8, 256], strides = [1, 1]} : vector<8x384xf32> to vector<8x256xf32>
    %c88 = arith.constant 88 : index
    %c0_201 = arith.constant 0 : index
    %634 = vector.load %arg14[%c88, %c0_201] : memref<96x256xf32, #tpu.memory_space<vmem>>, vector<8x256xf32>
    %635 = arith.addf %634, %632 : vector<8x256xf32>
    %636 = arith.negf %635 : vector<8x256xf32>
    %637 = math.exp %636 : vector<8x256xf32>
    %cst_202 = arith.constant 1.000000e+00 : f32
    %638 = vector.broadcast %cst_202 : f32 to vector<8x256xf32>
    %639 = arith.addf %638, %637 : vector<8x256xf32>
    %640 = arith.divf %638, %639 : vector<8x256xf32>
    %641 = vector.extract_strided_slice %640 {offsets = [0, 0], sizes = [8, 64], strides = [1, 1]} : vector<8x256xf32> to vector<8x64xf32>
    %642 = vector.extract_strided_slice %640 {offsets = [0, 64], sizes = [8, 64], strides = [1, 1]} : vector<8x256xf32> to vector<8x64xf32>
    %643 = vector.extract_strided_slice %640 {offsets = [0, 128], sizes = [8, 64], strides = [1, 1]} : vector<8x256xf32> to vector<8x64xf32>
    %cst_203 = arith.constant 2.000000e+00 : f32
    %644 = vector.broadcast %cst_203 : f32 to vector<8x64xf32>
    %645 = arith.mulf %644, %643 : vector<8x64xf32>
    %cst_204 = arith.constant 1.000000e+00 : f32
    %646 = vector.broadcast %cst_204 : f32 to vector<8x64xf32>
    %647 = arith.subf %645, %646 : vector<8x64xf32>
    %648 = vector.extract_strided_slice %640 {offsets = [0, 192], sizes = [8, 64], strides = [1, 1]} : vector<8x256xf32> to vector<8x64xf32>
    %649 = arith.mulf %642, %597 : vector<8x64xf32>
    %650 = arith.mulf %641, %647 : vector<8x64xf32>
    %651 = arith.addf %649, %650 : vector<8x64xf32>
    %652 = math.tanh %651 : vector<8x64xf32>
    %653 = arith.mulf %648, %652 : vector<8x64xf32>
    %654 = arith.truncf %653 : vector<8x64xf32> to vector<8x64xbf16>
    %c0_205 = arith.constant 0 : index
    %c0_206 = arith.constant 0 : index
    %655 = vector.load %arg7[%c0_205, %c0_206] : memref<64x512xbf16, #tpu.memory_space<vmem>>, vector<64x512xbf16>
    %cst_207 = arith.constant dense<0.000000e+00> : vector<8x512xf32>
    %656 = tpu.matmul %654, %655, %cst_207 {dimension_numbers = #tpu.dot_dimension_numbers<[1], [0], [0], [1], [0, 0, 1, 1], [], []>} : vector<8x64xbf16>, vector<64x512xbf16>, vector<8x512xf32> -> vector<8x512xf32>
    %c0_208 = arith.constant 0 : index
    %c0_209 = arith.constant 0 : index
    %657 = vector.load %arg8[%c0_208, %c0_209] : memref<1x256xf32, #tpu.memory_space<vmem>>, vector<1x256xf32>
    %658 = vector.extract_strided_slice %656 {offsets = [0, 256], sizes = [8, 256], strides = [1, 1]} : vector<8x512xf32> to vector<8x256xf32>
    %659 = vector.broadcast %657 : vector<1x256xf32> to vector<8x256xf32>
    %660 = arith.addf %659, %658 : vector<8x256xf32>
    %661 = arith.addf %660, %633 : vector<8x256xf32>
    %662 = arith.negf %661 : vector<8x256xf32>
    %663 = math.exp %662 : vector<8x256xf32>
    %cst_210 = arith.constant 1.000000e+00 : f32
    %664 = vector.broadcast %cst_210 : f32 to vector<8x256xf32>
    %665 = arith.addf %664, %663 : vector<8x256xf32>
    %666 = arith.divf %664, %665 : vector<8x256xf32>
    %667 = vector.extract_strided_slice %666 {offsets = [0, 0], sizes = [8, 64], strides = [1, 1]} : vector<8x256xf32> to vector<8x64xf32>
    %668 = vector.extract_strided_slice %666 {offsets = [0, 64], sizes = [8, 64], strides = [1, 1]} : vector<8x256xf32> to vector<8x64xf32>
    %669 = vector.extract_strided_slice %666 {offsets = [0, 128], sizes = [8, 64], strides = [1, 1]} : vector<8x256xf32> to vector<8x64xf32>
    %cst_211 = arith.constant 2.000000e+00 : f32
    %670 = vector.broadcast %cst_211 : f32 to vector<8x64xf32>
    %671 = arith.mulf %670, %669 : vector<8x64xf32>
    %cst_212 = arith.constant 1.000000e+00 : f32
    %672 = vector.broadcast %cst_212 : f32 to vector<8x64xf32>
    %673 = arith.subf %671, %672 : vector<8x64xf32>
    %674 = vector.extract_strided_slice %666 {offsets = [0, 192], sizes = [8, 64], strides = [1, 1]} : vector<8x256xf32> to vector<8x64xf32>
    %675 = arith.mulf %668, %623 : vector<8x64xf32>
    %676 = arith.mulf %667, %673 : vector<8x64xf32>
    %677 = arith.addf %675, %676 : vector<8x64xf32>
    %678 = math.tanh %677 : vector<8x64xf32>
    %679 = arith.mulf %674, %678 : vector<8x64xf32>
    %680 = arith.truncf %679 : vector<8x64xf32> to vector<8x64xbf16>
    %c11 = arith.constant 11 : index
    %c0_213 = arith.constant 0 : index
    %c0_214 = arith.constant 0 : index
    %681 = vector.load %arg9[%c11, %c0_213, %c0_214] : memref<12x64x384xbf16, #tpu.memory_space<vmem>>, vector<1x64x384xbf16>
    %682 = vector.shape_cast %681 : vector<1x64x384xbf16> to vector<64x384xbf16>
    %cst_215 = arith.constant dense<0.000000e+00> : vector<8x384xf32>
    %683 = tpu.matmul %680, %682, %cst_215 {dimension_numbers = #tpu.dot_dimension_numbers<[1], [0], [0], [1], [0, 0, 1, 1], [], []>} : vector<8x64xbf16>, vector<64x384xbf16>, vector<8x384xf32> -> vector<8x384xf32>
    %684 = vector.extract_strided_slice %683 {offsets = [0, 256], sizes = [8, 128], strides = [1, 1]} : vector<8x384xf32> to vector<8x128xf32>
    %685 = arith.addf %631, %684 : vector<8x128xf32>
    %c0_216 = arith.constant 0 : index
    %c0_217 = arith.constant 0 : index
    %686 = vector.load %arg10[%c0_216, %c0_217] : memref<1x128xf32, #tpu.memory_space<vmem>>, vector<1x128xf32>
    %687 = vector.broadcast %686 : vector<1x128xf32> to vector<8x128xf32>
    %688 = arith.addf %685, %687 : vector<8x128xf32>
    %cst_218 = arith.constant 0.000000e+00 : f32
    %689 = vector.broadcast %cst_218 : f32 to vector<8x128xf32>
    %690 = arith.maximumf %688, %689 : vector<8x128xf32>
    %c0_219 = arith.constant 0 : index
    %c0_220 = arith.constant 0 : index
    %691 = vector.load %arg11[%c0_219, %c0_220] : memref<1x128xf32, #tpu.memory_space<vmem>>, vector<1x128xf32>
    %692 = vector.broadcast %691 : vector<1x128xf32> to vector<8x128xf32>
    %693 = arith.mulf %690, %692 : vector<8x128xf32>
    %cst_221 = arith.constant dense<0.000000e+00> : vector<8xf32>
    %694 = vector.multi_reduction <add>, %693, %cst_221 [1] : vector<8x128xf32> to vector<8xf32>
    %695 = vector.shape_cast %694 : vector<8xf32> to vector<8x1xf32>
    %c0_222 = arith.constant 0 : index
    %c0_223 = arith.constant 0 : index
    %696 = vector.load %arg12[%c0_222, %c0_223] : memref<1x1xf32, #tpu.memory_space<vmem>>, vector<1x1xf32>
    %697 = vector.broadcast %696 : vector<1x1xf32> to vector<8x1xf32>
    %698 = arith.addf %695, %697 : vector<8x1xf32>
    %c0_224 = arith.constant 0 : index
    %c0_225 = arith.constant 0 : index
    %699 = vector.load %arg13[%c0_224, %c0_225] : memref<8x1xf32, #tpu.memory_space<vmem>>, vector<8x1xf32>
    tpu.vector_store %arg13[%c0_224, %c0_225], %698 {strides = array<i32>} : memref<8x1xf32, #tpu.memory_space<vmem>>, vector<8x1xf32>,
    return
  }
}

</mosaic_0001>

<llo_original>
// kernel: cnn_lstm_forward.1
$region0: #{cnn_lstm_forward.1}
  #allocation0 [shape = 'u32[]', space=smem, size = 0x4, offset = 0x4, fixed_abs, tag = 'smem constant byte address 0x4 - core index']
  #allocation1 [shape = 'u32[144,128]{1,0:T(1,128)}', space=vmem, size = 0x12000, scoped, tag = 'internal scratch']
  #allocation2 [shape = 'f32[96,256]{1,0:T(8,128)}', space=vmem, size = 0x18000, scoped, tag = 'scratch operand']
  #allocation3 [shape = 'f32[1,1]{1,0:T(1,128)S(1)}', space=vmem, size = 0x200, scoped, tag = 'scoped memory for cnn_lstm_forward.1']
  %s0 = inlined_call_operand.vmem [shape: f32[112,12], index: 0, kind: input, shape index: {}]
  %s1 = inlined_call_operand.vmem [shape: f32[12,64], index: 1, kind: input, shape index: {}]
  %s2 = inlined_call_operand.vmem [shape: f32[1,64], index: 2, kind: input, shape index: {}]
  %s3 = inlined_call_operand.vmem [shape: f32[3,64,64], index: 3, kind: input, shape index: {}]
  %s4 = inlined_call_operand.vmem [shape: f32[1,64], index: 4, kind: input, shape index: {}]
  %s5 = inlined_call_operand.vmem [shape: bf16[64,256], index: 5, kind: input, shape index: {}]
  %s6 = inlined_call_operand.vmem [shape: f32[1,256], index: 6, kind: input, shape index: {}]
  %s7 = inlined_call_operand.vmem [shape: bf16[64,512], index: 7, kind: input, shape index: {}]
  %s8 = inlined_call_operand.vmem [shape: f32[1,256], index: 8, kind: input, shape index: {}]
  %s9 = inlined_call_operand.hbm [shape: bf16[12,64,384], index: 9, kind: input, shape index: {}]
  %s10 = inlined_call_operand.vmem [shape: f32[1,128], index: 10, kind: input, shape index: {}]
  %s11 = inlined_call_operand.vmem [shape: f32[1,128], index: 11, kind: input, shape index: {}]
  %s12 = inlined_call_operand.<no memory space> [shape: f32[1,1], index: 12, kind: input, shape index: {}]
  %s13 = inlined_call_operand.vmem [shape: f32[8,1], index: 13, kind: output, shape index: {}]
  %s14 = sld [smem:[#allocation0]]
  $region66: #{cnn_lstm_forward.1} parent=0
    _
  %s16 = ssub.s32 1, %s14
  %s17 = scalar_select 0, %s16, %s14
  %v18 = vstv %s12
  %19 = vst [vmem:[#allocation3] sm:$0x1] %v18
  $region1: #{cnn_lstm_forward.1} parent=0
    #allocation4 [shape = 'u8[589824]{0}', space=vmem, size = 0x90000, scoped, tag = 'input window, operand 9, single buffered']
    #allocation5 [shape = 's32[1]{0}', space=sflag, size = 0x4, scoped, tag = 'scoped memory for cnn_lstm_forward.1']
    %20 = vsyncpa [#allocation5], 0
    // Predicated region
    $region2: #{cnn_lstm_forward.1} parent=1 // pred_check
      _
    $region3: #{cnn_lstm_forward.1} parent=1 // pred_check_branch
      %22 = sbr.rel (0) target = $region5
    $region4: #{cnn_lstm_forward.1} parent=1 // pred_region
      _
    $region5: #{cnn_lstm_forward.1} parent=1 // pred_fallthru
      _
    // Predicated region
    $region6: #{cnn_lstm_forward.1} parent=1 // pred_check
      _
    $region7: #{cnn_lstm_forward.1} parent=1 // pred_check_branch
      %24 = sbr.rel (0) target = $region9
    $region8: #{cnn_lstm_forward.1} parent=1 // pred_region
      _
    $region9: #{cnn_lstm_forward.1} parent=1 // pred_fallthru
      _
    // Predicated region
    $region10: #{cnn_lstm_forward.1} parent=1 // pred_check
      _
    $region11: #{cnn_lstm_forward.1} parent=1 // pred_check_branch
      %26 = sbr.rel (0) target = $region13
    $region12: #{cnn_lstm_forward.1} parent=1 // pred_region
      _
    $region13: #{cnn_lstm_forward.1} parent=1 // pred_fallthru
      _
    // Predicated region
    $region14: #{cnn_lstm_forward.1} parent=1 // pred_check
      _
    $region15: #{cnn_lstm_forward.1} parent=1 // pred_check_branch
      %28 = sbr.rel (0) target = $region17
    $region16: #{cnn_lstm_forward.1} parent=1 // pred_region
      _
    $region17: #{cnn_lstm_forward.1} parent=1 // pred_fallthru
      _
    // Predicated region
    $region18: #{cnn_lstm_forward.1} parent=1 // pred_check
      _
    $region19: #{cnn_lstm_forward.1} parent=1 // pred_check_branch
      %30 = sbr.rel (0) target = $region21
    $region20: #{cnn_lstm_forward.1} parent=1 // pred_region
      _
    $region21: #{cnn_lstm_forward.1} parent=1 // pred_fallthru
      _
    // Predicated region
    $region22: #{cnn_lstm_forward.1} parent=1 // pred_check
      _
    $region23: #{cnn_lstm_forward.1} parent=1 // pred_check_branch
      %32 = sbr.rel (0) target = $region25
    $region24: #{cnn_lstm_forward.1} parent=1 // pred_region
      _
    $region25: #{cnn_lstm_forward.1} parent=1 // pred_fallthru
      _
    // Predicated region
    $region26: #{cnn_lstm_forward.1} parent=1 // pred_check
      _
    $region27: #{cnn_lstm_forward.1} parent=1 // pred_check_branch
      %34 = sbr.rel (0) target = $region29
    $region28: #{cnn_lstm_forward.1} parent=1 // pred_region
      _
    $region29: #{cnn_lstm_forward.1} parent=1 // pred_fallthru
      _
    // Predicated region
    $region30: #{cnn_lstm_forward.1} parent=1 // pred_check
      _
    $region31: #{cnn_lstm_forward.1} parent=1 // pred_check_branch
      %36 = sbr.rel (0) target = $region33
    $region32: #{cnn_lstm_forward.1} parent=1 // pred_region
      _
    $region33: #{cnn_lstm_forward.1} parent=1 // pred_fallthru
      _
    // Predicated region
    $region34: #{cnn_lstm_forward.1} parent=1 // pred_check
      _
    $region35: #{cnn_lstm_forward.1} parent=1 // pred_check_branch
      %38 = sbr.rel (0) target = $region37
    $region36: #{cnn_lstm_forward.1} parent=1 // pred_region
      _
    $region37: #{cnn_lstm_forward.1} parent=1 // pred_fallthru
      _
    // Predicated region
    $region38: #{cnn_lstm_forward.1} parent=1 // pred_check
      _
    $region39: #{cnn_lstm_forward.1} parent=1 // pred_check_branch
      %40 = sbr.rel (0) target = $region41
    $region40: #{cnn_lstm_forward.1} parent=1 // pred_region
      %s42 = ssub.s32 18432, 18432
      %43 = vsyncadd [#allocation5], %s42
      %s44 = sshll.u32 [#allocation4], 4
      %s45 = int_to_ptr.vmem [resolvable:$true] %s44
      %50 = dma.hbm_to_vmem [thread:$0]  %s9, 18432, %s45, [#allocation5], 192, 192, 12
    $region41: #{cnn_lstm_forward.1} parent=1 // pred_fallthru
      _
    // Predicated region
    $region42: #{cnn_lstm_forward.1} parent=1 // pred_check
      _
    $region43: #{cnn_lstm_forward.1} parent=1 // pred_check_branch
      %52 = sbr.rel (0) target = $region45
    $region44: #{cnn_lstm_forward.1} parent=1 // pred_region
      _
    $region45: #{cnn_lstm_forward.1} parent=1 // pred_fallthru
      _
    // Predicated region
    $region46: #{cnn_lstm_forward.1} parent=1 // pred_check
      _
    $region47: #{cnn_lstm_forward.1} parent=1 // pred_check_branch
      %54 = sbr.rel (0) target = $region49
    $region48: #{cnn_lstm_forward.1} parent=1 // pred_region
      _
    $region49: #{cnn_lstm_forward.1} parent=1 // pred_fallthru
      _
    // Predicated region
    $region50: #{cnn_lstm_forward.1} parent=1 // pred_check
      _
    $region51: #{cnn_lstm_forward.1} parent=1 // pred_check_branch
      %56 = sbr.rel (0) target = $region53
    $region52: #{cnn_lstm_forward.1} parent=1 // pred_region
      _
    $region53: #{cnn_lstm_forward.1} parent=1 // pred_fallthru
      _
    // Predicated region
    $region54: #{cnn_lstm_forward.1} parent=1 // pred_check
      _
    $region55: #{cnn_lstm_forward.1} parent=1 // pred_check_branch
      %58 = sbr.rel (0) target = $region57
    $region56: #{cnn_lstm_forward.1} parent=1 // pred_region
      %59 = dma.done [#allocation5], 18432
    $region57: #{cnn_lstm_forward.1} parent=1 // pred_fallthru
      _
    %v61 = vld [vmem:[%s0] sm:$0xff]
    %v62 = vld [vmem:[%s0 + $0x8] sm:$0xff]
    %v63 = vld [vmem:[%s0 + $0x10] sm:$0xff]
    %v64 = vld [vmem:[%s0 + $0x18] sm:$0xff]
    %v65 = vld [vmem:[%s0 + $0x20] sm:$0xff]
    %v66 = vld [vmem:[%s0 + $0x28] sm:$0xff]
    %v67 = vld [vmem:[%s0 + $0x30] sm:$0xff]
    %v68 = vld [vmem:[%s0 + $0x38] sm:$0xff]
    %v69 = vld [vmem:[%s0 + $0x40] sm:$0xff]
    %v70 = vld [vmem:[%s0 + $0x48] sm:$0xff]
    %v71 = vld [vmem:[%s0 + $0x50] sm:$0xff]
    %v72 = vld [vmem:[%s0 + $0x58] sm:$0xff]
    %v73 = vld [vmem:[%s0 + $0x60] sm:$0xff]
    %v74 = vld [vmem:[%s0 + $0x68] sm:$0xff]
    %v75 = vld [vmem:[%s1] sm:$0xff]
    %v76 = vld [vmem:[%s1 + $0x8] sm:$0xf]
    %v77 = vld [vmem:[%s2] sm:$0x1]
    %v79 = vlaneseq
    %v80 = vshrl.u32 %v79, 7
    %v81 = vsub.s32 0, %v80
    %v82 = vrot.slane %v77, %v81
    %vm84 = vcmask 97280
    %v86 = vsel %vm84, %v61, 0
    %v89 = vsel %vm84, %v62, 0
    %v92 = vsel %vm84, %v63, 0
    %v95 = vsel %vm84, %v64, 0
    %v98 = vsel %vm84, %v65, 0
    %v101 = vsel %vm84, %v66, 0
    %v104 = vsel %vm84, %v67, 0
    %v107 = vsel %vm84, %v68, 0
    %v110 = vsel %vm84, %v69, 0
    %v113 = vsel %vm84, %v70, 0
    %v116 = vsel %vm84, %v71, 0
    %v119 = vsel %vm84, %v72, 0
    %v122 = vsel %vm84, %v73, 0
    %v125 = vsel %vm84, %v74, 0
    %vm127 = vcmask 1043456
    %v129 = vsel %vm127, %v76, 0
    %131 = vmatprep.subr.mxu0 0.0
    %132 = vmatpush1.msra.mxu0 0.0
    %133 = vmatprep.subr.mxu0 0.0
    %134 = vmatpush1.msra.mxu0 0.0
    %135 = vmatprep.subr.mxu0 0.0
    %136 = vmatpush1.msra.mxu0 0.0
    %137 = vmatprep.subr.mxu0 0.0
    %138 = vmatpush1.msra.mxu0 0.0
    %139 = vmatprep.subr.mxu0 0.0
    %140 = vmatpush1.msra.mxu0 0.0
    %141 = vmatprep.subr.mxu0 0.0
    %142 = vmatpush1.msra.mxu0 0.0
    %143 = vmatprep.subr.mxu0 0.0
    %144 = vmatpush1.msra.mxu0 0.0
    %145 = vmatprep.subr.mxu0 0.0
    %146 = vmatpush1.msra.mxu0 0.0
    %147 = vmatprep.subr.mxu0 0.0
    %148 = vmatpush1.msra.mxu0 0.0
    %149 = vmatprep.subr.mxu0 0.0
    %150 = vmatpush1.msra.mxu0 0.0
    %151 = vmatprep.subr.mxu0 0.0
    %152 = vmatpush1.msra.mxu0 0.0
    %153 = vmatprep.subr.mxu0 0.0
    %154 = vmatpush1.msra.mxu0 0.0
    %155 = vmatprep.subr.mxu0 0.0
    %156 = vmatpush1.msra.mxu0 0.0
    %157 = vmatprep.subr.mxu0 0.0
    %158 = vmatpush1.msra.mxu0 0.0
    %159 = vmatprep.subr.mxu0 0.0
    %160 = vmatpush1.msra.mxu0 %v129
    %161 = vmatprep.subr.mxu0 0.0
    %162 = vmatpush1.msra.mxu0 %v75
    %163 = vmatprep.subr.mxu0 0.0
    %164 = vmatpush2.msra.mxu0 0.0
    %165 = vmatprep.subr.mxu0 0.0
    %166 = vmatpush2.msra.mxu0 0.0
    %167 = vmatprep.subr.mxu0 0.0
    %168 = vmatpush2.msra.mxu0 0.0
    %169 = vmatprep.subr.mxu0 0.0
    %170 = vmatpush2.msra.mxu0 0.0
    %171 = vmatprep.subr.mxu0 0.0
    %172 = vmatpush2.msra.mxu0 0.0
    %173 = vmatprep.subr.mxu0 0.0
    %174 = vmatpush2.msra.mxu0 0.0
    %175 = vmatprep.subr.mxu0 0.0
    %176 = vmatpush2.msra.mxu0 0.0
    %177 = vmatprep.subr.mxu0 0.0
    %178 = vmatpush2.msra.mxu0 0.0
    %179 = vmatprep.subr.mxu0 0.0
    %180 = vmatpush2.msra.mxu0 0.0
    %181 = vmatprep.subr.mxu0 0.0
    %182 = vmatpush2.msra.mxu0 0.0
    %183 = vmatprep.subr.mxu0 0.0
    %184 = vmatpush2.msra.mxu0 0.0
    %185 = vmatprep.subr.mxu0 0.0
    %186 = vmatpush2.msra.mxu0 0.0
    %187 = vmatprep.subr.mxu0 0.0
    %188 = vmatpush2.msra.mxu0 0.0
    %189 = vmatprep.subr.mxu0 0.0
    %190 = vmatpush2.msra.mxu0 0.0
    %191 = vmatprep.subr.mxu0 0.0
    %192 = vmatpush2.msra.mxu0 0.0
    %193 = vmatprep.subr.mxu0 0.0
    %194 = vmatpush2.msra.mxu0 0.0
    %195 = vmatprep.mubr.f32.mxu0 0.0
    %196 = vmatmul.mubr.f32.gmra.mxu0 %v86
    %v197 = vpop.f32.mrf.mxu0
    %v198 = vadd.f32 %v82, %v197
    %v199 = vpop.f32.mrf.mxu0
    %200 = vmatprep.mubr.f32.mxu0 0.0
    %201 = vmatmul.mubr.f32.gmra.mxu0 %v89
    %v202 = vpop.f32.mrf.mxu0
    %v203 = vadd.f32 %v82, %v202
    %v204 = vpop.f32.mrf.mxu0
    %205 = vmatprep.mubr.f32.mxu0 0.0
    %206 = vmatmul.mubr.f32.gmra.mxu0 %v92
    %v207 = vpop.f32.mrf.mxu0
    %v208 = vadd.f32 %v82, %v207
    %v209 = vpop.f32.mrf.mxu0
    %210 = vmatprep.mubr.f32.mxu0 0.0
    %211 = vmatmul.mubr.f32.gmra.mxu0 %v95
    %v212 = vpop.f32.mrf.mxu0
    %v213 = vadd.f32 %v82, %v212
    %v214 = vpop.f32.mrf.mxu0
    %215 = vmatprep.mubr.f32.mxu0 0.0
    %216 = vmatmul.mubr.f32.gmra.mxu0 %v98
    %v217 = vpop.f32.mrf.mxu0
    %v218 = vadd.f32 %v82, %v217
    %v219 = vpop.f32.mrf.mxu0
    %220 = vmatprep.mubr.f32.mxu0 0.0
    %221 = vmatmul.mubr.f32.gmra.mxu0 %v101
    %v222 = vpop.f32.mrf.mxu0
    %v223 = vadd.f32 %v82, %v222
    %v224 = vpop.f32.mrf.mxu0
    %225 = vmatprep.mubr.f32.mxu0 0.0
    %226 = vmatmul.mubr.f32.gmra.mxu0 %v104
    %v227 = vpop.f32.mrf.mxu0
    %v228 = vadd.f32 %v82, %v227
    %v229 = vpop.f32.mrf.mxu0
    %230 = vmatprep.mubr.f32.mxu0 0.0
    %231 = vmatmul.mubr.f32.gmra.mxu0 %v107
    %v232 = vpop.f32.mrf.mxu0
    %v233 = vadd.f32 %v82, %v232
    %v234 = vpop.f32.mrf.mxu0
    %235 = vmatprep.mubr.f32.mxu0 0.0
    %236 = vmatmul.mubr.f32.gmra.mxu0 %v110
    %v237 = vpop.f32.mrf.mxu0
    %v238 = vadd.f32 %v82, %v237
    %v239 = vpop.f32.mrf.mxu0
    %240 = vmatprep.mubr.f32.mxu0 0.0
    %241 = vmatmul.mubr.f32.gmra.mxu0 %v113
    %v242 = vpop.f32.mrf.mxu0
    %v243 = vadd.f32 %v82, %v242
    %v244 = vpop.f32.mrf.mxu0
    %245 = vmatprep.mubr.f32.mxu0 0.0
    %246 = vmatmul.mubr.f32.gmra.mxu0 %v116
    %v247 = vpop.f32.mrf.mxu0
    %v248 = vadd.f32 %v82, %v247
    %v249 = vpop.f32.mrf.mxu0
    %250 = vmatprep.mubr.f32.mxu0 0.0
    %251 = vmatmul.mubr.f32.gmra.mxu0 %v119
    %v252 = vpop.f32.mrf.mxu0
    %v253 = vadd.f32 %v82, %v252
    %v254 = vpop.f32.mrf.mxu0
    %255 = vmatprep.mubr.f32.mxu0 0.0
    %256 = vmatmul.mubr.f32.gmra.mxu0 %v122
    %v257 = vpop.f32.mrf.mxu0
    %v258 = vadd.f32 %v82, %v257
    %v259 = vpop.f32.mrf.mxu0
    %260 = vmatprep.mubr.f32.mxu0 0.0
    %261 = vmatmul.mubr.f32.gmra.mxu0 %v125
    %v262 = vpop.f32.mrf.mxu0
    %v263 = vadd.f32 %v82, %v262
    %v264 = vpop.f32.mrf.mxu0
    %265 = vdwg.mxu0
    %v266 = vmax.f32 %v198, 0.0
    %v267 = vmax.f32 %v203, 0.0
    %v268 = vmax.f32 %v208, 0.0
    %v269 = vmax.f32 %v213, 0.0
    %v270 = vmax.f32 %v218, 0.0
    %v271 = vmax.f32 %v223, 0.0
    %v272 = vmax.f32 %v228, 0.0
    %v273 = vmax.f32 %v233, 0.0
    %v274 = vmax.f32 %v238, 0.0
    %v275 = vmax.f32 %v243, 0.0
    %v276 = vmax.f32 %v248, 0.0
    %v277 = vmax.f32 %v253, 0.0
    %v278 = vmax.f32 %v258, 0.0
    %v279 = vmax.f32 %v263, 0.0
    %v280 = vld [vmem:[%s4] sm:$0x1]
    %v282 = vlaneseq
    %v283 = vshrl.u32 %v282, 7
    %v284 = vsub.s32 0, %v283
    %v285 = vrot.slane %v280, %v284
    %v287 = vadd.f32 %v285, 0.0
    %v288 = vld [vmem:[%s3] sm:$0xff]
    %v289 = vld [vmem:[%s3 + $0x8] sm:$0xff]
    %v290 = vld [vmem:[%s3 + $0x10] sm:$0xff]
    %v291 = vld [vmem:[%s3 + $0x18] sm:$0xff]
    %v292 = vld [vmem:[%s3 + $0x20] sm:$0xff]
    %v293 = vld [vmem:[%s3 + $0x28] sm:$0xff]
    %v294 = vld [vmem:[%s3 + $0x30] sm:$0xff]
    %v295 = vld [vmem:[%s3 + $0x38] sm:$0xff]
    %vm296 = vcmask 523264
    %v298 = vsel %vm296, %v266, 0
    %v301 = vsel %vm296, %v267, 0
    %v304 = vsel %vm296, %v268, 0
    %v307 = vsel %vm296, %v269, 0
    %v310 = vsel %vm296, %v270, 0
    %v313 = vsel %vm296, %v271, 0
    %v316 = vsel %vm296, %v272, 0
    %v319 = vsel %vm296, %v273, 0
    %v322 = vsel %vm296, %v274, 0
    %v325 = vsel %vm296, %v275, 0
    %v328 = vsel %vm296, %v276, 0
    %v331 = vsel %vm296, %v277, 0
    %333 = vmatprep.subr.mxu0 0.0
    %334 = vmatpush1.msra.mxu0 0.0
    %335 = vmatprep.subr.mxu0 0.0
    %336 = vmatpush1.msra.mxu0 0.0
    %337 = vmatprep.subr.mxu0 0.0
    %338 = vmatpush1.msra.mxu0 0.0
    %339 = vmatprep.subr.mxu0 0.0
    %340 = vmatpush1.msra.mxu0 0.0
    %341 = vmatprep.subr.mxu0 0.0
    %342 = vmatpush1.msra.mxu0 0.0
    %343 = vmatprep.subr.mxu0 0.0
    %344 = vmatpush1.msra.mxu0 0.0
    %345 = vmatprep.subr.mxu0 0.0
    %346 = vmatpush1.msra.mxu0 0.0
    %347 = vmatprep.subr.mxu0 0.0
    %348 = vmatpush1.msra.mxu0 0.0
    %349 = vmatprep.subr.mxu0 0.0
    %350 = vmatpush1.msra.mxu0 %v295
    %351 = vmatprep.subr.mxu0 0.0
    %352 = vmatpush1.msra.mxu0 %v294
    %353 = vmatprep.subr.mxu0 0.0
    %354 = vmatpush1.msra.mxu0 %v293
    %355 = vmatprep.subr.mxu0 0.0
    %356 = vmatpush1.msra.mxu0 %v292
    %357 = vmatprep.subr.mxu0 0.0
    %358 = vmatpush1.msra.mxu0 %v291
    %359 = vmatprep.subr.mxu0 0.0
    %360 = vmatpush1.msra.mxu0 %v290
    %361 = vmatprep.subr.mxu0 0.0
    %362 = vmatpush1.msra.mxu0 %v289
    %363 = vmatprep.subr.mxu0 0.0
    %364 = vmatpush1.msra.mxu0 %v288
    %365 = vmatprep.subr.mxu0 0.0
    %366 = vmatpush2.msra.mxu0 0.0
    %367 = vmatprep.subr.mxu0 0.0
    %368 = vmatpush2.msra.mxu0 0.0
    %369 = vmatprep.subr.mxu0 0.0
    %370 = vmatpush2.msra.mxu0 0.0
    %371 = vmatprep.subr.mxu0 0.0
    %372 = vmatpush2.msra.mxu0 0.0
    %373 = vmatprep.subr.mxu0 0.0
    %374 = vmatpush2.msra.mxu0 0.0
    %375 = vmatprep.subr.mxu0 0.0
    %376 = vmatpush2.msra.mxu0 0.0
    %377 = vmatprep.subr.mxu0 0.0
    %378 = vmatpush2.msra.mxu0 0.0
    %379 = vmatprep.subr.mxu0 0.0
    %380 = vmatpush2.msra.mxu0 0.0
    %381 = vmatprep.subr.mxu0 0.0
    %382 = vmatpush2.msra.mxu0 0.0
    %383 = vmatprep.subr.mxu0 0.0
    %384 = vmatpush2.msra.mxu0 0.0
    %385 = vmatprep.subr.mxu0 0.0
    %386 = vmatpush2.msra.mxu0 0.0
    %387 = vmatprep.subr.mxu0 0.0
    %388 = vmatpush2.msra.mxu0 0.0
    %389 = vmatprep.subr.mxu0 0.0
    %390 = vmatpush2.msra.mxu0 0.0
    %391 = vmatprep.subr.mxu0 0.0
    %392 = vmatpush2.msra.mxu0 0.0
    %393 = vmatprep.subr.mxu0 0.0
    %394 = vmatpush2.msra.mxu0 0.0
    %395 = vmatprep.subr.mxu0 0.0
    %396 = vmatpush2.msra.mxu0 0.0
    %397 = vmatprep.mubr.f32.mxu0 0.0
    %398 = vmatmul.mubr.f32.gmra.mxu0 %v298
    %v399 = vpop.f32.mrf.mxu0
    %v400 = vadd.f32 0.0, %v399
    %v401 = vpop.f32.mrf.mxu0
    %402 = vmatprep.mubr.f32.mxu0 0.0
    %403 = vmatmul.mubr.f32.gmra.mxu0 %v301
    %v404 = vpop.f32.mrf.mxu0
    %v405 = vadd.f32 0.0, %v404
    %v406 = vpop.f32.mrf.mxu0
    %407 = vmatprep.mubr.f32.mxu0 0.0
    %408 = vmatmul.mubr.f32.gmra.mxu0 %v304
    %v409 = vpop.f32.mrf.mxu0
    %v410 = vadd.f32 0.0, %v409
    %v411 = vpop.f32.mrf.mxu0
    %412 = vmatprep.mubr.f32.mxu0 0.0
    %413 = vmatmul.mubr.f32.gmra.mxu0 %v307
    %v414 = vpop.f32.mrf.mxu0
    %v415 = vadd.f32 0.0, %v414
    %v416 = vpop.f32.mrf.mxu0
    %417 = vmatprep.mubr.f32.mxu0 0.0
    %418 = vmatmul.mubr.f32.gmra.mxu0 %v310
    %v419 = vpop.f32.mrf.mxu0
    %v420 = vadd.f32 0.0, %v419
    %v421 = vpop.f32.mrf.mxu0
    %422 = vmatprep.mubr.f32.mxu0 0.0
    %423 = vmatmul.mubr.f32.gmra.mxu0 %v313
    %v424 = vpop.f32.mrf.mxu0
    %v425 = vadd.f32 0.0, %v424
    %v426 = vpop.f32.mrf.mxu0
    %427 = vmatprep.mubr.f32.mxu0 0.0
    %428 = vmatmul.mubr.f32.gmra.mxu0 %v316
    %v429 = vpop.f32.mrf.mxu0
    %v430 = vadd.f32 0.0, %v429
    %v431 = vpop.f32.mrf.mxu0
    %432 = vmatprep.mubr.f32.mxu0 0.0
    %433 = vmatmul.mubr.f32.gmra.mxu0 %v319
    %v434 = vpop.f32.mrf.mxu0
    %v435 = vadd.f32 0.0, %v434
    %v436 = vpop.f32.mrf.mxu0
    %437 = vmatprep.mubr.f32.mxu0 0.0
    %438 = vmatmul.mubr.f32.gmra.mxu0 %v322
    %v439 = vpop.f32.mrf.mxu0
    %v440 = vadd.f32 0.0, %v439
    %v441 = vpop.f32.mrf.mxu0
    %442 = vmatprep.mubr.f32.mxu0 0.0
    %443 = vmatmul.mubr.f32.gmra.mxu0 %v325
    %v444 = vpop.f32.mrf.mxu0
    %v445 = vadd.f32 0.0, %v444
    %v446 = vpop.f32.mrf.mxu0
    %447 = vmatprep.mubr.f32.mxu0 0.0
    %448 = vmatmul.mubr.f32.gmra.mxu0 %v328
    %v449 = vpop.f32.mrf.mxu0
    %v450 = vadd.f32 0.0, %v449
    %v451 = vpop.f32.mrf.mxu0
    %452 = vmatprep.mubr.f32.mxu0 0.0
    %453 = vmatmul.mubr.f32.gmra.mxu0 %v331
    %v454 = vpop.f32.mrf.mxu0
    %v455 = vadd.f32 0.0, %v454
    %v456 = vpop.f32.mrf.mxu0
    %457 = vdwg.mxu0
    %v458 = vadd.f32 %v287, %v400
    %v459 = vadd.f32 %v287, %v405
    %v460 = vadd.f32 %v287, %v410
    %v461 = vadd.f32 %v287, %v415
    %v462 = vadd.f32 %v287, %v420
    %v463 = vadd.f32 %v287, %v425
    %v464 = vadd.f32 %v287, %v430
    %v465 = vadd.f32 %v287, %v435
    %v466 = vadd.f32 %v287, %v440
    %v467 = vadd.f32 %v287, %v445
    %v468 = vadd.f32 %v287, %v450
    %v469 = vadd.f32 %v287, %v455
    %s470 = scalar_lea.vmem %s3, 64
    %v471 = vld [vmem:[%s470] sm:$0xff]
    %v472 = vld [vmem:[%s470 + $0x8] sm:$0xff]
    %v473 = vld [vmem:[%s470 + $0x10] sm:$0xff]
    %v474 = vld [vmem:[%s470 + $0x18] sm:$0xff]
    %v475 = vld [vmem:[%s470 + $0x20] sm:$0xff]
    %v476 = vld [vmem:[%s470 + $0x28] sm:$0xff]
    %v477 = vld [vmem:[%s470 + $0x30] sm:$0xff]
    %v478 = vld [vmem:[%s470 + $0x38] sm:$0xff]
    %v480 = vsel %vm296, %v278, 0
    %482 = vmatprep.subr.mxu0 0.0
    %483 = vmatpush1.msra.mxu0 0.0
    %484 = vmatprep.subr.mxu0 0.0
    %485 = vmatpush1.msra.mxu0 0.0
    %486 = vmatprep.subr.mxu0 0.0
    %487 = vmatpush1.msra.mxu0 0.0
    %488 = vmatprep.subr.mxu0 0.0
    %489 = vmatpush1.msra.mxu0 0.0
    %490 = vmatprep.subr.mxu0 0.0
    %491 = vmatpush1.msra.mxu0 0.0
    %492 = vmatprep.subr.mxu0 0.0
    %493 = vmatpush1.msra.mxu0 0.0
    %494 = vmatprep.subr.mxu0 0.0
    %495 = vmatpush1.msra.mxu0 0.0
    %496 = vmatprep.subr.mxu0 0.0
    %497 = vmatpush1.msra.mxu0 0.0
    %498 = vmatprep.subr.mxu0 0.0
    %499 = vmatpush1.msra.mxu0 %v478
    %500 = vmatprep.subr.mxu0 0.0
    %501 = vmatpush1.msra.mxu0 %v477
    %502 = vmatprep.subr.mxu0 0.0
    %503 = vmatpush1.msra.mxu0 %v476
    %504 = vmatprep.subr.mxu0 0.0
    %505 = vmatpush1.msra.mxu0 %v475
    %506 = vmatprep.subr.mxu0 0.0
    %507 = vmatpush1.msra.mxu0 %v474
    %508 = vmatprep.subr.mxu0 0.0
    %509 = vmatpush1.msra.mxu0 %v473
    %510 = vmatprep.subr.mxu0 0.0
    %511 = vmatpush1.msra.mxu0 %v472
    %512 = vmatprep.subr.mxu0 0.0
    %513 = vmatpush1.msra.mxu0 %v471
    %514 = vmatprep.subr.mxu0 0.0
    %515 = vmatpush2.msra.mxu0 0.0
    %516 = vmatprep.subr.mxu0 0.0
    %517 = vmatpush2.msra.mxu0 0.0
    %518 = vmatprep.subr.mxu0 0.0
    %519 = vmatpush2.msra.mxu0 0.0
    %520 = vmatprep.subr.mxu0 0.0
    %521 = vmatpush2.msra.mxu0 0.0
    %522 = vmatprep.subr.mxu0 0.0
    %523 = vmatpush2.msra.mxu0 0.0
    %524 = vmatprep.subr.mxu0 0.0
    %525 = vmatpush2.msra.mxu0 0.0
    %526 = vmatprep.subr.mxu0 0.0
    %527 = vmatpush2.msra.mxu0 0.0
    %528 = vmatprep.subr.mxu0 0.0
    %529 = vmatpush2.msra.mxu0 0.0
    %530 = vmatprep.subr.mxu0 0.0
    %531 = vmatpush2.msra.mxu0 0.0
    %532 = vmatprep.subr.mxu0 0.0
    %533 = vmatpush2.msra.mxu0 0.0
    %534 = vmatprep.subr.mxu0 0.0
    %535 = vmatpush2.msra.mxu0 0.0
    %536 = vmatprep.subr.mxu0 0.0
    %537 = vmatpush2.msra.mxu0 0.0
    %538 = vmatprep.subr.mxu0 0.0
    %539 = vmatpush2.msra.mxu0 0.0
    %540 = vmatprep.subr.mxu0 0.0
    %541 = vmatpush2.msra.mxu0 0.0
    %542 = vmatprep.subr.mxu0 0.0
    %543 = vmatpush2.msra.mxu0 0.0
    %544 = vmatprep.subr.mxu0 0.0
    %545 = vmatpush2.msra.mxu0 0.0
    %546 = vmatprep.mubr.f32.mxu0 0.0
    %547 = vmatmul.mubr.f32.gmra.mxu0 %v301
    %v548 = vpop.f32.mrf.mxu0
    %v549 = vadd.f32 0.0, %v548
    %v550 = vpop.f32.mrf.mxu0
    %551 = vmatprep.mubr.f32.mxu0 0.0
    %552 = vmatmul.mubr.f32.gmra.mxu0 %v304
    %v553 = vpop.f32.mrf.mxu0
    %v554 = vadd.f32 0.0, %v553
    %v555 = vpop.f32.mrf.mxu0
    %556 = vmatprep.mubr.f32.mxu0 0.0
    %557 = vmatmul.mubr.f32.gmra.mxu0 %v307
    %v558 = vpop.f32.mrf.mxu0
    %v559 = vadd.f32 0.0, %v558
    %v560 = vpop.f32.mrf.mxu0
    %561 = vmatprep.mubr.f32.mxu0 0.0
    %562 = vmatmul.mubr.f32.gmra.mxu0 %v310
    %v563 = vpop.f32.mrf.mxu0
    %v564 = vadd.f32 0.0, %v563
    %v565 = vpop.f32.mrf.mxu0
    %566 = vmatprep.mubr.f32.mxu0 0.0
    %567 = vmatmul.mubr.f32.gmra.mxu0 %v313
    %v568 = vpop.f32.mrf.mxu0
    %v569 = vadd.f32 0.0, %v568
    %v570 = vpop.f32.mrf.mxu0
    %571 = vmatprep.mubr.f32.mxu0 0.0
    %572 = vmatmul.mubr.f32.gmra.mxu0 %v316
    %v573 = vpop.f32.mrf.mxu0
    %v574 = vadd.f32 0.0, %v573
    %v575 = vpop.f32.mrf.mxu0
    %576 = vmatprep.mubr.f32.mxu0 0.0
    %577 = vmatmul.mubr.f32.gmra.mxu0 %v319
    %v578 = vpop.f32.mrf.mxu0
    %v579 = vadd.f32 0.0, %v578
    %v580 = vpop.f32.mrf.mxu0
    %581 = vmatprep.mubr.f32.mxu0 0.0
    %582 = vmatmul.mubr.f32.gmra.mxu0 %v322
    %v583 = vpop.f32.mrf.mxu0
    %v584 = vadd.f32 0.0, %v583
    %v585 = vpop.f32.mrf.mxu0
    %586 = vmatprep.mubr.f32.mxu0 0.0
    %587 = vmatmul.mubr.f32.gmra.mxu0 %v325
    %v588 = vpop.f32.mrf.mxu0
    %v589 = vadd.f32 0.0, %v588
    %v590 = vpop.f32.mrf.mxu0
    %591 = vmatprep.mubr.f32.mxu0 0.0
    %592 = vmatmul.mubr.f32.gmra.mxu0 %v328
    %v593 = vpop.f32.mrf.mxu0
    %v594 = vadd.f32 0.0, %v593
    %v595 = vpop.f32.mrf.mxu0
    %596 = vmatprep.mubr.f32.mxu0 0.0
    %597 = vmatmul.mubr.f32.gmra.mxu0 %v331
    %v598 = vpop.f32.mrf.mxu0
    %v599 = vadd.f32 0.0, %v598
    %v600 = vpop.f32.mrf.mxu0
    %601 = vmatprep.mubr.f32.mxu0 0.0
    %602 = vmatmul.mubr.f32.gmra.mxu0 %v480
    %v603 = vpop.f32.mrf.mxu0
    %v604 = vadd.f32 0.0, %v603
    %v605 = vpop.f32.mrf.mxu0
    %606 = vdwg.mxu0
    %v607 = vadd.f32 %v458, %v549
    %v608 = vadd.f32 %v459, %v554
    %v609 = vadd.f32 %v460, %v559
    %v610 = vadd.f32 %v461, %v564
    %v611 = vadd.f32 %v462, %v569
    %v612 = vadd.f32 %v463, %v574
    %v613 = vadd.f32 %v464, %v579
    %v614 = vadd.f32 %v465, %v584
    %v615 = vadd.f32 %v466, %v589
    %v616 = vadd.f32 %v467, %v594
    %v617 = vadd.f32 %v468, %v599
    %v618 = vadd.f32 %v469, %v604
    %s619 = scalar_lea.vmem %s3, 128
    %v620 = vld [vmem:[%s619] sm:$0xff]
    %v621 = vld [vmem:[%s619 + $0x8] sm:$0xff]
    %v622 = vld [vmem:[%s619 + $0x10] sm:$0xff]
    %v623 = vld [vmem:[%s619 + $0x18] sm:$0xff]
    %v624 = vld [vmem:[%s619 + $0x20] sm:$0xff]
    %v625 = vld [vmem:[%s619 + $0x28] sm:$0xff]
    %v626 = vld [vmem:[%s619 + $0x30] sm:$0xff]
    %v627 = vld [vmem:[%s619 + $0x38] sm:$0xff]
    %v629 = vsel %vm296, %v279, 0
    %631 = vmatprep.subr.mxu0 0.0
    %632 = vmatpush1.msra.mxu0 0.0
    %633 = vmatprep.subr.mxu0 0.0
    %634 = vmatpush1.msra.mxu0 0.0
    %635 = vmatprep.subr.mxu0 0.0
    %636 = vmatpush1.msra.mxu0 0.0
    %637 = vmatprep.subr.mxu0 0.0
    %638 = vmatpush1.msra.mxu0 0.0
    %639 = vmatprep.subr.mxu0 0.0
    %640 = vmatpush1.msra.mxu0 0.0
    %641 = vmatprep.subr.mxu0 0.0
    %642 = vmatpush1.msra.mxu0 0.0
    %643 = vmatprep.subr.mxu0 0.0
    %644 = vmatpush1.msra.mxu0 0.0
    %645 = vmatprep.subr.mxu0 0.0
    %646 = vmatpush1.msra.mxu0 0.0
    %647 = vmatprep.subr.mxu0 0.0
    %648 = vmatpush1.msra.mxu0 %v627
    %649 = vmatprep.subr.mxu0 0.0
    %650 = vmatpush1.msra.mxu0 %v626
    %651 = vmatprep.subr.mxu0 0.0
    %652 = vmatpush1.msra.mxu0 %v625
    %653 = vmatprep.subr.mxu0 0.0
    %654 = vmatpush1.msra.mxu0 %v624
    %655 = vmatprep.subr.mxu0 0.0
    %656 = vmatpush1.msra.mxu0 %v623
    %657 = vmatprep.subr.mxu0 0.0
    %658 = vmatpush1.msra.mxu0 %v622
    %659 = vmatprep.subr.mxu0 0.0
    %660 = vmatpush1.msra.mxu0 %v621
    %661 = vmatprep.subr.mxu0 0.0
    %662 = vmatpush1.msra.mxu0 %v620
    %663 = vmatprep.subr.mxu0 0.0
    %664 = vmatpush2.msra.mxu0 0.0
    %665 = vmatprep.subr.mxu0 0.0
    %666 = vmatpush2.msra.mxu0 0.0
    %667 = vmatprep.subr.mxu0 0.0
    %668 = vmatpush2.msra.mxu0 0.0
    %669 = vmatprep.subr.mxu0 0.0
    %670 = vmatpush2.msra.mxu0 0.0
    %671 = vmatprep.subr.mxu0 0.0
    %672 = vmatpush2.msra.mxu0 0.0
    %673 = vmatprep.subr.mxu0 0.0
    %674 = vmatpush2.msra.mxu0 0.0
    %675 = vmatprep.subr.mxu0 0.0
    %676 = vmatpush2.msra.mxu0 0.0
    %677 = vmatprep.subr.mxu0 0.0
    %678 = vmatpush2.msra.mxu0 0.0
    %679 = vmatprep.subr.mxu0 0.0
    %680 = vmatpush2.msra.mxu0 0.0
    %681 = vmatprep.subr.mxu0 0.0
    %682 = vmatpush2.msra.mxu0 0.0
    %683 = vmatprep.subr.mxu0 0.0
    %684 = vmatpush2.msra.mxu0 0.0
    %685 = vmatprep.subr.mxu0 0.0
    %686 = vmatpush2.msra.mxu0 0.0
    %687 = vmatprep.subr.mxu0 0.0
    %688 = vmatpush2.msra.mxu0 0.0
    %689 = vmatprep.subr.mxu0 0.0
    %690 = vmatpush2.msra.mxu0 0.0
    %691 = vmatprep.subr.mxu0 0.0
    %692 = vmatpush2.msra.mxu0 0.0
    %693 = vmatprep.subr.mxu0 0.0
    %694 = vmatpush2.msra.mxu0 0.0
    %695 = vmatprep.mubr.f32.mxu0 0.0
    %696 = vmatmul.mubr.f32.gmra.mxu0 %v304
    %v697 = vpop.f32.mrf.mxu0
    %v698 = vadd.f32 0.0, %v697
    %v699 = vpop.f32.mrf.mxu0
    %700 = vmatprep.mubr.f32.mxu0 0.0
    %701 = vmatmul.mubr.f32.gmra.mxu0 %v307
    %v702 = vpop.f32.mrf.mxu0
    %v703 = vadd.f32 0.0, %v702
    %v704 = vpop.f32.mrf.mxu0
    %705 = vmatprep.mubr.f32.mxu0 0.0
    %706 = vmatmul.mubr.f32.gmra.mxu0 %v310
    %v707 = vpop.f32.mrf.mxu0
    %v708 = vadd.f32 0.0, %v707
    %v709 = vpop.f32.mrf.mxu0
    %710 = vmatprep.mubr.f32.mxu0 0.0
    %711 = vmatmul.mubr.f32.gmra.mxu0 %v313
    %v712 = vpop.f32.mrf.mxu0
    %v713 = vadd.f32 0.0, %v712
    %v714 = vpop.f32.mrf.mxu0
    %715 = vmatprep.mubr.f32.mxu0 0.0
    %716 = vmatmul.mubr.f32.gmra.mxu0 %v316
    %v717 = vpop.f32.mrf.mxu0
    %v718 = vadd.f32 0.0, %v717
    %v719 = vpop.f32.mrf.mxu0
    %720 = vmatprep.mubr.f32.mxu0 0.0
    %721 = vmatmul.mubr.f32.gmra.mxu0 %v319
    %v722 = vpop.f32.mrf.mxu0
    %v723 = vadd.f32 0.0, %v722
    %v724 = vpop.f32.mrf.mxu0
    %725 = vmatprep.mubr.f32.mxu0 0.0
    %726 = vmatmul.mubr.f32.gmra.mxu0 %v322
    %v727 = vpop.f32.mrf.mxu0
    %v728 = vadd.f32 0.0, %v727
    %v729 = vpop.f32.mrf.mxu0
    %730 = vmatprep.mubr.f32.mxu0 0.0
    %731 = vmatmul.mubr.f32.gmra.mxu0 %v325
    %v732 = vpop.f32.mrf.mxu0
    %v733 = vadd.f32 0.0, %v732
    %v734 = vpop.f32.mrf.mxu0
    %735 = vmatprep.mubr.f32.mxu0 0.0
    %736 = vmatmul.mubr.f32.gmra.mxu0 %v328
    %v737 = vpop.f32.mrf.mxu0
    %v738 = vadd.f32 0.0, %v737
    %v739 = vpop.f32.mrf.mxu0
    %740 = vmatprep.mubr.f32.mxu0 0.0
    %741 = vmatmul.mubr.f32.gmra.mxu0 %v331
    %v742 = vpop.f32.mrf.mxu0
    %v743 = vadd.f32 0.0, %v742
    %v744 = vpop.f32.mrf.mxu0
    %745 = vmatprep.mubr.f32.mxu0 0.0
    %746 = vmatmul.mubr.f32.gmra.mxu0 %v480
    %v747 = vpop.f32.mrf.mxu0
    %v748 = vadd.f32 0.0, %v747
    %v749 = vpop.f32.mrf.mxu0
    %750 = vmatprep.mubr.f32.mxu0 0.0
    %751 = vmatmul.mubr.f32.gmra.mxu0 %v629
    %v752 = vpop.f32.mrf.mxu0
    %v753 = vadd.f32 0.0, %v752
    %v754 = vpop.f32.mrf.mxu0
    %755 = vdwg.mxu0
    %v756 = vadd.f32 %v607, %v698
    %v757 = vadd.f32 %v608, %v703
    %v758 = vadd.f32 %v609, %v708
    %v759 = vadd.f32 %v610, %v713
    %v760 = vadd.f32 %v611, %v718
    %v761 = vadd.f32 %v612, %v723
    %v762 = vadd.f32 %v613, %v728
    %v763 = vadd.f32 %v614, %v733
    %v764 = vadd.f32 %v615, %v738
    %v765 = vadd.f32 %v616, %v743
    %v766 = vadd.f32 %v617, %v748
    %v767 = vadd.f32 %v618, %v753
    %v768 = vmax.f32 %v756, 0.0
    %v769 = vmax.f32 %v757, 0.0
    %v770 = vmax.f32 %v758, 0.0
    %v771 = vmax.f32 %v759, 0.0
    %v772 = vmax.f32 %v760, 0.0
    %v773 = vmax.f32 %v761, 0.0
    %v774 = vmax.f32 %v762, 0.0
    %v775 = vmax.f32 %v763, 0.0
    %v776 = vmax.f32 %v764, 0.0
    %v777 = vmax.f32 %v765, 0.0
    %v778 = vmax.f32 %v766, 0.0
    %v779 = vmax.f32 %v767, 0.0
    %v780 = vpack.c.bf16 %v769, %v768
    %v781 = vpack.c.bf16 %v771, %v770
    %v782 = vpack.c.bf16 %v773, %v772
    %v783 = vpack.c.bf16 %v775, %v774
    %v784 = vpack.c.bf16 %v777, %v776
    %v785 = vpack.c.bf16 %v779, %v778
    %v786 = vld [vmem:[%s5] sm:$0xff]
    %v787 = vld [vmem:[%s5 + $0x8] sm:$0xff]
    %v788 = vld [vmem:[%s5 + $0x10] sm:$0xff]
    %v789 = vld [vmem:[%s5 + $0x18] sm:$0xff]
    %v790 = vld [vmem:[%s5 + $0x20] sm:$0xff]
    %v791 = vld [vmem:[%s5 + $0x28] sm:$0xff]
    %v792 = vld [vmem:[%s5 + $0x30] sm:$0xff]
    %v793 = vld [vmem:[%s5 + $0x38] sm:$0xff]
    %v794 = vld [vmem:[%s6] sm:$0x3]
    %v796 = vlaneseq
    %v797 = vshrl.u32 %v796, 7
    %v798 = vsub.s32 0, %v797
    %v799 = vrot.slane %v794, %v798
    %v800 = vlaneseq
    %v801 = vshrl.u32 %v800, 7
    %v802 = vsub.s32 1, %v801
    %v803 = vrot.slane %v794, %v802
    %v814 = vunpack.c.l.b16 %v786
    %v815 = vunpack.c.h.b16 %v786
    %v816 = vunpack.c.l.b16 %v787
    %v817 = vunpack.c.h.b16 %v787
    %v818 = vunpack.c.l.b16 %v788
    %v819 = vunpack.c.h.b16 %v788
    %v820 = vunpack.c.l.b16 %v789
    %v821 = vunpack.c.h.b16 %v789
    %v822 = vunpack.c.l.b16 %v790
    %v823 = vunpack.c.h.b16 %v790
    %v824 = vunpack.c.l.b16 %v791
    %v825 = vunpack.c.h.b16 %v791
    %v826 = vunpack.c.l.b16 %v792
    %v827 = vunpack.c.h.b16 %v792
    %v828 = vunpack.c.l.b16 %v793
    %v829 = vunpack.c.h.b16 %v793
    %v830 = vpack.c.b16 %v816, %v814
    %v831 = vpack.c.b16 %v817, %v815
    %v832 = vpack.c.b16 %v820, %v818
    %v833 = vpack.c.b16 %v821, %v819
    %v834 = vpack.c.b16 %v824, %v822
    %v835 = vpack.c.b16 %v825, %v823
    %v836 = vpack.c.b16 %v828, %v826
    %v837 = vpack.c.b16 %v829, %v827
    %v847 = vsel %vm296, %v780, 0
    %v850 = vsel %vm296, %v781, 0
    %v853 = vsel %vm296, %v782, 0
    %v856 = vsel %vm296, %v783, 0
    %v859 = vsel %vm296, %v784, 0
    %v862 = vsel %vm296, %v785, 0
    %864 = vmatprep.subr.bf16.mxu0 0
    %865 = vmatpush1.bf16.msra.mxu0 0
    %866 = vmatprep.subr.bf16.mxu0 0
    %867 = vmatpush1.bf16.msra.mxu0 0
    %868 = vmatprep.subr.bf16.mxu0 0
    %869 = vmatpush1.bf16.msra.mxu0 0
    %870 = vmatprep.subr.bf16.mxu0 0
    %871 = vmatpush1.bf16.msra.mxu0 0
    %872 = vmatprep.subr.bf16.mxu0 %v837
    %873 = vmatpush1.bf16.msra.mxu0 %v836
    %874 = vmatprep.subr.bf16.mxu0 %v835
    %875 = vmatpush1.bf16.msra.mxu0 %v834
    %876 = vmatprep.subr.bf16.mxu0 %v833
    %877 = vmatpush1.bf16.msra.mxu0 %v832
    %878 = vmatprep.subr.bf16.mxu0 %v831
    %879 = vmatpush1.bf16.msra.mxu0 %v830
    %880 = vmatprep.subr.bf16.mxu0 0
    %881 = vmatpush2.bf16.msra.mxu0 0
    %882 = vmatprep.subr.bf16.mxu0 0
    %883 = vmatpush2.bf16.msra.mxu0 0
    %884 = vmatprep.subr.bf16.mxu0 0
    %885 = vmatpush2.bf16.msra.mxu0 0
    %886 = vmatprep.subr.bf16.mxu0 0
    %887 = vmatpush2.bf16.msra.mxu0 0
    %888 = vmatprep.subr.bf16.mxu0 0
    %889 = vmatpush2.bf16.msra.mxu0 0
    %890 = vmatprep.subr.bf16.mxu0 0
    %891 = vmatpush2.bf16.msra.mxu0 0
    %892 = vmatprep.subr.bf16.mxu0 0
    %893 = vmatpush2.bf16.msra.mxu0 0
    %894 = vmatprep.subr.bf16.mxu0 0
    %895 = vmatpush2.bf16.msra.mxu0 0
    %896 = vmatprep.mubr.bf16.mxu0 0
    %897 = vmatmul.mubr.bf16.gmra.mxu0 %v847
    %v898 = vpop.f32.mrf.mxu0
    %v899 = vadd.f32 %v799, %v898
    %v900 = vpop.f32.mrf.mxu0
    %v901 = vadd.f32 %v803, %v900
    %v902 = vpop.f32.mrf.mxu0
    %v903 = vadd.f32 %v799, %v902
    %v904 = vpop.f32.mrf.mxu0
    %v905 = vadd.f32 %v803, %v904
    %906 = vmatprep.mubr.bf16.mxu0 0
    %907 = vmatmul.mubr.bf16.gmra.mxu0 %v850
    %v908 = vpop.f32.mrf.mxu0
    %v909 = vadd.f32 %v799, %v908
    %v910 = vpop.f32.mrf.mxu0
    %v911 = vadd.f32 %v803, %v910
    %v912 = vpop.f32.mrf.mxu0
    %v913 = vadd.f32 %v799, %v912
    %v914 = vpop.f32.mrf.mxu0
    %v915 = vadd.f32 %v803, %v914
    %916 = vmatprep.mubr.bf16.mxu0 0
    %917 = vmatmul.mubr.bf16.gmra.mxu0 %v853
    %v918 = vpop.f32.mrf.mxu0
    %v919 = vadd.f32 %v799, %v918
    %v920 = vpop.f32.mrf.mxu0
    %v921 = vadd.f32 %v803, %v920
    %v922 = vpop.f32.mrf.mxu0
    %v923 = vadd.f32 %v799, %v922
    %v924 = vpop.f32.mrf.mxu0
    %v925 = vadd.f32 %v803, %v924
    %926 = vmatprep.mubr.bf16.mxu0 0
    %927 = vmatmul.mubr.bf16.gmra.mxu0 %v856
    %v928 = vpop.f32.mrf.mxu0
    %v929 = vadd.f32 %v799, %v928
    %v930 = vpop.f32.mrf.mxu0
    %v931 = vadd.f32 %v803, %v930
    %v932 = vpop.f32.mrf.mxu0
    %v933 = vadd.f32 %v799, %v932
    %v934 = vpop.f32.mrf.mxu0
    %v935 = vadd.f32 %v803, %v934
    %936 = vmatprep.mubr.bf16.mxu0 0
    %937 = vmatmul.mubr.bf16.gmra.mxu0 %v859
    %v938 = vpop.f32.mrf.mxu0
    %v939 = vadd.f32 %v799, %v938
    %v940 = vpop.f32.mrf.mxu0
    %v941 = vadd.f32 %v803, %v940
    %v942 = vpop.f32.mrf.mxu0
    %v943 = vadd.f32 %v799, %v942
    %v944 = vpop.f32.mrf.mxu0
    %v945 = vadd.f32 %v803, %v944
    %946 = vmatprep.mubr.bf16.mxu0 0
    %947 = vmatmul.mubr.bf16.gmra.mxu0 %v862
    %v948 = vpop.f32.mrf.mxu0
    %v949 = vadd.f32 %v799, %v948
    %v950 = vpop.f32.mrf.mxu0
    %v951 = vadd.f32 %v803, %v950
    %v952 = vpop.f32.mrf.mxu0
    %v953 = vadd.f32 %v799, %v952
    %v954 = vpop.f32.mrf.mxu0
    %v955 = vadd.f32 %v803, %v954
    %956 = vdwg.mxu0
    %957 = vst [vmem:[#allocation2] sm:$0xff] %v899
    %958 = vst [vmem:[#allocation2 + $0x8] sm:$0xff] %v901
    %959 = vst [vmem:[#allocation2 + $0x10] sm:$0xff] %v903
    %960 = vst [vmem:[#allocation2 + $0x18] sm:$0xff] %v905
    %961 = vst [vmem:[#allocation2 + $0x20] sm:$0xff] %v909
    %962 = vst [vmem:[#allocation2 + $0x28] sm:$0xff] %v911
    %963 = vst [vmem:[#allocation2 + $0x30] sm:$0xff] %v913
    %964 = vst [vmem:[#allocation2 + $0x38] sm:$0xff] %v915
    %965 = vst [vmem:[#allocation2 + $0x40] sm:$0xff] %v919
    %966 = vst [vmem:[#allocation2 + $0x48] sm:$0xff] %v921
    %967 = vst [vmem:[#allocation2 + $0x50] sm:$0xff] %v923
    %968 = vst [vmem:[#allocation2 + $0x58] sm:$0xff] %v925
    %969 = vst [vmem:[#allocation2 + $0x60] sm:$0xff] %v929
    %970 = vst [vmem:[#allocation2 + $0x68] sm:$0xff] %v931
    %971 = vst [vmem:[#allocation2 + $0x70] sm:$0xff] %v933
    %972 = vst [vmem:[#allocation2 + $0x78] sm:$0xff] %v935
    %973 = vst [vmem:[#allocation2 + $0x80] sm:$0xff] %v939
    %974 = vst [vmem:[#allocation2 + $0x88] sm:$0xff] %v941
    %975 = vst [vmem:[#allocation2 + $0x90] sm:$0xff] %v943
    %976 = vst [vmem:[#allocation2 + $0x98] sm:$0xff] %v945
    %977 = vst [vmem:[#allocation2 + $0xa0] sm:$0xff] %v949
    %978 = vst [vmem:[#allocation2 + $0xa8] sm:$0xff] %v951
    %979 = vst [vmem:[#allocation2 + $0xb0] sm:$0xff] %v953
    %980 = vst [vmem:[#allocation2 + $0xb8] sm:$0xff] %v955
    %v981 = vld [vmem:[#allocation2] sm:$0xff]
    %v982 = vld [vmem:[#allocation2 + $0x8] sm:$0xff]
    %v983 = vadd.f32 %v981, 0.0
    %v984 = vadd.f32 %v982, 0.0
    %v985 = vxor.u32 %v983, 2147483648
    %v986 = vxor.u32 %v984, 2147483648
    %v987 = vmul.f32 %v985, 1.442695
    %v988 = vpow.pop %v987
    %v989 = vmul.f32 %v986, 1.442695
    %v990 = vpow.pop %v989
    %v991 = vadd.f32 %v988, 1.0
    %v992 = vadd.f32 %v990, 1.0
    %v993 = vrcp.pop %v991
    %v994 = vmul.f32 1.0, %v993
    %v995 = vrcp.pop %v992
    %v996 = vmul.f32 1.0, %v995
    %v997 = vmul.f32 %v996, 2.0
    %v998 = vsub.f32 %v997, 1.0
    %v999 = vmul.f32 %v994, 0.0
    %v1000 = vmul.f32 %v994, %v998
    %1002 = vrot.lane.b32.xlu0 %v1000, 64
    %v1003 = vpop.permute.xlu0 %1002
    %v1005 = vadd.f32 %v999, %v1003
    %v1006 = vtanh.pop %v1005
    %v1007 = vmul.f32 %v996, %v1006
    %v1008 = vpack.c.bf16 %v1007, %v1007
    %v1009 = vld [vmem:[%s7] sm:$0xff]
    %v1010 = vld [vmem:[%s7 + $0x8] sm:$0xff]
    %v1011 = vld [vmem:[%s7 + $0x10] sm:$0xff]
    %v1012 = vld [vmem:[%s7 + $0x18] sm:$0xff]
    %v1013 = vld [vmem:[%s7 + $0x20] sm:$0xff]
    %v1014 = vld [vmem:[%s7 + $0x28] sm:$0xff]
    %v1015 = vld [vmem:[%s7 + $0x30] sm:$0xff]
    %v1016 = vld [vmem:[%s7 + $0x38] sm:$0xff]
    %v1017 = vld [vmem:[%s7 + $0x40] sm:$0xff]
    %v1018 = vld [vmem:[%s7 + $0x48] sm:$0xff]
    %v1019 = vld [vmem:[%s7 + $0x50] sm:$0xff]
    %v1020 = vld [vmem:[%s7 + $0x58] sm:$0xff]
    %v1021 = vld [vmem:[%s7 + $0x60] sm:$0xff]
    %v1022 = vld [vmem:[%s7 + $0x68] sm:$0xff]
    %v1023 = vld [vmem:[%s7 + $0x70] sm:$0xff]
    %v1024 = vld [vmem:[%s7 + $0x78] sm:$0xff]
    %1026 = vrot.lane.b32.xlu0 %v1008, 64
    %v1027 = vpop.permute.xlu0 %1026
    %v1044 = vunpack.c.l.b16 %v1009
    %v1045 = vunpack.c.h.b16 %v1009
    %v1046 = vunpack.c.l.b16 %v1010
    %v1047 = vunpack.c.h.b16 %v1010
    %v1048 = vunpack.c.l.b16 %v1011
    %v1049 = vunpack.c.h.b16 %v1011
    %v1050 = vunpack.c.l.b16 %v1012
    %v1051 = vunpack.c.h.b16 %v1012
    %v1052 = vunpack.c.l.b16 %v1013
    %v1053 = vunpack.c.h.b16 %v1013
    %v1054 = vunpack.c.l.b16 %v1014
    %v1055 = vunpack.c.h.b16 %v1014
    %v1056 = vunpack.c.l.b16 %v1015
    %v1057 = vunpack.c.h.b16 %v1015
    %v1058 = vunpack.c.l.b16 %v1016
    %v1059 = vunpack.c.h.b16 %v1016
    %v1060 = vunpack.c.l.b16 %v1017
    %v1061 = vunpack.c.h.b16 %v1017
    %v1062 = vunpack.c.l.b16 %v1018
    %v1063 = vunpack.c.h.b16 %v1018
    %v1064 = vunpack.c.l.b16 %v1019
    %v1065 = vunpack.c.h.b16 %v1019
    %v1066 = vunpack.c.l.b16 %v1020
    %v1067 = vunpack.c.h.b16 %v1020
    %v1068 = vunpack.c.l.b16 %v1021
    %v1069 = vunpack.c.h.b16 %v1021
    %v1070 = vunpack.c.l.b16 %v1022
    %v1071 = vunpack.c.h.b16 %v1022
    %v1072 = vunpack.c.l.b16 %v1023
    %v1073 = vunpack.c.h.b16 %v1023
    %v1074 = vunpack.c.l.b16 %v1024
    %v1075 = vunpack.c.h.b16 %v1024
    %v1076 = vpack.c.b16 %v1048, %v1044
    %v1077 = vpack.c.b16 %v1049, %v1045
    %v1078 = vpack.c.b16 %v1050, %v1046
    %v1079 = vpack.c.b16 %v1051, %v1047
    %v1080 = vpack.c.b16 %v1056, %v1052
    %v1081 = vpack.c.b16 %v1057, %v1053
    %v1082 = vpack.c.b16 %v1058, %v1054
    %v1083 = vpack.c.b16 %v1059, %v1055
    %v1084 = vpack.c.b16 %v1064, %v1060
    %v1085 = vpack.c.b16 %v1065, %v1061
    %v1086 = vpack.c.b16 %v1066, %v1062
    %v1087 = vpack.c.b16 %v1067, %v1063
    %v1088 = vpack.c.b16 %v1072, %v1068
    %v1089 = vpack.c.b16 %v1073, %v1069
    %v1090 = vpack.c.b16 %v1074, %v1070
    %v1091 = vpack.c.b16 %v1075, %v1071
    %v1109 = vsel %vm296, %v1027, 0
    %1111 = vmatprep.subr.bf16.mxu0 0
    %1112 = vmatpush1.bf16.msra.mxu0 0
    %1113 = vmatprep.subr.bf16.mxu0 0
    %1114 = vmatpush1.bf16.msra.mxu0 0
    %1115 = vmatprep.subr.bf16.mxu0 0
    %1116 = vmatpush1.bf16.msra.mxu0 0
    %1117 = vmatprep.subr.bf16.mxu0 0
    %1118 = vmatpush1.bf16.msra.mxu0 0
    %1119 = vmatprep.subr.bf16.mxu0 %v1089
    %1120 = vmatpush1.bf16.msra.mxu0 %v1088
    %1121 = vmatprep.subr.bf16.mxu0 %v1085
    %1122 = vmatpush1.bf16.msra.mxu0 %v1084
    %1123 = vmatprep.subr.bf16.mxu0 %v1081
    %1124 = vmatpush1.bf16.msra.mxu0 %v1080
    %1125 = vmatprep.subr.bf16.mxu0 %v1077
    %1126 = vmatpush1.bf16.msra.mxu0 %v1076
    %1127 = vmatprep.subr.bf16.mxu0 0
    %1128 = vmatpush2.bf16.msra.mxu0 0
    %1129 = vmatprep.subr.bf16.mxu0 0
    %1130 = vmatpush2.bf16.msra.mxu0 0
    %1131 = vmatprep.subr.bf16.mxu0 0
    %1132 = vmatpush2.bf16.msra.mxu0 0
    %1133 = vmatprep.subr.bf16.mxu0 0
    %1134 = vmatpush2.bf16.msra.mxu0 0
    %1135 = vmatprep.subr.bf16.mxu0 0
    %1136 = vmatpush2.bf16.msra.mxu0 0
    %1137 = vmatprep.subr.bf16.mxu0 0
    %1138 = vmatpush2.bf16.msra.mxu0 0
    %1139 = vmatprep.subr.bf16.mxu0 0
    %1140 = vmatpush2.bf16.msra.mxu0 0
    %1141 = vmatprep.subr.bf16.mxu0 0
    %1142 = vmatpush2.bf16.msra.mxu0 0
    %1143 = vmatprep.mubr.bf16.mxu0 0
    %1144 = vmatmul.mubr.bf16.gmra.mxu0 %v1109
    %v1145 = vpop.f32.mrf.mxu0
    %v1146 = vadd.f32 0.0, %v1145
    %v1147 = vpop.f32.mrf.mxu0
    %v1148 = vadd.f32 0.0, %v1147
    %v1149 = vpop.f32.mrf.mxu0
    %v1150 = vpop.f32.mrf.mxu0
    %1151 = vdwg.mxu0
    %1152 = vmatprep.subr.bf16.mxu0 0
    %1153 = vmatpush1.bf16.msra.mxu0 0
    %1154 = vmatprep.subr.bf16.mxu0 0
    %1155 = vmatpush1.bf16.msra.mxu0 0
    %1156 = vmatprep.subr.bf16.mxu0 0
    %1157 = vmatpush1.bf16.msra.mxu0 0
    %1158 = vmatprep.subr.bf16.mxu0 0
    %1159 = vmatpush1.bf16.msra.mxu0 0
    %1160 = vmatprep.subr.bf16.mxu0 %v1091
    %1161 = vmatpush1.bf16.msra.mxu0 %v1090
    %1162 = vmatprep.subr.bf16.mxu0 %v1087
    %1163 = vmatpush1.bf16.msra.mxu0 %v1086
    %1164 = vmatprep.subr.bf16.mxu0 %v1083
    %1165 = vmatpush1.bf16.msra.mxu0 %v1082
    %1166 = vmatprep.subr.bf16.mxu0 %v1079
    %1167 = vmatpush1.bf16.msra.mxu0 %v1078
    %1168 = vmatprep.subr.bf16.mxu0 0
    %1169 = vmatpush2.bf16.msra.mxu0 0
    %1170 = vmatprep.subr.bf16.mxu0 0
    %1171 = vmatpush2.bf16.msra.mxu0 0
    %1172 = vmatprep.subr.bf16.mxu0 0
    %1173 = vmatpush2.bf16.msra.mxu0 0
    %1174 = vmatprep.subr.bf16.mxu0 0
    %1175 = vmatpush2.bf16.msra.mxu0 0
    %1176 = vmatprep.subr.bf16.mxu0 0
    %1177 = vmatpush2.bf16.msra.mxu0 0
    %1178 = vmatprep.subr.bf16.mxu0 0
    %1179 = vmatpush2.bf16.msra.mxu0 0
    %1180 = vmatprep.subr.bf16.mxu0 0
    %1181 = vmatpush2.bf16.msra.mxu0 0
    %1182 = vmatprep.subr.bf16.mxu0 0
    %1183 = vmatpush2.bf16.msra.mxu0 0
    %1184 = vmatprep.mubr.bf16.mxu0 0
    %1185 = vmatmul.mubr.bf16.gmra.mxu0 %v1109
    %v1186 = vpop.f32.mrf.mxu0
    %v1187 = vadd.f32 0.0, %v1186
    %v1188 = vpop.f32.mrf.mxu0
    %v1189 = vadd.f32 0.0, %v1188
    %v1190 = vpop.f32.mrf.mxu0
    %v1191 = vpop.f32.mrf.mxu0
    %1192 = vdwg.mxu0
    %v1193 = vld [vmem:[%s8] sm:$0x3]
    %v1195 = vlaneseq
    %v1196 = vshrl.u32 %v1195, 7
    %v1197 = vsub.s32 0, %v1196
    %v1198 = vrot.slane %v1193, %v1197
    %v1199 = vlaneseq
    %v1200 = vshrl.u32 %v1199, 7
    %v1201 = vsub.s32 1, %v1200
    %v1202 = vrot.slane %v1193, %v1201
    %v1205 = vadd.f32 %v1198, %v1187
    %v1206 = vadd.f32 %v1202, %v1189
    %v1207 = vadd.f32 %v1205, 0.0
    %v1208 = vadd.f32 %v1206, 0.0
    %v1209 = vxor.u32 %v1207, 2147483648
    %v1210 = vxor.u32 %v1208, 2147483648
    %v1211 = vmul.f32 %v1209, 1.442695
    %v1212 = vpow.pop %v1211
    %v1213 = vmul.f32 %v1210, 1.442695
    %v1214 = vpow.pop %v1213
    %v1215 = vadd.f32 %v1212, 1.0
    %v1216 = vadd.f32 %v1214, 1.0
    %v1217 = vrcp.pop %v1215
    %v1218 = vmul.f32 1.0, %v1217
    %v1219 = vrcp.pop %v1216
    %v1220 = vmul.f32 1.0, %v1219
    %v1221 = vmul.f32 %v1220, 2.0
    %v1222 = vsub.f32 %v1221, 1.0
    %v1223 = vmul.f32 %v1218, 0.0
    %v1224 = vmul.f32 %v1218, %v1222
    %1226 = vrot.lane.b32.xlu0 %v1224, 64
    %v1227 = vpop.permute.xlu0 %1226
    %v1229 = vadd.f32 %v1223, %v1227
    %v1230 = vtanh.pop %v1229
    %v1231 = vmul.f32 %v1220, %v1230
    %v1232 = vpack.c.bf16 %v1231, %v1231
    %v1233 = vld [vmem:[#allocation4] sm:$0xff]
    %v1234 = vld [vmem:[#allocation4 + $0x8] sm:$0xf]
    %v1235 = vld [vmem:[#allocation4 + $0xc] sm:$0xff]
    %v1236 = vld [vmem:[#allocation4 + $0x14] sm:$0xf]
    %v1237 = vld [vmem:[#allocation4 + $0x18] sm:$0xff]
    %v1238 = vld [vmem:[#allocation4 + $0x20] sm:$0xf]
    %v1239 = vld [vmem:[#allocation4 + $0x24] sm:$0xff]
    %v1240 = vld [vmem:[#allocation4 + $0x2c] sm:$0xf]
    %v1241 = vld [vmem:[#allocation4 + $0x30] sm:$0xff]
    %v1242 = vld [vmem:[#allocation4 + $0x38] sm:$0xf]
    %v1243 = vld [vmem:[#allocation4 + $0x3c] sm:$0xff]
    %v1244 = vld [vmem:[#allocation4 + $0x44] sm:$0xf]
    %v1245 = vld [vmem:[#allocation4 + $0x48] sm:$0xff]
    %v1246 = vld [vmem:[#allocation4 + $0x50] sm:$0xf]
    %v1247 = vld [vmem:[#allocation4 + $0x54] sm:$0xff]
    %v1248 = vld [vmem:[#allocation4 + $0x5c] sm:$0xf]
    %1250 = vrot.lane.b32.xlu0 %v1232, 64
    %v1251 = vpop.permute.xlu0 %1250
    %v1268 = vunpack.c.l.b16 %v1233
    %v1269 = vunpack.c.h.b16 %v1233
    %v1270 = vunpack.c.l.b16 %v1234
    %v1271 = vunpack.c.l.b16 %v1235
    %v1272 = vunpack.c.h.b16 %v1235
    %v1273 = vunpack.c.l.b16 %v1236
    %v1274 = vunpack.c.l.b16 %v1237
    %v1275 = vunpack.c.h.b16 %v1237
    %v1276 = vunpack.c.l.b16 %v1238
    %v1277 = vunpack.c.l.b16 %v1239
    %v1278 = vunpack.c.h.b16 %v1239
    %v1279 = vunpack.c.l.b16 %v1240
    %v1280 = vunpack.c.l.b16 %v1241
    %v1281 = vunpack.c.h.b16 %v1241
    %v1282 = vunpack.c.l.b16 %v1242
    %v1283 = vunpack.c.l.b16 %v1243
    %v1284 = vunpack.c.h.b16 %v1243
    %v1285 = vunpack.c.l.b16 %v1244
    %v1286 = vunpack.c.l.b16 %v1245
    %v1287 = vunpack.c.h.b16 %v1245
    %v1288 = vunpack.c.l.b16 %v1246
    %v1289 = vunpack.c.l.b16 %v1247
    %v1290 = vunpack.c.h.b16 %v1247
    %v1291 = vunpack.c.l.b16 %v1248
    %v1292 = vpack.c.b16 %v1271, %v1268
    %v1293 = vpack.c.b16 %v1272, %v1269
    %v1294 = vpack.c.b16 %v1273, %v1270
    %v1295 = vpack.c.b16 %v1277, %v1274
    %v1296 = vpack.c.b16 %v1278, %v1275
    %v1297 = vpack.c.b16 %v1279, %v1276
    %v1298 = vpack.c.b16 %v1283, %v1280
    %v1299 = vpack.c.b16 %v1284, %v1281
    %v1300 = vpack.c.b16 %v1285, %v1282
    %v1301 = vpack.c.b16 %v1289, %v1286
    %v1302 = vpack.c.b16 %v1290, %v1287
    %v1303 = vpack.c.b16 %v1291, %v1288
    %v1317 = vsel %vm296, %v1251, 0
    %1319 = vmatprep.subr.bf16.mxu0 0
    %1320 = vmatpush1.bf16.msra.mxu0 0
    %1321 = vmatprep.subr.bf16.mxu0 0
    %1322 = vmatpush1.bf16.msra.mxu0 0
    %1323 = vmatprep.subr.bf16.mxu0 0
    %1324 = vmatpush1.bf16.msra.mxu0 0
    %1325 = vmatprep.subr.bf16.mxu0 0
    %1326 = vmatpush1.bf16.msra.mxu0 0
    %1327 = vmatprep.subr.bf16.mxu0 %v1302
    %1328 = vmatpush1.bf16.msra.mxu0 %v1301
    %1329 = vmatprep.subr.bf16.mxu0 %v1299
    %1330 = vmatpush1.bf16.msra.mxu0 %v1298
    %1331 = vmatprep.subr.bf16.mxu0 %v1296
    %1332 = vmatpush1.bf16.msra.mxu0 %v1295
    %1333 = vmatprep.subr.bf16.mxu0 %v1293
    %1334 = vmatpush1.bf16.msra.mxu0 %v1292
    %1335 = vmatprep.subr.bf16.mxu0 0
    %1336 = vmatpush2.bf16.msra.mxu0 0
    %1337 = vmatprep.subr.bf16.mxu0 0
    %1338 = vmatpush2.bf16.msra.mxu0 0
    %1339 = vmatprep.subr.bf16.mxu0 0
    %1340 = vmatpush2.bf16.msra.mxu0 0
    %1341 = vmatprep.subr.bf16.mxu0 0
    %1342 = vmatpush2.bf16.msra.mxu0 0
    %1343 = vmatprep.subr.bf16.mxu0 0
    %1344 = vmatpush2.bf16.msra.mxu0 0
    %1345 = vmatprep.subr.bf16.mxu0 0
    %1346 = vmatpush2.bf16.msra.mxu0 0
    %1347 = vmatprep.subr.bf16.mxu0 0
    %1348 = vmatpush2.bf16.msra.mxu0 0
    %1349 = vmatprep.subr.bf16.mxu0 0
    %1350 = vmatpush2.bf16.msra.mxu0 0
    %1351 = vmatprep.mubr.bf16.mxu0 0
    %1352 = vmatmul.mubr.bf16.gmra.mxu0 %v1317
    %v1353 = vpop.f32.mrf.mxu0
    %v1354 = vadd.f32 0.0, %v1353
    %v1355 = vpop.f32.mrf.mxu0
    %v1356 = vadd.f32 0.0, %v1355
    %v1357 = vpop.f32.mrf.mxu0
    %v1358 = vpop.f32.mrf.mxu0
    %1359 = vdwg.mxu0
    %1360 = vmatprep.subr.bf16.mxu0 0
    %1361 = vmatpush1.bf16.msra.mxu0 0
    %1362 = vmatprep.subr.bf16.mxu0 0
    %1363 = vmatpush1.bf16.msra.mxu0 0
    %1364 = vmatprep.subr.bf16.mxu0 0
    %1365 = vmatpush1.bf16.msra.mxu0 0
    %1366 = vmatprep.subr.bf16.mxu0 0
    %1367 = vmatpush1.bf16.msra.mxu0 0
    %1368 = vmatprep.subr.bf16.mxu0 0
    %1369 = vmatpush1.bf16.msra.mxu0 %v1303
    %1370 = vmatprep.subr.bf16.mxu0 0
    %1371 = vmatpush1.bf16.msra.mxu0 %v1300
    %1372 = vmatprep.subr.bf16.mxu0 0
    %1373 = vmatpush1.bf16.msra.mxu0 %v1297
    %1374 = vmatprep.subr.bf16.mxu0 0
    %1375 = vmatpush1.bf16.msra.mxu0 %v1294
    %1376 = vmatprep.subr.bf16.mxu0 0
    %1377 = vmatpush2.bf16.msra.mxu0 0
    %1378 = vmatprep.subr.bf16.mxu0 0
    %1379 = vmatpush2.bf16.msra.mxu0 0
    %1380 = vmatprep.subr.bf16.mxu0 0
    %1381 = vmatpush2.bf16.msra.mxu0 0
    %1382 = vmatprep.subr.bf16.mxu0 0
    %1383 = vmatpush2.bf16.msra.mxu0 0
    %1384 = vmatprep.subr.bf16.mxu0 0
    %1385 = vmatpush2.bf16.msra.mxu0 0
    %1386 = vmatprep.subr.bf16.mxu0 0
    %1387 = vmatpush2.bf16.msra.mxu0 0
    %1388 = vmatprep.subr.bf16.mxu0 0
    %1389 = vmatpush2.bf16.msra.mxu0 0
    %1390 = vmatprep.subr.bf16.mxu0 0
    %1391 = vmatpush2.bf16.msra.mxu0 0
    %1392 = vmatprep.mubr.bf16.mxu0 0
    %1393 = vmatmul.mubr.bf16.gmra.mxu0 %v1317
    %v1394 = vpop.f32.mrf.mxu0
    %v1395 = vadd.f32 0.0, %v1394
    %v1396 = vpop.f32.mrf.mxu0
    %v1397 = vpop.f32.mrf.mxu0
    %v1398 = vpop.f32.mrf.mxu0
    %1399 = vdwg.mxu0
    %v1400 = vadd.f32 %v1395, 0.0
    %v1401 = vld [vmem:[#allocation2 + $0x10] sm:$0xff]
    %v1402 = vld [vmem:[#allocation2 + $0x18] sm:$0xff]
    %v1403 = vadd.f32 %v1401, %v1146
    %v1404 = vadd.f32 %v1402, %v1148
    %v1405 = vxor.u32 %v1403, 2147483648
    %v1406 = vxor.u32 %v1404, 2147483648
    %v1407 = vmul.f32 %v1405, 1.442695
    %v1408 = vpow.pop %v1407
    %v1409 = vmul.f32 %v1406, 1.442695
    %v1410 = vpow.pop %v1409
    %v1411 = vadd.f32 %v1408, 1.0
    %v1412 = vadd.f32 %v1410, 1.0
    %v1413 = vrcp.pop %v1411
    %v1414 = vmul.f32 1.0, %v1413
    %v1415 = vrcp.pop %v1412
    %v1416 = vmul.f32 1.0, %v1415
    %v1417 = vmul.f32 %v1416, 2.0
    %v1418 = vsub.f32 %v1417, 1.0
    %v1419 = vmul.f32 %v1414, %v1005
    %v1420 = vmul.f32 %v1414, %v1418
    %1422 = vrot.lane.b32.xlu0 %v1420, 64
    %v1423 = vpop.permute.xlu0 %1422
    %v1425 = vadd.f32 %v1419, %v1423
    %v1426 = vtanh.pop %v1425
    %v1427 = vmul.f32 %v1416, %v1426
    %v1428 = vpack.c.bf16 %v1427, %v1427
    %1430 = vrot.lane.b32.xlu0 %v1428, 64
    %v1431 = vpop.permute.xlu0 %1430
    %v1433 = vsel %vm296, %v1431, 0
    %1435 = vmatprep.subr.bf16.mxu0 0
    %1436 = vmatpush1.bf16.msra.mxu0 0
    %1437 = vmatprep.subr.bf16.mxu0 0
    %1438 = vmatpush1.bf16.msra.mxu0 0
    %1439 = vmatprep.subr.bf16.mxu0 0
    %1440 = vmatpush1.bf16.msra.mxu0 0
    %1441 = vmatprep.subr.bf16.mxu0 0
    %1442 = vmatpush1.bf16.msra.mxu0 0
    %1443 = vmatprep.subr.bf16.mxu0 %v1089
    %1444 = vmatpush1.bf16.msra.mxu0 %v1088
    %1445 = vmatprep.subr.bf16.mxu0 %v1085
    %1446 = vmatpush1.bf16.msra.mxu0 %v1084
    %1447 = vmatprep.subr.bf16.mxu0 %v1081
    %1448 = vmatpush1.bf16.msra.mxu0 %v1080
    %1449 = vmatprep.subr.bf16.mxu0 %v1077
    %1450 = vmatpush1.bf16.msra.mxu0 %v1076
    %1451 = vmatprep.subr.bf16.mxu0 0
    %1452 = vmatpush2.bf16.msra.mxu0 0
    %1453 = vmatprep.subr.bf16.mxu0 0
    %1454 = vmatpush2.bf16.msra.mxu0 0
    %1455 = vmatprep.subr.bf16.mxu0 0
    %1456 = vmatpush2.bf16.msra.mxu0 0
    %1457 = vmatprep.subr.bf16.mxu0 0
    %1458 = vmatpush2.bf16.msra.mxu0 0
    %1459 = vmatprep.subr.bf16.mxu0 0
    %1460 = vmatpush2.bf16.msra.mxu0 0
    %1461 = vmatprep.subr.bf16.mxu0 0
    %1462 = vmatpush2.bf16.msra.mxu0 0
    %1463 = vmatprep.subr.bf16.mxu0 0
    %1464 = vmatpush2.bf16.msra.mxu0 0
    %1465 = vmatprep.subr.bf16.mxu0 0
    %1466 = vmatpush2.bf16.msra.mxu0 0
    %1467 = vmatprep.mubr.bf16.mxu0 0
    %1468 = vmatmul.mubr.bf16.gmra.mxu0 %v1433
    %v1469 = vpop.f32.mrf.mxu0
    %v1470 = vadd.f32 0.0, %v1469
    %v1471 = vpop.f32.mrf.mxu0
    %v1472 = vadd.f32 0.0, %v1471
    %v1473 = vpop.f32.mrf.mxu0
    %v1474 = vpop.f32.mrf.mxu0
    %1475 = vdwg.mxu0
    %1476 = vmatprep.subr.bf16.mxu0 0
    %1477 = vmatpush1.bf16.msra.mxu0 0
    %1478 = vmatprep.subr.bf16.mxu0 0
    %1479 = vmatpush1.bf16.msra.mxu0 0
    %1480 = vmatprep.subr.bf16.mxu0 0
    %1481 = vmatpush1.bf16.msra.mxu0 0
    %1482 = vmatprep.subr.bf16.mxu0 0
    %1483 = vmatpush1.bf16.msra.mxu0 0
    %1484 = vmatprep.subr.bf16.mxu0 %v1091
    %1485 = vmatpush1.bf16.msra.mxu0 %v1090
    %1486 = vmatprep.subr.bf16.mxu0 %v1087
    %1487 = vmatpush1.bf16.msra.mxu0 %v1086
    %1488 = vmatprep.subr.bf16.mxu0 %v1083
    %1489 = vmatpush1.bf16.msra.mxu0 %v1082
    %1490 = vmatprep.subr.bf16.mxu0 %v1079
    %1491 = vmatpush1.bf16.msra.mxu0 %v1078
    %1492 = vmatprep.subr.bf16.mxu0 0
    %1493 = vmatpush2.bf16.msra.mxu0 0
    %1494 = vmatprep.subr.bf16.mxu0 0
    %1495 = vmatpush2.bf16.msra.mxu0 0
    %1496 = vmatprep.subr.bf16.mxu0 0
    %1497 = vmatpush2.bf16.msra.mxu0 0
    %1498 = vmatprep.subr.bf16.mxu0 0
    %1499 = vmatpush2.bf16.msra.mxu0 0
    %1500 = vmatprep.subr.bf16.mxu0 0
    %1501 = vmatpush2.bf16.msra.mxu0 0
    %1502 = vmatprep.subr.bf16.mxu0 0
    %1503 = vmatpush2.bf16.msra.mxu0 0
    %1504 = vmatprep.subr.bf16.mxu0 0
    %1505 = vmatpush2.bf16.msra.mxu0 0
    %1506 = vmatprep.subr.bf16.mxu0 0
    %1507 = vmatpush2.bf16.msra.mxu0 0
    %1508 = vmatprep.mubr.bf16.mxu0 0
    %1509 = vmatmul.mubr.bf16.gmra.mxu0 %v1433
    %v1510 = vpop.f32.mrf.mxu0
    %v1511 = vadd.f32 0.0, %v1510
    %v1512 = vpop.f32.mrf.mxu0
    %v1513 = vadd.f32 0.0, %v1512
    %v1514 = vpop.f32.mrf.mxu0
    %v1515 = vpop.f32.mrf.mxu0
    %1516 = vdwg.mxu0
    %v1517 = vadd.f32 %v1198, %v1511
    %v1518 = vadd.f32 %v1202, %v1513
    %v1519 = vadd.f32 %v1517, %v1354
    %v1520 = vadd.f32 %v1518, %v1356
    %v1521 = vxor.u32 %v1519, 2147483648
    %v1522 = vxor.u32 %v1520, 2147483648
    %v1523 = vmul.f32 %v1521, 1.442695
    %v1524 = vpow.pop %v1523
    %v1525 = vmul.f32 %v1522, 1.442695
    %v1526 = vpow.pop %v1525
    %v1527 = vadd.f32 %v1524, 1.0
    %v1528 = vadd.f32 %v1526, 1.0
    %v1529 = vrcp.pop %v1527
    %v1530 = vmul.f32 1.0, %v1529
    %v1531 = vrcp.pop %v1528
    %v1532 = vmul.f32 1.0, %v1531
    %v1533 = vmul.f32 %v1532, 2.0
    %v1534 = vsub.f32 %v1533, 1.0
    %v1535 = vmul.f32 %v1530, %v1229
    %v1536 = vmul.f32 %v1530, %v1534
    %1538 = vrot.lane.b32.xlu0 %v1536, 64
    %v1539 = vpop.permute.xlu0 %1538
    %v1541 = vadd.f32 %v1535, %v1539
    %v1542 = vtanh.pop %v1541
    %v1543 = vmul.f32 %v1532, %v1542
    %v1544 = vpack.c.bf16 %v1543, %v1543
    %s1545 = scalar_lea.vmem [#allocation4], 96
    %v1546 = vld [vmem:[%s1545] sm:$0xff]
    %v1547 = vld [vmem:[%s1545 + $0x8] sm:$0xf]
    %v1548 = vld [vmem:[%s1545 + $0xc] sm:$0xff]
    %v1549 = vld [vmem:[%s1545 + $0x14] sm:$0xf]
    %v1550 = vld [vmem:[%s1545 + $0x18] sm:$0xff]
    %v1551 = vld [vmem:[%s1545 + $0x20] sm:$0xf]
    %v1552 = vld [vmem:[%s1545 + $0x24] sm:$0xff]
    %v1553 = vld [vmem:[%s1545 + $0x2c] sm:$0xf]
    %v1554 = vld [vmem:[%s1545 + $0x30] sm:$0xff]
    %v1555 = vld [vmem:[%s1545 + $0x38] sm:$0xf]
    %v1556 = vld [vmem:[%s1545 + $0x3c] sm:$0xff]
    %v1557 = vld [vmem:[%s1545 + $0x44] sm:$0xf]
    %v1558 = vld [vmem:[%s1545 + $0x48] sm:$0xff]
    %v1559 = vld [vmem:[%s1545 + $0x50] sm:$0xf]
    %v1560 = vld [vmem:[%s1545 + $0x54] sm:$0xff]
    %v1561 = vld [vmem:[%s1545 + $0x5c] sm:$0xf]
    %1563 = vrot.lane.b32.xlu0 %v1544, 64
    %v1564 = vpop.permute.xlu0 %1563
    %v1581 = vunpack.c.l.b16 %v1546
    %v1582 = vunpack.c.h.b16 %v1546
    %v1583 = vunpack.c.l.b16 %v1547
    %v1584 = vunpack.c.l.b16 %v1548
    %v1585 = vunpack.c.h.b16 %v1548
    %v1586 = vunpack.c.l.b16 %v1549
    %v1587 = vunpack.c.l.b16 %v1550
    %v1588 = vunpack.c.h.b16 %v1550
    %v1589 = vunpack.c.l.b16 %v1551
    %v1590 = vunpack.c.l.b16 %v1552
    %v1591 = vunpack.c.h.b16 %v1552
    %v1592 = vunpack.c.l.b16 %v1553
    %v1593 = vunpack.c.l.b16 %v1554
    %v1594 = vunpack.c.h.b16 %v1554
    %v1595 = vunpack.c.l.b16 %v1555
    %v1596 = vunpack.c.l.b16 %v1556
    %v1597 = vunpack.c.h.b16 %v1556
    %v1598 = vunpack.c.l.b16 %v1557
    %v1599 = vunpack.c.l.b16 %v1558
    %v1600 = vunpack.c.h.b16 %v1558
    %v1601 = vunpack.c.l.b16 %v1559
    %v1602 = vunpack.c.l.b16 %v1560
    %v1603 = vunpack.c.h.b16 %v1560
    %v1604 = vunpack.c.l.b16 %v1561
    %v1605 = vpack.c.b16 %v1584, %v1581
    %v1606 = vpack.c.b16 %v1585, %v1582
    %v1607 = vpack.c.b16 %v1586, %v1583
    %v1608 = vpack.c.b16 %v1590, %v1587
    %v1609 = vpack.c.b16 %v1591, %v1588
    %v1610 = vpack.c.b16 %v1592, %v1589
    %v1611 = vpack.c.b16 %v1596, %v1593
    %v1612 = vpack.c.b16 %v1597, %v1594
    %v1613 = vpack.c.b16 %v1598, %v1595
    %v1614 = vpack.c.b16 %v1602, %v1599
    %v1615 = vpack.c.b16 %v1603, %v1600
    %v1616 = vpack.c.b16 %v1604, %v1601
    %v1630 = vsel %vm296, %v1564, 0
    %1632 = vmatprep.subr.bf16.mxu0 0
    %1633 = vmatpush1.bf16.msra.mxu0 0
    %1634 = vmatprep.subr.bf16.mxu0 0
    %1635 = vmatpush1.bf16.msra.mxu0 0
    %1636 = vmatprep.subr.bf16.mxu0 0
    %1637 = vmatpush1.bf16.msra.mxu0 0
    %1638 = vmatprep.subr.bf16.mxu0 0
    %1639 = vmatpush1.bf16.msra.mxu0 0
    %1640 = vmatprep.subr.bf16.mxu0 %v1615
    %1641 = vmatpush1.bf16.msra.mxu0 %v1614
    %1642 = vmatprep.subr.bf16.mxu0 %v1612
    %1643 = vmatpush1.bf16.msra.mxu0 %v1611
    %1644 = vmatprep.subr.bf16.mxu0 %v1609
    %1645 = vmatpush1.bf16.msra.mxu0 %v1608
    %1646 = vmatprep.subr.bf16.mxu0 %v1606
    %1647 = vmatpush1.bf16.msra.mxu0 %v1605
    %1648 = vmatprep.subr.bf16.mxu0 0
    %1649 = vmatpush2.bf16.msra.mxu0 0
    %1650 = vmatprep.subr.bf16.mxu0 0
    %1651 = vmatpush2.bf16.msra.mxu0 0
    %1652 = vmatprep.subr.bf16.mxu0 0
    %1653 = vmatpush2.bf16.msra.mxu0 0
    %1654 = vmatprep.subr.bf16.mxu0 0
    %1655 = vmatpush2.bf16.msra.mxu0 0
    %1656 = vmatprep.subr.bf16.mxu0 0
    %1657 = vmatpush2.bf16.msra.mxu0 0
    %1658 = vmatprep.subr.bf16.mxu0 0
    %1659 = vmatpush2.bf16.msra.mxu0 0
    %1660 = vmatprep.subr.bf16.mxu0 0
    %1661 = vmatpush2.bf16.msra.mxu0 0
    %1662 = vmatprep.subr.bf16.mxu0 0
    %1663 = vmatpush2.bf16.msra.mxu0 0
    %1664 = vmatprep.mubr.bf16.mxu0 0
    %1665 = vmatmul.mubr.bf16.gmra.mxu0 %v1630
    %v1666 = vpop.f32.mrf.mxu0
    %v1667 = vadd.f32 0.0, %v1666
    %v1668 = vpop.f32.mrf.mxu0
    %v1669 = vadd.f32 0.0, %v1668
    %v1670 = vpop.f32.mrf.mxu0
    %v1671 = vpop.f32.mrf.mxu0
    %1672 = vdwg.mxu0
    %1673 = vmatprep.subr.bf16.mxu0 0
    %1674 = vmatpush1.bf16.msra.mxu0 0
    %1675 = vmatprep.subr.bf16.mxu0 0
    %1676 = vmatpush1.bf16.msra.mxu0 0
    %1677 = vmatprep.subr.bf16.mxu0 0
    %1678 = vmatpush1.bf16.msra.mxu0 0
    %1679 = vmatprep.subr.bf16.mxu0 0
    %1680 = vmatpush1.bf16.msra.mxu0 0
    %1681 = vmatprep.subr.bf16.mxu0 0
    %1682 = vmatpush1.bf16.msra.mxu0 %v1616
    %1683 = vmatprep.subr.bf16.mxu0 0
    %1684 = vmatpush1.bf16.msra.mxu0 %v1613
    %1685 = vmatprep.subr.bf16.mxu0 0
    %1686 = vmatpush1.bf16.msra.mxu0 %v1610
    %1687 = vmatprep.subr.bf16.mxu0 0
    %1688 = vmatpush1.bf16.msra.mxu0 %v1607
    %1689 = vmatprep.subr.bf16.mxu0 0
    %1690 = vmatpush2.bf16.msra.mxu0 0
    %1691 = vmatprep.subr.bf16.mxu0 0
    %1692 = vmatpush2.bf16.msra.mxu0 0
    %1693 = vmatprep.subr.bf16.mxu0 0
    %1694 = vmatpush2.bf16.msra.mxu0 0
    %1695 = vmatprep.subr.bf16.mxu0 0
    %1696 = vmatpush2.bf16.msra.mxu0 0
    %1697 = vmatprep.subr.bf16.mxu0 0
    %1698 = vmatpush2.bf16.msra.mxu0 0
    %1699 = vmatprep.subr.bf16.mxu0 0
    %1700 = vmatpush2.bf16.msra.mxu0 0
    %1701 = vmatprep.subr.bf16.mxu0 0
    %1702 = vmatpush2.bf16.msra.mxu0 0
    %1703 = vmatprep.subr.bf16.mxu0 0
    %1704 = vmatpush2.bf16.msra.mxu0 0
    %1705 = vmatprep.mubr.bf16.mxu0 0
    %1706 = vmatmul.mubr.bf16.gmra.mxu0 %v1630
    %v1707 = vpop.f32.mrf.mxu0
    %v1708 = vadd.f32 0.0, %v1707
    %v1709 = vpop.f32.mrf.mxu0
    %v1710 = vpop.f32.mrf.mxu0
    %v1711 = vpop.f32.mrf.mxu0
    %1712 = vdwg.mxu0
    %v1713 = vadd.f32 %v1400, %v1708
    %v1714 = vld [vmem:[#allocation2 + $0x20] sm:$0xff]
    %v1715 = vld [vmem:[#allocation2 + $0x28] sm:$0xff]
    %v1716 = vadd.f32 %v1714, %v1470
    %v1717 = vadd.f32 %v1715, %v1472
    %v1718 = vxor.u32 %v1716, 2147483648
    %v1719 = vxor.u32 %v1717, 2147483648
    %v1720 = vmul.f32 %v1718, 1.442695
    %v1721 = vpow.pop %v1720
    %v1722 = vmul.f32 %v1719, 1.442695
    %v1723 = vpow.pop %v1722
    %v1724 = vadd.f32 %v1721, 1.0
    %v1725 = vadd.f32 %v1723, 1.0
    %v1726 = vrcp.pop %v1724
    %v1727 = vmul.f32 1.0, %v1726
    %v1728 = vrcp.pop %v1725
    %v1729 = vmul.f32 1.0, %v1728
    %v1730 = vmul.f32 %v1729, 2.0
    %v1731 = vsub.f32 %v1730, 1.0
    %v1732 = vmul.f32 %v1727, %v1425
    %v1733 = vmul.f32 %v1727, %v1731
    %1735 = vrot.lane.b32.xlu0 %v1733, 64
    %v1736 = vpop.permute.xlu0 %1735
    %v1738 = vadd.f32 %v1732, %v1736
    %v1739 = vtanh.pop %v1738
    %v1740 = vmul.f32 %v1729, %v1739
    %v1741 = vpack.c.bf16 %v1740, %v1740
    %1743 = vrot.lane.b32.xlu0 %v1741, 64
    %v1744 = vpop.permute.xlu0 %1743
    %v1746 = vsel %vm296, %v1744, 0
    %1748 = vmatprep.subr.bf16.mxu0 0
    %1749 = vmatpush1.bf16.msra.mxu0 0
    %1750 = vmatprep.subr.bf16.mxu0 0
    %1751 = vmatpush1.bf16.msra.mxu0 0
    %1752 = vmatprep.subr.bf16.mxu0 0
    %1753 = vmatpush1.bf16.msra.mxu0 0
    %1754 = vmatprep.subr.bf16.mxu0 0
    %1755 = vmatpush1.bf16.msra.mxu0 0
    %1756 = vmatprep.subr.bf16.mxu0 %v1089
    %1757 = vmatpush1.bf16.msra.mxu0 %v1088
    %1758 = vmatprep.subr.bf16.mxu0 %v1085
    %1759 = vmatpush1.bf16.msra.mxu0 %v1084
    %1760 = vmatprep.subr.bf16.mxu0 %v1081
    %1761 = vmatpush1.bf16.msra.mxu0 %v1080
    %1762 = vmatprep.subr.bf16.mxu0 %v1077
    %1763 = vmatpush1.bf16.msra.mxu0 %v1076
    %1764 = vmatprep.subr.bf16.mxu0 0
    %1765 = vmatpush2.bf16.msra.mxu0 0
    %1766 = vmatprep.subr.bf16.mxu0 0
    %1767 = vmatpush2.bf16.msra.mxu0 0
    %1768 = vmatprep.subr.bf16.mxu0 0
    %1769 = vmatpush2.bf16.msra.mxu0 0
    %1770 = vmatprep.subr.bf16.mxu0 0
    %1771 = vmatpush2.bf16.msra.mxu0 0
    %1772 = vmatprep.subr.bf16.mxu0 0
    %1773 = vmatpush2.bf16.msra.mxu0 0
    %1774 = vmatprep.subr.bf16.mxu0 0
    %1775 = vmatpush2.bf16.msra.mxu0 0
    %1776 = vmatprep.subr.bf16.mxu0 0
    %1777 = vmatpush2.bf16.msra.mxu0 0
    %1778 = vmatprep.subr.bf16.mxu0 0
    %1779 = vmatpush2.bf16.msra.mxu0 0
    %1780 = vmatprep.mubr.bf16.mxu0 0
    %1781 = vmatmul.mubr.bf16.gmra.mxu0 %v1746
    %v1782 = vpop.f32.mrf.mxu0
    %v1783 = vadd.f32 0.0, %v1782
    %v1784 = vpop.f32.mrf.mxu0
    %v1785 = vadd.f32 0.0, %v1784
    %v1786 = vpop.f32.mrf.mxu0
    %v1787 = vpop.f32.mrf.mxu0
    %1788 = vdwg.mxu0
    %1789 = vmatprep.subr.bf16.mxu0 0
    %1790 = vmatpush1.bf16.msra.mxu0 0
    %1791 = vmatprep.subr.bf16.mxu0 0
    %1792 = vmatpush1.bf16.msra.mxu0 0
    %1793 = vmatprep.subr.bf16.mxu0 0
    %1794 = vmatpush1.bf16.msra.mxu0 0
    %1795 = vmatprep.subr.bf16.mxu0 0
    %1796 = vmatpush1.bf16.msra.mxu0 0
    %1797 = vmatprep.subr.bf16.mxu0 %v1091
    %1798 = vmatpush1.bf16.msra.mxu0 %v1090
    %1799 = vmatprep.subr.bf16.mxu0 %v1087
    %1800 = vmatpush1.bf16.msra.mxu0 %v1086
    %1801 = vmatprep.subr.bf16.mxu0 %v1083
    %1802 = vmatpush1.bf16.msra.mxu0 %v1082
    %1803 = vmatprep.subr.bf16.mxu0 %v1079
    %1804 = vmatpush1.bf16.msra.mxu0 %v1078
    %1805 = vmatprep.subr.bf16.mxu0 0
    %1806 = vmatpush2.bf16.msra.mxu0 0
    %1807 = vmatprep.subr.bf16.mxu0 0
    %1808 = vmatpush2.bf16.msra.mxu0 0
    %1809 = vmatprep.subr.bf16.mxu0 0
    %1810 = vmatpush2.bf16.msra.mxu0 0
    %1811 = vmatprep.subr.bf16.mxu0 0
    %1812 = vmatpush2.bf16.msra.mxu0 0
    %1813 = vmatprep.subr.bf16.mxu0 0
    %1814 = vmatpush2.bf16.msra.mxu0 0
    %1815 = vmatprep.subr.bf16.mxu0 0
    %1816 = vmatpush2.bf16.msra.mxu0 0
    %1817 = vmatprep.subr.bf16.mxu0 0
    %1818 = vmatpush2.bf16.msra.mxu0 0
    %1819 = vmatprep.subr.bf16.mxu0 0
    %1820 = vmatpush2.bf16.msra.mxu0 0
    %1821 = vmatprep.mubr.bf16.mxu0 0
    %1822 = vmatmul.mubr.bf16.gmra.mxu0 %v1746
    %v1823 = vpop.f32.mrf.mxu0
    %v1824 = vadd.f32 0.0, %v1823
    %v1825 = vpop.f32.mrf.mxu0
    %v1826 = vadd.f32 0.0, %v1825
    %v1827 = vpop.f32.mrf.mxu0
    %v1828 = vpop.f32.mrf.mxu0
    %1829 = vdwg.mxu0
    %v1830 = vadd.f32 %v1198, %v1824
    %v1831 = vadd.f32 %v1202, %v1826
    %v1832 = vadd.f32 %v1830, %v1667
    %v1833 = vadd.f32 %v1831, %v1669
    %v1834 = vxor.u32 %v1832, 2147483648
    %v1835 = vxor.u32 %v1833, 2147483648
    %v1836 = vmul.f32 %v1834, 1.442695
    %v1837 = vpow.pop %v1836
    %v1838 = vmul.f32 %v1835, 1.442695
    %v1839 = vpow.pop %v1838
    %v1840 = vadd.f32 %v1837, 1.0
    %v1841 = vadd.f32 %v1839, 1.0
    %v1842 = vrcp.pop %v1840
    %v1843 = vmul.f32 1.0, %v1842
    %v1844 = vrcp.pop %v1841
    %v1845 = vmul.f32 1.0, %v1844
    %v1846 = vmul.f32 %v1845, 2.0
    %v1847 = vsub.f32 %v1846, 1.0
    %v1848 = vmul.f32 %v1843, %v1541
    %v1849 = vmul.f32 %v1843, %v1847
    %1851 = vrot.lane.b32.xlu0 %v1849, 64
    %v1852 = vpop.permute.xlu0 %1851
    %v1854 = vadd.f32 %v1848, %v1852
    %v1855 = vtanh.pop %v1854
    %v1856 = vmul.f32 %v1845, %v1855
    %v1857 = vpack.c.bf16 %v1856, %v1856
    %s1858 = scalar_lea.vmem [#allocation4], 192
    %v1859 = vld [vmem:[%s1858] sm:$0xff]
    %v1860 = vld [vmem:[%s1858 + $0x8] sm:$0xf]
    %v1861 = vld [vmem:[%s1858 + $0xc] sm:$0xff]
    %v1862 = vld [vmem:[%s1858 + $0x14] sm:$0xf]
    %v1863 = vld [vmem:[%s1858 + $0x18] sm:$0xff]
    %v1864 = vld [vmem:[%s1858 + $0x20] sm:$0xf]
    %v1865 = vld [vmem:[%s1858 + $0x24] sm:$0xff]
    %v1866 = vld [vmem:[%s1858 + $0x2c] sm:$0xf]
    %v1867 = vld [vmem:[%s1858 + $0x30] sm:$0xff]
    %v1868 = vld [vmem:[%s1858 + $0x38] sm:$0xf]
    %v1869 = vld [vmem:[%s1858 + $0x3c] sm:$0xff]
    %v1870 = vld [vmem:[%s1858 + $0x44] sm:$0xf]
    %v1871 = vld [vmem:[%s1858 + $0x48] sm:$0xff]
    %v1872 = vld [vmem:[%s1858 + $0x50] sm:$0xf]
    %v1873 = vld [vmem:[%s1858 + $0x54] sm:$0xff]
    %v1874 = vld [vmem:[%s1858 + $0x5c] sm:$0xf]
    %1876 = vrot.lane.b32.xlu0 %v1857, 64
    %v1877 = vpop.permute.xlu0 %1876
    %v1894 = vunpack.c.l.b16 %v1859
    %v1895 = vunpack.c.h.b16 %v1859
    %v1896 = vunpack.c.l.b16 %v1860
    %v1897 = vunpack.c.l.b16 %v1861
    %v1898 = vunpack.c.h.b16 %v1861
    %v1899 = vunpack.c.l.b16 %v1862
    %v1900 = vunpack.c.l.b16 %v1863
    %v1901 = vunpack.c.h.b16 %v1863
    %v1902 = vunpack.c.l.b16 %v1864
    %v1903 = vunpack.c.l.b16 %v1865
    %v1904 = vunpack.c.h.b16 %v1865
    %v1905 = vunpack.c.l.b16 %v1866
    %v1906 = vunpack.c.l.b16 %v1867
    %v1907 = vunpack.c.h.b16 %v1867
    %v1908 = vunpack.c.l.b16 %v1868
    %v1909 = vunpack.c.l.b16 %v1869
    %v1910 = vunpack.c.h.b16 %v1869
    %v1911 = vunpack.c.l.b16 %v1870
    %v1912 = vunpack.c.l.b16 %v1871
    %v1913 = vunpack.c.h.b16 %v1871
    %v1914 = vunpack.c.l.b16 %v1872
    %v1915 = vunpack.c.l.b16 %v1873
    %v1916 = vunpack.c.h.b16 %v1873
    %v1917 = vunpack.c.l.b16 %v1874
    %v1918 = vpack.c.b16 %v1897, %v1894
    %v1919 = vpack.c.b16 %v1898, %v1895
    %v1920 = vpack.c.b16 %v1899, %v1896
    %v1921 = vpack.c.b16 %v1903, %v1900
    %v1922 = vpack.c.b16 %v1904, %v1901
    %v1923 = vpack.c.b16 %v1905, %v1902
    %v1924 = vpack.c.b16 %v1909, %v1906
    %v1925 = vpack.c.b16 %v1910, %v1907
    %v1926 = vpack.c.b16 %v1911, %v1908
    %v1927 = vpack.c.b16 %v1915, %v1912
    %v1928 = vpack.c.b16 %v1916, %v1913
    %v1929 = vpack.c.b16 %v1917, %v1914
    %v1943 = vsel %vm296, %v1877, 0
    %1945 = vmatprep.subr.bf16.mxu0 0
    %1946 = vmatpush1.bf16.msra.mxu0 0
    %1947 = vmatprep.subr.bf16.mxu0 0
    %1948 = vmatpush1.bf16.msra.mxu0 0
    %1949 = vmatprep.subr.bf16.mxu0 0
    %1950 = vmatpush1.bf16.msra.mxu0 0
    %1951 = vmatprep.subr.bf16.mxu0 0
    %1952 = vmatpush1.bf16.msra.mxu0 0
    %1953 = vmatprep.subr.bf16.mxu0 %v1928
    %1954 = vmatpush1.bf16.msra.mxu0 %v1927
    %1955 = vmatprep.subr.bf16.mxu0 %v1925
    %1956 = vmatpush1.bf16.msra.mxu0 %v1924
    %1957 = vmatprep.subr.bf16.mxu0 %v1922
    %1958 = vmatpush1.bf16.msra.mxu0 %v1921
    %1959 = vmatprep.subr.bf16.mxu0 %v1919
    %1960 = vmatpush1.bf16.msra.mxu0 %v1918
    %1961 = vmatprep.subr.bf16.mxu0 0
    %1962 = vmatpush2.bf16.msra.mxu0 0
    %1963 = vmatprep.subr.bf16.mxu0 0
    %1964 = vmatpush2.bf16.msra.mxu0 0
    %1965 = vmatprep.subr.bf16.mxu0 0
    %1966 = vmatpush2.bf16.msra.mxu0 0
    %1967 = vmatprep.subr.bf16.mxu0 0
    %1968 = vmatpush2.bf16.msra.mxu0 0
    %1969 = vmatprep.subr.bf16.mxu0 0
    %1970 = vmatpush2.bf16.msra.mxu0 0
    %1971 = vmatprep.subr.bf16.mxu0 0
    %1972 = vmatpush2.bf16.msra.mxu0 0
    %1973 = vmatprep.subr.bf16.mxu0 0
    %1974 = vmatpush2.bf16.msra.mxu0 0
    %1975 = vmatprep.subr.bf16.mxu0 0
    %1976 = vmatpush2.bf16.msra.mxu0 0
    %1977 = vmatprep.mubr.bf16.mxu0 0
    %1978 = vmatmul.mubr.bf16.gmra.mxu0 %v1943
    %v1979 = vpop.f32.mrf.mxu0
    %v1980 = vadd.f32 0.0, %v1979
    %v1981 = vpop.f32.mrf.mxu0
    %v1982 = vadd.f32 0.0, %v1981
    %v1983 = vpop.f32.mrf.mxu0
    %v1984 = vpop.f32.mrf.mxu0
    %1985 = vdwg.mxu0
    %1986 = vmatprep.subr.bf16.mxu0 0
    %1987 = vmatpush1.bf16.msra.mxu0 0
    %1988 = vmatprep.subr.bf16.mxu0 0
    %1989 = vmatpush1.bf16.msra.mxu0 0
    %1990 = vmatprep.subr.bf16.mxu0 0
    %1991 = vmatpush1.bf16.msra.mxu0 0
    %1992 = vmatprep.subr.bf16.mxu0 0
    %1993 = vmatpush1.bf16.msra.mxu0 0
    %1994 = vmatprep.subr.bf16.mxu0 0
    %1995 = vmatpush1.bf16.msra.mxu0 %v1929
    %1996 = vmatprep.subr.bf16.mxu0 0
    %1997 = vmatpush1.bf16.msra.mxu0 %v1926
    %1998 = vmatprep.subr.bf16.mxu0 0
    %1999 = vmatpush1.bf16.msra.mxu0 %v1923
    %2000 = vmatprep.subr.bf16.mxu0 0
    %2001 = vmatpush1.bf16.msra.mxu0 %v1920
    %2002 = vmatprep.subr.bf16.mxu0 0
    %2003 = vmatpush2.bf16.msra.mxu0 0
    %2004 = vmatprep.subr.bf16.mxu0 0
    %2005 = vmatpush2.bf16.msra.mxu0 0
    %2006 = vmatprep.subr.bf16.mxu0 0
    %2007 = vmatpush2.bf16.msra.mxu0 0
    %2008 = vmatprep.subr.bf16.mxu0 0
    %2009 = vmatpush2.bf16.msra.mxu0 0
    %2010 = vmatprep.subr.bf16.mxu0 0
    %2011 = vmatpush2.bf16.msra.mxu0 0
    %2012 = vmatprep.subr.bf16.mxu0 0
    %2013 = vmatpush2.bf16.msra.mxu0 0
    %2014 = vmatprep.subr.bf16.mxu0 0
    %2015 = vmatpush2.bf16.msra.mxu0 0
    %2016 = vmatprep.subr.bf16.mxu0 0
    %2017 = vmatpush2.bf16.msra.mxu0 0
    %2018 = vmatprep.mubr.bf16.mxu0 0
    %2019 = vmatmul.mubr.bf16.gmra.mxu0 %v1943
    %v2020 = vpop.f32.mrf.mxu0
    %v2021 = vadd.f32 0.0, %v2020
    %v2022 = vpop.f32.mrf.mxu0
    %v2023 = vpop.f32.mrf.mxu0
    %v2024 = vpop.f32.mrf.mxu0
    %2025 = vdwg.mxu0
    %v2026 = vadd.f32 %v1713, %v2021
    %v2027 = vld [vmem:[#allocation2 + $0x30] sm:$0xff]
    %v2028 = vld [vmem:[#allocation2 + $0x38] sm:$0xff]
    %v2029 = vadd.f32 %v2027, %v1783
    %v2030 = vadd.f32 %v2028, %v1785
    %v2031 = vxor.u32 %v2029, 2147483648
    %v2032 = vxor.u32 %v2030, 2147483648
    %v2033 = vmul.f32 %v2031, 1.442695
    %v2034 = vpow.pop %v2033
    %v2035 = vmul.f32 %v2032, 1.442695
    %v2036 = vpow.pop %v2035
    %v2037 = vadd.f32 %v2034, 1.0
    %v2038 = vadd.f32 %v2036, 1.0
    %v2039 = vrcp.pop %v2037
    %v2040 = vmul.f32 1.0, %v2039
    %v2041 = vrcp.pop %v2038
    %v2042 = vmul.f32 1.0, %v2041
    %v2043 = vmul.f32 %v2042, 2.0
    %v2044 = vsub.f32 %v2043, 1.0
    %v2045 = vmul.f32 %v2040, %v1738
    %v2046 = vmul.f32 %v2040, %v2044
    %2048 = vrot.lane.b32.xlu0 %v2046, 64
    %v2049 = vpop.permute.xlu0 %2048
    %v2051 = vadd.f32 %v2045, %v2049
    %v2052 = vtanh.pop %v2051
    %v2053 = vmul.f32 %v2042, %v2052
    %v2054 = vpack.c.bf16 %v2053, %v2053
    %2056 = vrot.lane.b32.xlu0 %v2054, 64
    %v2057 = vpop.permute.xlu0 %2056
    %v2059 = vsel %vm296, %v2057, 0
    %2061 = vmatprep.subr.bf16.mxu0 0
    %2062 = vmatpush1.bf16.msra.mxu0 0
    %2063 = vmatprep.subr.bf16.mxu0 0
    %2064 = vmatpush1.bf16.msra.mxu0 0
    %2065 = vmatprep.subr.bf16.mxu0 0
    %2066 = vmatpush1.bf16.msra.mxu0 0
    %2067 = vmatprep.subr.bf16.mxu0 0
    %2068 = vmatpush1.bf16.msra.mxu0 0
    %2069 = vmatprep.subr.bf16.mxu0 %v1089
    %2070 = vmatpush1.bf16.msra.mxu0 %v1088
    %2071 = vmatprep.subr.bf16.mxu0 %v1085
    %2072 = vmatpush1.bf16.msra.mxu0 %v1084
    %2073 = vmatprep.subr.bf16.mxu0 %v1081
    %2074 = vmatpush1.bf16.msra.mxu0 %v1080
    %2075 = vmatprep.subr.bf16.mxu0 %v1077
    %2076 = vmatpush1.bf16.msra.mxu0 %v1076
    %2077 = vmatprep.subr.bf16.mxu0 0
    %2078 = vmatpush2.bf16.msra.mxu0 0
    %2079 = vmatprep.subr.bf16.mxu0 0
    %2080 = vmatpush2.bf16.msra.mxu0 0
    %2081 = vmatprep.subr.bf16.mxu0 0
    %2082 = vmatpush2.bf16.msra.mxu0 0
    %2083 = vmatprep.subr.bf16.mxu0 0
    %2084 = vmatpush2.bf16.msra.mxu0 0
    %2085 = vmatprep.subr.bf16.mxu0 0
    %2086 = vmatpush2.bf16.msra.mxu0 0
    %2087 = vmatprep.subr.bf16.mxu0 0
    %2088 = vmatpush2.bf16.msra.mxu0 0
    %2089 = vmatprep.subr.bf16.mxu0 0
    %2090 = vmatpush2.bf16.msra.mxu0 0
    %2091 = vmatprep.subr.bf16.mxu0 0
    %2092 = vmatpush2.bf16.msra.mxu0 0
    %2093 = vmatprep.mubr.bf16.mxu0 0
    %2094 = vmatmul.mubr.bf16.gmra.mxu0 %v2059
    %v2095 = vpop.f32.mrf.mxu0
    %v2096 = vadd.f32 0.0, %v2095
    %v2097 = vpop.f32.mrf.mxu0
    %v2098 = vadd.f32 0.0, %v2097
    %v2099 = vpop.f32.mrf.mxu0
    %v2100 = vpop.f32.mrf.mxu0
    %2101 = vdwg.mxu0
    %2102 = vmatprep.subr.bf16.mxu0 0
    %2103 = vmatpush1.bf16.msra.mxu0 0
    %2104 = vmatprep.subr.bf16.mxu0 0
    %2105 = vmatpush1.bf16.msra.mxu0 0
    %2106 = vmatprep.subr.bf16.mxu0 0
    %2107 = vmatpush1.bf16.msra.mxu0 0
    %2108 = vmatprep.subr.bf16.mxu0 0
    %2109 = vmatpush1.bf16.msra.mxu0 0
    %2110 = vmatprep.subr.bf16.mxu0 %v1091
    %2111 = vmatpush1.bf16.msra.mxu0 %v1090
    %2112 = vmatprep.subr.bf16.mxu0 %v1087
    %2113 = vmatpush1.bf16.msra.mxu0 %v1086
    %2114 = vmatprep.subr.bf16.mxu0 %v1083
    %2115 = vmatpush1.bf16.msra.mxu0 %v1082
    %2116 = vmatprep.subr.bf16.mxu0 %v1079
    %2117 = vmatpush1.bf16.msra.mxu0 %v1078
    %2118 = vmatprep.subr.bf16.mxu0 0
    %2119 = vmatpush2.bf16.msra.mxu0 0
    %2120 = vmatprep.subr.bf16.mxu0 0
    %2121 = vmatpush2.bf16.msra.mxu0 0
    %2122 = vmatprep.subr.bf16.mxu0 0
    %2123 = vmatpush2.bf16.msra.mxu0 0
    %2124 = vmatprep.subr.bf16.mxu0 0
    %2125 = vmatpush2.bf16.msra.mxu0 0
    %2126 = vmatprep.subr.bf16.mxu0 0
    %2127 = vmatpush2.bf16.msra.mxu0 0
    %2128 = vmatprep.subr.bf16.mxu0 0
    %2129 = vmatpush2.bf16.msra.mxu0 0
    %2130 = vmatprep.subr.bf16.mxu0 0
    %2131 = vmatpush2.bf16.msra.mxu0 0
    %2132 = vmatprep.subr.bf16.mxu0 0
    %2133 = vmatpush2.bf16.msra.mxu0 0
    %2134 = vmatprep.mubr.bf16.mxu0 0
    %2135 = vmatmul.mubr.bf16.gmra.mxu0 %v2059
    %v2136 = vpop.f32.mrf.mxu0
    %v2137 = vadd.f32 0.0, %v2136
    %v2138 = vpop.f32.mrf.mxu0
    %v2139 = vadd.f32 0.0, %v2138
    %v2140 = vpop.f32.mrf.mxu0
    %v2141 = vpop.f32.mrf.mxu0
    %2142 = vdwg.mxu0
    %v2143 = vadd.f32 %v1198, %v2137
    %v2144 = vadd.f32 %v1202, %v2139
    %v2145 = vadd.f32 %v2143, %v1980
    %v2146 = vadd.f32 %v2144, %v1982
    %v2147 = vxor.u32 %v2145, 2147483648
    %v2148 = vxor.u32 %v2146, 2147483648
    %v2149 = vmul.f32 %v2147, 1.442695
    %v2150 = vpow.pop %v2149
    %v2151 = vmul.f32 %v2148, 1.442695
    %v2152 = vpow.pop %v2151
    %v2153 = vadd.f32 %v2150, 1.0
    %v2154 = vadd.f32 %v2152, 1.0
    %v2155 = vrcp.pop %v2153
    %v2156 = vmul.f32 1.0, %v2155
    %v2157 = vrcp.pop %v2154
    %v2158 = vmul.f32 1.0, %v2157
    %v2159 = vmul.f32 %v2158, 2.0
    %v2160 = vsub.f32 %v2159, 1.0
    %v2161 = vmul.f32 %v2156, %v1854
    %v2162 = vmul.f32 %v2156, %v2160
    %2164 = vrot.lane.b32.xlu0 %v2162, 64
    %v2165 = vpop.permute.xlu0 %2164
    %v2167 = vadd.f32 %v2161, %v2165
    %v2168 = vtanh.pop %v2167
    %v2169 = vmul.f32 %v2158, %v2168
    %v2170 = vpack.c.bf16 %v2169, %v2169
    %s2171 = scalar_lea.vmem [#allocation4], 288
    %v2172 = vld [vmem:[%s2171] sm:$0xff]
    %v2173 = vld [vmem:[%s2171 + $0x8] sm:$0xf]
    %v2174 = vld [vmem:[%s2171 + $0xc] sm:$0xff]
    %v2175 = vld [vmem:[%s2171 + $0x14] sm:$0xf]
    %v2176 = vld [vmem:[%s2171 + $0x18] sm:$0xff]
    %v2177 = vld [vmem:[%s2171 + $0x20] sm:$0xf]
    %v2178 = vld [vmem:[%s2171 + $0x24] sm:$0xff]
    %v2179 = vld [vmem:[%s2171 + $0x2c] sm:$0xf]
    %v2180 = vld [vmem:[%s2171 + $0x30] sm:$0xff]
    %v2181 = vld [vmem:[%s2171 + $0x38] sm:$0xf]
    %v2182 = vld [vmem:[%s2171 + $0x3c] sm:$0xff]
    %v2183 = vld [vmem:[%s2171 + $0x44] sm:$0xf]
    %v2184 = vld [vmem:[%s2171 + $0x48] sm:$0xff]
    %v2185 = vld [vmem:[%s2171 + $0x50] sm:$0xf]
    %v2186 = vld [vmem:[%s2171 + $0x54] sm:$0xff]
    %v2187 = vld [vmem:[%s2171 + $0x5c] sm:$0xf]
    %2189 = vrot.lane.b32.xlu0 %v2170, 64
    %v2190 = vpop.permute.xlu0 %2189
    %v2207 = vunpack.c.l.b16 %v2172
    %v2208 = vunpack.c.h.b16 %v2172
    %v2209 = vunpack.c.l.b16 %v2173
    %v2210 = vunpack.c.l.b16 %v2174
    %v2211 = vunpack.c.h.b16 %v2174
    %v2212 = vunpack.c.l.b16 %v2175
    %v2213 = vunpack.c.l.b16 %v2176
    %v2214 = vunpack.c.h.b16 %v2176
    %v2215 = vunpack.c.l.b16 %v2177
    %v2216 = vunpack.c.l.b16 %v2178
    %v2217 = vunpack.c.h.b16 %v2178
    %v2218 = vunpack.c.l.b16 %v2179
    %v2219 = vunpack.c.l.b16 %v2180
    %v2220 = vunpack.c.h.b16 %v2180
    %v2221 = vunpack.c.l.b16 %v2181
    %v2222 = vunpack.c.l.b16 %v2182
    %v2223 = vunpack.c.h.b16 %v2182
    %v2224 = vunpack.c.l.b16 %v2183
    %v2225 = vunpack.c.l.b16 %v2184
    %v2226 = vunpack.c.h.b16 %v2184
    %v2227 = vunpack.c.l.b16 %v2185
    %v2228 = vunpack.c.l.b16 %v2186
    %v2229 = vunpack.c.h.b16 %v2186
    %v2230 = vunpack.c.l.b16 %v2187
    %v2231 = vpack.c.b16 %v2210, %v2207
    %v2232 = vpack.c.b16 %v2211, %v2208
    %v2233 = vpack.c.b16 %v2212, %v2209
    %v2234 = vpack.c.b16 %v2216, %v2213
    %v2235 = vpack.c.b16 %v2217, %v2214
    %v2236 = vpack.c.b16 %v2218, %v2215
    %v2237 = vpack.c.b16 %v2222, %v2219
    %v2238 = vpack.c.b16 %v2223, %v2220
    %v2239 = vpack.c.b16 %v2224, %v2221
    %v2240 = vpack.c.b16 %v2228, %v2225
    %v2241 = vpack.c.b16 %v2229, %v2226
    %v2242 = vpack.c.b16 %v2230, %v2227
    %v2256 = vsel %vm296, %v2190, 0
    %2258 = vmatprep.subr.bf16.mxu0 0
    %2259 = vmatpush1.bf16.msra.mxu0 0
    %2260 = vmatprep.subr.bf16.mxu0 0
    %2261 = vmatpush1.bf16.msra.mxu0 0
    %2262 = vmatprep.subr.bf16.mxu0 0
    %2263 = vmatpush1.bf16.msra.mxu0 0
    %2264 = vmatprep.subr.bf16.mxu0 0
    %2265 = vmatpush1.bf16.msra.mxu0 0
    %2266 = vmatprep.subr.bf16.mxu0 %v2241
    %2267 = vmatpush1.bf16.msra.mxu0 %v2240
    %2268 = vmatprep.subr.bf16.mxu0 %v2238
    %2269 = vmatpush1.bf16.msra.mxu0 %v2237
    %2270 = vmatprep.subr.bf16.mxu0 %v2235
    %2271 = vmatpush1.bf16.msra.mxu0 %v2234
    %2272 = vmatprep.subr.bf16.mxu0 %v2232
    %2273 = vmatpush1.bf16.msra.mxu0 %v2231
    %2274 = vmatprep.subr.bf16.mxu0 0
    %2275 = vmatpush2.bf16.msra.mxu0 0
    %2276 = vmatprep.subr.bf16.mxu0 0
    %2277 = vmatpush2.bf16.msra.mxu0 0
    %2278 = vmatprep.subr.bf16.mxu0 0
    %2279 = vmatpush2.bf16.msra.mxu0 0
    %2280 = vmatprep.subr.bf16.mxu0 0
    %2281 = vmatpush2.bf16.msra.mxu0 0
    %2282 = vmatprep.subr.bf16.mxu0 0
    %2283 = vmatpush2.bf16.msra.mxu0 0
    %2284 = vmatprep.subr.bf16.mxu0 0
    %2285 = vmatpush2.bf16.msra.mxu0 0
    %2286 = vmatprep.subr.bf16.mxu0 0
    %2287 = vmatpush2.bf16.msra.mxu0 0
    %2288 = vmatprep.subr.bf16.mxu0 0
    %2289 = vmatpush2.bf16.msra.mxu0 0
    %2290 = vmatprep.mubr.bf16.mxu0 0
    %2291 = vmatmul.mubr.bf16.gmra.mxu0 %v2256
    %v2292 = vpop.f32.mrf.mxu0
    %v2293 = vadd.f32 0.0, %v2292
    %v2294 = vpop.f32.mrf.mxu0
    %v2295 = vadd.f32 0.0, %v2294
    %v2296 = vpop.f32.mrf.mxu0
    %v2297 = vpop.f32.mrf.mxu0
    %2298 = vdwg.mxu0
    %2299 = vmatprep.subr.bf16.mxu0 0
    %2300 = vmatpush1.bf16.msra.mxu0 0
    %2301 = vmatprep.subr.bf16.mxu0 0
    %2302 = vmatpush1.bf16.msra.mxu0 0
    %2303 = vmatprep.subr.bf16.mxu0 0
    %2304 = vmatpush1.bf16.msra.mxu0 0
    %2305 = vmatprep.subr.bf16.mxu0 0
    %2306 = vmatpush1.bf16.msra.mxu0 0
    %2307 = vmatprep.subr.bf16.mxu0 0
    %2308 = vmatpush1.bf16.msra.mxu0 %v2242
    %2309 = vmatprep.subr.bf16.mxu0 0
    %2310 = vmatpush1.bf16.msra.mxu0 %v2239
    %2311 = vmatprep.subr.bf16.mxu0 0
    %2312 = vmatpush1.bf16.msra.mxu0 %v2236
    %2313 = vmatprep.subr.bf16.mxu0 0
    %2314 = vmatpush1.bf16.msra.mxu0 %v2233
    %2315 = vmatprep.subr.bf16.mxu0 0
    %2316 = vmatpush2.bf16.msra.mxu0 0
    %2317 = vmatprep.subr.bf16.mxu0 0
    %2318 = vmatpush2.bf16.msra.mxu0 0
    %2319 = vmatprep.subr.bf16.mxu0 0
    %2320 = vmatpush2.bf16.msra.mxu0 0
    %2321 = vmatprep.subr.bf16.mxu0 0
    %2322 = vmatpush2.bf16.msra.mxu0 0
    %2323 = vmatprep.subr.bf16.mxu0 0
    %2324 = vmatpush2.bf16.msra.mxu0 0
    %2325 = vmatprep.subr.bf16.mxu0 0
    %2326 = vmatpush2.bf16.msra.mxu0 0
    %2327 = vmatprep.subr.bf16.mxu0 0
    %2328 = vmatpush2.bf16.msra.mxu0 0
    %2329 = vmatprep.subr.bf16.mxu0 0
    %2330 = vmatpush2.bf16.msra.mxu0 0
    %2331 = vmatprep.mubr.bf16.mxu0 0
    %2332 = vmatmul.mubr.bf16.gmra.mxu0 %v2256
    %v2333 = vpop.f32.mrf.mxu0
    %v2334 = vadd.f32 0.0, %v2333
    %v2335 = vpop.f32.mrf.mxu0
    %v2336 = vpop.f32.mrf.mxu0
    %v2337 = vpop.f32.mrf.mxu0
    %2338 = vdwg.mxu0
    %v2339 = vadd.f32 %v2026, %v2334
    %v2340 = vld [vmem:[#allocation2 + $0x40] sm:$0xff]
    %v2341 = vld [vmem:[#allocation2 + $0x48] sm:$0xff]
    %v2342 = vadd.f32 %v2340, %v2096
    %v2343 = vadd.f32 %v2341, %v2098
    %v2344 = vxor.u32 %v2342, 2147483648
    %v2345 = vxor.u32 %v2343, 2147483648
    %v2346 = vmul.f32 %v2344, 1.442695
    %v2347 = vpow.pop %v2346
    %v2348 = vmul.f32 %v2345, 1.442695
    %v2349 = vpow.pop %v2348
    %v2350 = vadd.f32 %v2347, 1.0
    %v2351 = vadd.f32 %v2349, 1.0
    %v2352 = vrcp.pop %v2350
    %v2353 = vmul.f32 1.0, %v2352
    %v2354 = vrcp.pop %v2351
    %v2355 = vmul.f32 1.0, %v2354
    %v2356 = vmul.f32 %v2355, 2.0
    %v2357 = vsub.f32 %v2356, 1.0
    %v2358 = vmul.f32 %v2353, %v2051
    %v2359 = vmul.f32 %v2353, %v2357
    %2361 = vrot.lane.b32.xlu0 %v2359, 64
    %v2362 = vpop.permute.xlu0 %2361
    %v2364 = vadd.f32 %v2358, %v2362
    %v2365 = vtanh.pop %v2364
    %v2366 = vmul.f32 %v2355, %v2365
    %v2367 = vpack.c.bf16 %v2366, %v2366
    %2369 = vrot.lane.b32.xlu0 %v2367, 64
    %v2370 = vpop.permute.xlu0 %2369
    %v2372 = vsel %vm296, %v2370, 0
    %2374 = vmatprep.subr.bf16.mxu0 0
    %2375 = vmatpush1.bf16.msra.mxu0 0
    %2376 = vmatprep.subr.bf16.mxu0 0
    %2377 = vmatpush1.bf16.msra.mxu0 0
    %2378 = vmatprep.subr.bf16.mxu0 0
    %2379 = vmatpush1.bf16.msra.mxu0 0
    %2380 = vmatprep.subr.bf16.mxu0 0
    %2381 = vmatpush1.bf16.msra.mxu0 0
    %2382 = vmatprep.subr.bf16.mxu0 %v1089
    %2383 = vmatpush1.bf16.msra.mxu0 %v1088
    %2384 = vmatprep.subr.bf16.mxu0 %v1085
    %2385 = vmatpush1.bf16.msra.mxu0 %v1084
    %2386 = vmatprep.subr.bf16.mxu0 %v1081
    %2387 = vmatpush1.bf16.msra.mxu0 %v1080
    %2388 = vmatprep.subr.bf16.mxu0 %v1077
    %2389 = vmatpush1.bf16.msra.mxu0 %v1076
    %2390 = vmatprep.subr.bf16.mxu0 0
    %2391 = vmatpush2.bf16.msra.mxu0 0
    %2392 = vmatprep.subr.bf16.mxu0 0
    %2393 = vmatpush2.bf16.msra.mxu0 0
    %2394 = vmatprep.subr.bf16.mxu0 0
    %2395 = vmatpush2.bf16.msra.mxu0 0
    %2396 = vmatprep.subr.bf16.mxu0 0
    %2397 = vmatpush2.bf16.msra.mxu0 0
    %2398 = vmatprep.subr.bf16.mxu0 0
    %2399 = vmatpush2.bf16.msra.mxu0 0
    %2400 = vmatprep.subr.bf16.mxu0 0
    %2401 = vmatpush2.bf16.msra.mxu0 0
    %2402 = vmatprep.subr.bf16.mxu0 0
    %2403 = vmatpush2.bf16.msra.mxu0 0
    %2404 = vmatprep.subr.bf16.mxu0 0
    %2405 = vmatpush2.bf16.msra.mxu0 0
    %2406 = vmatprep.mubr.bf16.mxu0 0
    %2407 = vmatmul.mubr.bf16.gmra.mxu0 %v2372
    %v2408 = vpop.f32.mrf.mxu0
    %v2409 = vadd.f32 0.0, %v2408
    %v2410 = vpop.f32.mrf.mxu0
    %v2411 = vadd.f32 0.0, %v2410
    %v2412 = vpop.f32.mrf.mxu0
    %v2413 = vpop.f32.mrf.mxu0
    %2414 = vdwg.mxu0
    %2415 = vmatprep.subr.bf16.mxu0 0
    %2416 = vmatpush1.bf16.msra.mxu0 0
    %2417 = vmatprep.subr.bf16.mxu0 0
    %2418 = vmatpush1.bf16.msra.mxu0 0
    %2419 = vmatprep.subr.bf16.mxu0 0
    %2420 = vmatpush1.bf16.msra.mxu0 0
    %2421 = vmatprep.subr.bf16.mxu0 0
    %2422 = vmatpush1.bf16.msra.mxu0 0
    %2423 = vmatprep.subr.bf16.mxu0 %v1091
    %2424 = vmatpush1.bf16.msra.mxu0 %v1090
    %2425 = vmatprep.subr.bf16.mxu0 %v1087
    %2426 = vmatpush1.bf16.msra.mxu0 %v1086
    %2427 = vmatprep.subr.bf16.mxu0 %v1083
    %2428 = vmatpush1.bf16.msra.mxu0 %v1082
    %2429 = vmatprep.subr.bf16.mxu0 %v1079
    %2430 = vmatpush1.bf16.msra.mxu0 %v1078
    %2431 = vmatprep.subr.bf16.mxu0 0
    %2432 = vmatpush2.bf16.msra.mxu0 0
    %2433 = vmatprep.subr.bf16.mxu0 0
    %2434 = vmatpush2.bf16.msra.mxu0 0
    %2435 = vmatprep.subr.bf16.mxu0 0
    %2436 = vmatpush2.bf16.msra.mxu0 0
    %2437 = vmatprep.subr.bf16.mxu0 0
    %2438 = vmatpush2.bf16.msra.mxu0 0
    %2439 = vmatprep.subr.bf16.mxu0 0
    %2440 = vmatpush2.bf16.msra.mxu0 0
    %2441 = vmatprep.subr.bf16.mxu0 0
    %2442 = vmatpush2.bf16.msra.mxu0 0
    %2443 = vmatprep.subr.bf16.mxu0 0
    %2444 = vmatpush2.bf16.msra.mxu0 0
    %2445 = vmatprep.subr.bf16.mxu0 0
    %2446 = vmatpush2.bf16.msra.mxu0 0
    %2447 = vmatprep.mubr.bf16.mxu0 0
    %2448 = vmatmul.mubr.bf16.gmra.mxu0 %v2372
    %v2449 = vpop.f32.mrf.mxu0
    %v2450 = vadd.f32 0.0, %v2449
    %v2451 = vpop.f32.mrf.mxu0
    %v2452 = vadd.f32 0.0, %v2451
    %v2453 = vpop.f32.mrf.mxu0
    %v2454 = vpop.f32.mrf.mxu0
    %2455 = vdwg.mxu0
    %v2456 = vadd.f32 %v1198, %v2450
    %v2457 = vadd.f32 %v1202, %v2452
    %v2458 = vadd.f32 %v2456, %v2293
    %v2459 = vadd.f32 %v2457, %v2295
    %v2460 = vxor.u32 %v2458, 2147483648
    %v2461 = vxor.u32 %v2459, 2147483648
    %v2462 = vmul.f32 %v2460, 1.442695
    %v2463 = vpow.pop %v2462
    %v2464 = vmul.f32 %v2461, 1.442695
    %v2465 = vpow.pop %v2464
    %v2466 = vadd.f32 %v2463, 1.0
    %v2467 = vadd.f32 %v2465, 1.0
    %v2468 = vrcp.pop %v2466
    %v2469 = vmul.f32 1.0, %v2468
    %v2470 = vrcp.pop %v2467
    %v2471 = vmul.f32 1.0, %v2470
    %v2472 = vmul.f32 %v2471, 2.0
    %v2473 = vsub.f32 %v2472, 1.0
    %v2474 = vmul.f32 %v2469, %v2167
    %v2475 = vmul.f32 %v2469, %v2473
    %2477 = vrot.lane.b32.xlu0 %v2475, 64
    %v2478 = vpop.permute.xlu0 %2477
    %v2480 = vadd.f32 %v2474, %v2478
    %v2481 = vtanh.pop %v2480
    %v2482 = vmul.f32 %v2471, %v2481
    %v2483 = vpack.c.bf16 %v2482, %v2482
    %s2484 = scalar_lea.vmem [#allocation4], 384
    %v2485 = vld [vmem:[%s2484] sm:$0xff]
    %v2486 = vld [vmem:[%s2484 + $0x8] sm:$0xf]
    %v2487 = vld [vmem:[%s2484 + $0xc] sm:$0xff]
    %v2488 = vld [vmem:[%s2484 + $0x14] sm:$0xf]
    %v2489 = vld [vmem:[%s2484 + $0x18] sm:$0xff]
    %v2490 = vld [vmem:[%s2484 + $0x20] sm:$0xf]
    %v2491 = vld [vmem:[%s2484 + $0x24] sm:$0xff]
    %v2492 = vld [vmem:[%s2484 + $0x2c] sm:$0xf]
    %v2493 = vld [vmem:[%s2484 + $0x30] sm:$0xff]
    %v2494 = vld [vmem:[%s2484 + $0x38] sm:$0xf]
    %v2495 = vld [vmem:[%s2484 + $0x3c] sm:$0xff]
    %v2496 = vld [vmem:[%s2484 + $0x44] sm:$0xf]
    %v2497 = vld [vmem:[%s2484 + $0x48] sm:$0xff]
    %v2498 = vld [vmem:[%s2484 + $0x50] sm:$0xf]
    %v2499 = vld [vmem:[%s2484 + $0x54] sm:$0xff]
    %v2500 = vld [vmem:[%s2484 + $0x5c] sm:$0xf]
    %2502 = vrot.lane.b32.xlu0 %v2483, 64
    %v2503 = vpop.permute.xlu0 %2502
    %v2520 = vunpack.c.l.b16 %v2485
    %v2521 = vunpack.c.h.b16 %v2485
    %v2522 = vunpack.c.l.b16 %v2486
    %v2523 = vunpack.c.l.b16 %v2487
    %v2524 = vunpack.c.h.b16 %v2487
    %v2525 = vunpack.c.l.b16 %v2488
    %v2526 = vunpack.c.l.b16 %v2489
    %v2527 = vunpack.c.h.b16 %v2489
    %v2528 = vunpack.c.l.b16 %v2490
    %v2529 = vunpack.c.l.b16 %v2491
    %v2530 = vunpack.c.h.b16 %v2491
    %v2531 = vunpack.c.l.b16 %v2492
    %v2532 = vunpack.c.l.b16 %v2493
    %v2533 = vunpack.c.h.b16 %v2493
    %v2534 = vunpack.c.l.b16 %v2494
    %v2535 = vunpack.c.l.b16 %v2495
    %v2536 = vunpack.c.h.b16 %v2495
    %v2537 = vunpack.c.l.b16 %v2496
    %v2538 = vunpack.c.l.b16 %v2497
    %v2539 = vunpack.c.h.b16 %v2497
    %v2540 = vunpack.c.l.b16 %v2498
    %v2541 = vunpack.c.l.b16 %v2499
    %v2542 = vunpack.c.h.b16 %v2499
    %v2543 = vunpack.c.l.b16 %v2500
    %v2544 = vpack.c.b16 %v2523, %v2520
    %v2545 = vpack.c.b16 %v2524, %v2521
    %v2546 = vpack.c.b16 %v2525, %v2522
    %v2547 = vpack.c.b16 %v2529, %v2526
    %v2548 = vpack.c.b16 %v2530, %v2527
    %v2549 = vpack.c.b16 %v2531, %v2528
    %v2550 = vpack.c.b16 %v2535, %v2532
    %v2551 = vpack.c.b16 %v2536, %v2533
    %v2552 = vpack.c.b16 %v2537, %v2534
    %v2553 = vpack.c.b16 %v2541, %v2538
    %v2554 = vpack.c.b16 %v2542, %v2539
    %v2555 = vpack.c.b16 %v2543, %v2540
    %v2569 = vsel %vm296, %v2503, 0
    %2571 = vmatprep.subr.bf16.mxu0 0
    %2572 = vmatpush1.bf16.msra.mxu0 0
    %2573 = vmatprep.subr.bf16.mxu0 0
    %2574 = vmatpush1.bf16.msra.mxu0 0
    %2575 = vmatprep.subr.bf16.mxu0 0
    %2576 = vmatpush1.bf16.msra.mxu0 0
    %2577 = vmatprep.subr.bf16.mxu0 0
    %2578 = vmatpush1.bf16.msra.mxu0 0
    %2579 = vmatprep.subr.bf16.mxu0 %v2554
    %2580 = vmatpush1.bf16.msra.mxu0 %v2553
    %2581 = vmatprep.subr.bf16.mxu0 %v2551
    %2582 = vmatpush1.bf16.msra.mxu0 %v2550
    %2583 = vmatprep.subr.bf16.mxu0 %v2548
    %2584 = vmatpush1.bf16.msra.mxu0 %v2547
    %2585 = vmatprep.subr.bf16.mxu0 %v2545
    %2586 = vmatpush1.bf16.msra.mxu0 %v2544
    %2587 = vmatprep.subr.bf16.mxu0 0
    %2588 = vmatpush2.bf16.msra.mxu0 0
    %2589 = vmatprep.subr.bf16.mxu0 0
    %2590 = vmatpush2.bf16.msra.mxu0 0
    %2591 = vmatprep.subr.bf16.mxu0 0
    %2592 = vmatpush2.bf16.msra.mxu0 0
    %2593 = vmatprep.subr.bf16.mxu0 0
    %2594 = vmatpush2.bf16.msra.mxu0 0
    %2595 = vmatprep.subr.bf16.mxu0 0
    %2596 = vmatpush2.bf16.msra.mxu0 0
    %2597 = vmatprep.subr.bf16.mxu0 0
    %2598 = vmatpush2.bf16.msra.mxu0 0
    %2599 = vmatprep.subr.bf16.mxu0 0
    %2600 = vmatpush2.bf16.msra.mxu0 0
    %2601 = vmatprep.subr.bf16.mxu0 0
    %2602 = vmatpush2.bf16.msra.mxu0 0
    %2603 = vmatprep.mubr.bf16.mxu0 0
    %2604 = vmatmul.mubr.bf16.gmra.mxu0 %v2569
    %v2605 = vpop.f32.mrf.mxu0
    %v2606 = vadd.f32 0.0, %v2605
    %v2607 = vpop.f32.mrf.mxu0
    %v2608 = vadd.f32 0.0, %v2607
    %v2609 = vpop.f32.mrf.mxu0
    %v2610 = vpop.f32.mrf.mxu0
    %2611 = vdwg.mxu0
    %2612 = vmatprep.subr.bf16.mxu0 0
    %2613 = vmatpush1.bf16.msra.mxu0 0
    %2614 = vmatprep.subr.bf16.mxu0 0
    %2615 = vmatpush1.bf16.msra.mxu0 0
    %2616 = vmatprep.subr.bf16.mxu0 0
    %2617 = vmatpush1.bf16.msra.mxu0 0
    %2618 = vmatprep.subr.bf16.mxu0 0
    %2619 = vmatpush1.bf16.msra.mxu0 0
    %2620 = vmatprep.subr.bf16.mxu0 0
    %2621 = vmatpush1.bf16.msra.mxu0 %v2555
    %2622 = vmatprep.subr.bf16.mxu0 0
    %2623 = vmatpush1.bf16.msra.mxu0 %v2552
    %2624 = vmatprep.subr.bf16.mxu0 0
    %2625 = vmatpush1.bf16.msra.mxu0 %v2549
    %2626 = vmatprep.subr.bf16.mxu0 0
    %2627 = vmatpush1.bf16.msra.mxu0 %v2546
    %2628 = vmatprep.subr.bf16.mxu0 0
    %2629 = vmatpush2.bf16.msra.mxu0 0
    %2630 = vmatprep.subr.bf16.mxu0 0
    %2631 = vmatpush2.bf16.msra.mxu0 0
    %2632 = vmatprep.subr.bf16.mxu0 0
    %2633 = vmatpush2.bf16.msra.mxu0 0
    %2634 = vmatprep.subr.bf16.mxu0 0
    %2635 = vmatpush2.bf16.msra.mxu0 0
    %2636 = vmatprep.subr.bf16.mxu0 0
    %2637 = vmatpush2.bf16.msra.mxu0 0
    %2638 = vmatprep.subr.bf16.mxu0 0
    %2639 = vmatpush2.bf16.msra.mxu0 0
    %2640 = vmatprep.subr.bf16.mxu0 0
    %2641 = vmatpush2.bf16.msra.mxu0 0
    %2642 = vmatprep.subr.bf16.mxu0 0
    %2643 = vmatpush2.bf16.msra.mxu0 0
    %2644 = vmatprep.mubr.bf16.mxu0 0
    %2645 = vmatmul.mubr.bf16.gmra.mxu0 %v2569
    %v2646 = vpop.f32.mrf.mxu0
    %v2647 = vadd.f32 0.0, %v2646
    %v2648 = vpop.f32.mrf.mxu0
    %v2649 = vpop.f32.mrf.mxu0
    %v2650 = vpop.f32.mrf.mxu0
    %2651 = vdwg.mxu0
    %v2652 = vadd.f32 %v2339, %v2647
    %v2653 = vld [vmem:[#allocation2 + $0x50] sm:$0xff]
    %v2654 = vld [vmem:[#allocation2 + $0x58] sm:$0xff]
    %v2655 = vadd.f32 %v2653, %v2409
    %v2656 = vadd.f32 %v2654, %v2411
    %v2657 = vxor.u32 %v2655, 2147483648
    %v2658 = vxor.u32 %v2656, 2147483648
    %v2659 = vmul.f32 %v2657, 1.442695
    %v2660 = vpow.pop %v2659
    %v2661 = vmul.f32 %v2658, 1.442695
    %v2662 = vpow.pop %v2661
    %v2663 = vadd.f32 %v2660, 1.0
    %v2664 = vadd.f32 %v2662, 1.0
    %v2665 = vrcp.pop %v2663
    %v2666 = vmul.f32 1.0, %v2665
    %v2667 = vrcp.pop %v2664
    %v2668 = vmul.f32 1.0, %v2667
    %v2669 = vmul.f32 %v2668, 2.0
    %v2670 = vsub.f32 %v2669, 1.0
    %v2671 = vmul.f32 %v2666, %v2364
    %v2672 = vmul.f32 %v2666, %v2670
    %2674 = vrot.lane.b32.xlu0 %v2672, 64
    %v2675 = vpop.permute.xlu0 %2674
    %v2677 = vadd.f32 %v2671, %v2675
    %v2678 = vtanh.pop %v2677
    %v2679 = vmul.f32 %v2668, %v2678
    %v2680 = vpack.c.bf16 %v2679, %v2679
    %2682 = vrot.lane.b32.xlu0 %v2680, 64
    %v2683 = vpop.permute.xlu0 %2682
    %v2685 = vsel %vm296, %v2683, 0
    %2687 = vmatprep.subr.bf16.mxu0 0
    %2688 = vmatpush1.bf16.msra.mxu0 0
    %2689 = vmatprep.subr.bf16.mxu0 0
    %2690 = vmatpush1.bf16.msra.mxu0 0
    %2691 = vmatprep.subr.bf16.mxu0 0
    %2692 = vmatpush1.bf16.msra.mxu0 0
    %2693 = vmatprep.subr.bf16.mxu0 0
    %2694 = vmatpush1.bf16.msra.mxu0 0
    %2695 = vmatprep.subr.bf16.mxu0 %v1089
    %2696 = vmatpush1.bf16.msra.mxu0 %v1088
    %2697 = vmatprep.subr.bf16.mxu0 %v1085
    %2698 = vmatpush1.bf16.msra.mxu0 %v1084
    %2699 = vmatprep.subr.bf16.mxu0 %v1081
    %2700 = vmatpush1.bf16.msra.mxu0 %v1080
    %2701 = vmatprep.subr.bf16.mxu0 %v1077
    %2702 = vmatpush1.bf16.msra.mxu0 %v1076
    %2703 = vmatprep.subr.bf16.mxu0 0
    %2704 = vmatpush2.bf16.msra.mxu0 0
    %2705 = vmatprep.subr.bf16.mxu0 0
    %2706 = vmatpush2.bf16.msra.mxu0 0
    %2707 = vmatprep.subr.bf16.mxu0 0
    %2708 = vmatpush2.bf16.msra.mxu0 0
    %2709 = vmatprep.subr.bf16.mxu0 0
    %2710 = vmatpush2.bf16.msra.mxu0 0
    %2711 = vmatprep.subr.bf16.mxu0 0
    %2712 = vmatpush2.bf16.msra.mxu0 0
    %2713 = vmatprep.subr.bf16.mxu0 0
    %2714 = vmatpush2.bf16.msra.mxu0 0
    %2715 = vmatprep.subr.bf16.mxu0 0
    %2716 = vmatpush2.bf16.msra.mxu0 0
    %2717 = vmatprep.subr.bf16.mxu0 0
    %2718 = vmatpush2.bf16.msra.mxu0 0
    %2719 = vmatprep.mubr.bf16.mxu0 0
    %2720 = vmatmul.mubr.bf16.gmra.mxu0 %v2685
    %v2721 = vpop.f32.mrf.mxu0
    %v2722 = vadd.f32 0.0, %v2721
    %v2723 = vpop.f32.mrf.mxu0
    %v2724 = vadd.f32 0.0, %v2723
    %v2725 = vpop.f32.mrf.mxu0
    %v2726 = vpop.f32.mrf.mxu0
    %2727 = vdwg.mxu0
    %2728 = vmatprep.subr.bf16.mxu0 0
    %2729 = vmatpush1.bf16.msra.mxu0 0
    %2730 = vmatprep.subr.bf16.mxu0 0
    %2731 = vmatpush1.bf16.msra.mxu0 0
    %2732 = vmatprep.subr.bf16.mxu0 0
    %2733 = vmatpush1.bf16.msra.mxu0 0
    %2734 = vmatprep.subr.bf16.mxu0 0
    %2735 = vmatpush1.bf16.msra.mxu0 0
    %2736 = vmatprep.subr.bf16.mxu0 %v1091
    %2737 = vmatpush1.bf16.msra.mxu0 %v1090
    %2738 = vmatprep.subr.bf16.mxu0 %v1087
    %2739 = vmatpush1.bf16.msra.mxu0 %v1086
    %2740 = vmatprep.subr.bf16.mxu0 %v1083
    %2741 = vmatpush1.bf16.msra.mxu0 %v1082
    %2742 = vmatprep.subr.bf16.mxu0 %v1079
    %2743 = vmatpush1.bf16.msra.mxu0 %v1078
    %2744 = vmatprep.subr.bf16.mxu0 0
    %2745 = vmatpush2.bf16.msra.mxu0 0
    %2746 = vmatprep.subr.bf16.mxu0 0
    %2747 = vmatpush2.bf16.msra.mxu0 0
    %2748 = vmatprep.subr.bf16.mxu0 0
    %2749 = vmatpush2.bf16.msra.mxu0 0
    %2750 = vmatprep.subr.bf16.mxu0 0
    %2751 = vmatpush2.bf16.msra.mxu0 0
    %2752 = vmatprep.subr.bf16.mxu0 0
    %2753 = vmatpush2.bf16.msra.mxu0 0
    %2754 = vmatprep.subr.bf16.mxu0 0
    %2755 = vmatpush2.bf16.msra.mxu0 0
    %2756 = vmatprep.subr.bf16.mxu0 0
    %2757 = vmatpush2.bf16.msra.mxu0 0
    %2758 = vmatprep.subr.bf16.mxu0 0
    %2759 = vmatpush2.bf16.msra.mxu0 0
    %2760 = vmatprep.mubr.bf16.mxu0 0
    %2761 = vmatmul.mubr.bf16.gmra.mxu0 %v2685
    %v2762 = vpop.f32.mrf.mxu0
    %v2763 = vadd.f32 0.0, %v2762
    %v2764 = vpop.f32.mrf.mxu0
    %v2765 = vadd.f32 0.0, %v2764
    %v2766 = vpop.f32.mrf.mxu0
    %v2767 = vpop.f32.mrf.mxu0
    %2768 = vdwg.mxu0
    %v2769 = vadd.f32 %v1198, %v2763
    %v2770 = vadd.f32 %v1202, %v2765
    %v2771 = vadd.f32 %v2769, %v2606
    %v2772 = vadd.f32 %v2770, %v2608
    %v2773 = vxor.u32 %v2771, 2147483648
    %v2774 = vxor.u32 %v2772, 2147483648
    %v2775 = vmul.f32 %v2773, 1.442695
    %v2776 = vpow.pop %v2775
    %v2777 = vmul.f32 %v2774, 1.442695
    %v2778 = vpow.pop %v2777
    %v2779 = vadd.f32 %v2776, 1.0
    %v2780 = vadd.f32 %v2778, 1.0
    %v2781 = vrcp.pop %v2779
    %v2782 = vmul.f32 1.0, %v2781
    %v2783 = vrcp.pop %v2780
    %v2784 = vmul.f32 1.0, %v2783
    %v2785 = vmul.f32 %v2784, 2.0
    %v2786 = vsub.f32 %v2785, 1.0
    %v2787 = vmul.f32 %v2782, %v2480
    %v2788 = vmul.f32 %v2782, %v2786
    %2790 = vrot.lane.b32.xlu0 %v2788, 64
    %v2791 = vpop.permute.xlu0 %2790
    %v2793 = vadd.f32 %v2787, %v2791
    %v2794 = vtanh.pop %v2793
    %v2795 = vmul.f32 %v2784, %v2794
    %v2796 = vpack.c.bf16 %v2795, %v2795
    %s2797 = scalar_lea.vmem [#allocation4], 480
    %v2798 = vld [vmem:[%s2797] sm:$0xff]
    %v2799 = vld [vmem:[%s2797 + $0x8] sm:$0xf]
    %v2800 = vld [vmem:[%s2797 + $0xc] sm:$0xff]
    %v2801 = vld [vmem:[%s2797 + $0x14] sm:$0xf]
    %v2802 = vld [vmem:[%s2797 + $0x18] sm:$0xff]
    %v2803 = vld [vmem:[%s2797 + $0x20] sm:$0xf]
    %v2804 = vld [vmem:[%s2797 + $0x24] sm:$0xff]
    %v2805 = vld [vmem:[%s2797 + $0x2c] sm:$0xf]
    %v2806 = vld [vmem:[%s2797 + $0x30] sm:$0xff]
    %v2807 = vld [vmem:[%s2797 + $0x38] sm:$0xf]
    %v2808 = vld [vmem:[%s2797 + $0x3c] sm:$0xff]
    %v2809 = vld [vmem:[%s2797 + $0x44] sm:$0xf]
    %v2810 = vld [vmem:[%s2797 + $0x48] sm:$0xff]
    %v2811 = vld [vmem:[%s2797 + $0x50] sm:$0xf]
    %v2812 = vld [vmem:[%s2797 + $0x54] sm:$0xff]
    %v2813 = vld [vmem:[%s2797 + $0x5c] sm:$0xf]
    %2815 = vrot.lane.b32.xlu0 %v2796, 64
    %v2816 = vpop.permute.xlu0 %2815
    %v2833 = vunpack.c.l.b16 %v2798
    %v2834 = vunpack.c.h.b16 %v2798
    %v2835 = vunpack.c.l.b16 %v2799
    %v2836 = vunpack.c.l.b16 %v2800
    %v2837 = vunpack.c.h.b16 %v2800
    %v2838 = vunpack.c.l.b16 %v2801
    %v2839 = vunpack.c.l.b16 %v2802
    %v2840 = vunpack.c.h.b16 %v2802
    %v2841 = vunpack.c.l.b16 %v2803
    %v2842 = vunpack.c.l.b16 %v2804
    %v2843 = vunpack.c.h.b16 %v2804
    %v2844 = vunpack.c.l.b16 %v2805
    %v2845 = vunpack.c.l.b16 %v2806
    %v2846 = vunpack.c.h.b16 %v2806
    %v2847 = vunpack.c.l.b16 %v2807
    %v2848 = vunpack.c.l.b16 %v2808
    %v2849 = vunpack.c.h.b16 %v2808
    %v2850 = vunpack.c.l.b16 %v2809
    %v2851 = vunpack.c.l.b16 %v2810
    %v2852 = vunpack.c.h.b16 %v2810
    %v2853 = vunpack.c.l.b16 %v2811
    %v2854 = vunpack.c.l.b16 %v2812
    %v2855 = vunpack.c.h.b16 %v2812
    %v2856 = vunpack.c.l.b16 %v2813
    %v2857 = vpack.c.b16 %v2836, %v2833
    %v2858 = vpack.c.b16 %v2837, %v2834
    %v2859 = vpack.c.b16 %v2838, %v2835
    %v2860 = vpack.c.b16 %v2842, %v2839
    %v2861 = vpack.c.b16 %v2843, %v2840
    %v2862 = vpack.c.b16 %v2844, %v2841
    %v2863 = vpack.c.b16 %v2848, %v2845
    %v2864 = vpack.c.b16 %v2849, %v2846
    %v2865 = vpack.c.b16 %v2850, %v2847
    %v2866 = vpack.c.b16 %v2854, %v2851
    %v2867 = vpack.c.b16 %v2855, %v2852
    %v2868 = vpack.c.b16 %v2856, %v2853
    %v2882 = vsel %vm296, %v2816, 0
    %2884 = vmatprep.subr.bf16.mxu0 0
    %2885 = vmatpush1.bf16.msra.mxu0 0
    %2886 = vmatprep.subr.bf16.mxu0 0
    %2887 = vmatpush1.bf16.msra.mxu0 0
    %2888 = vmatprep.subr.bf16.mxu0 0
    %2889 = vmatpush1.bf16.msra.mxu0 0
    %2890 = vmatprep.subr.bf16.mxu0 0
    %2891 = vmatpush1.bf16.msra.mxu0 0
    %2892 = vmatprep.subr.bf16.mxu0 %v2867
    %2893 = vmatpush1.bf16.msra.mxu0 %v2866
    %2894 = vmatprep.subr.bf16.mxu0 %v2864
    %2895 = vmatpush1.bf16.msra.mxu0 %v2863
    %2896 = vmatprep.subr.bf16.mxu0 %v2861
    %2897 = vmatpush1.bf16.msra.mxu0 %v2860
    %2898 = vmatprep.subr.bf16.mxu0 %v2858
    %2899 = vmatpush1.bf16.msra.mxu0 %v2857
    %2900 = vmatprep.subr.bf16.mxu0 0
    %2901 = vmatpush2.bf16.msra.mxu0 0
    %2902 = vmatprep.subr.bf16.mxu0 0
    %2903 = vmatpush2.bf16.msra.mxu0 0
    %2904 = vmatprep.subr.bf16.mxu0 0
    %2905 = vmatpush2.bf16.msra.mxu0 0
    %2906 = vmatprep.subr.bf16.mxu0 0
    %2907 = vmatpush2.bf16.msra.mxu0 0
    %2908 = vmatprep.subr.bf16.mxu0 0
    %2909 = vmatpush2.bf16.msra.mxu0 0
    %2910 = vmatprep.subr.bf16.mxu0 0
    %2911 = vmatpush2.bf16.msra.mxu0 0
    %2912 = vmatprep.subr.bf16.mxu0 0
    %2913 = vmatpush2.bf16.msra.mxu0 0
    %2914 = vmatprep.subr.bf16.mxu0 0
    %2915 = vmatpush2.bf16.msra.mxu0 0
    %2916 = vmatprep.mubr.bf16.mxu0 0
    %2917 = vmatmul.mubr.bf16.gmra.mxu0 %v2882
    %v2918 = vpop.f32.mrf.mxu0
    %v2919 = vadd.f32 0.0, %v2918
    %v2920 = vpop.f32.mrf.mxu0
    %v2921 = vadd.f32 0.0, %v2920
    %v2922 = vpop.f32.mrf.mxu0
    %v2923 = vpop.f32.mrf.mxu0
    %2924 = vdwg.mxu0
    %2925 = vmatprep.subr.bf16.mxu0 0
    %2926 = vmatpush1.bf16.msra.mxu0 0
    %2927 = vmatprep.subr.bf16.mxu0 0
    %2928 = vmatpush1.bf16.msra.mxu0 0
    %2929 = vmatprep.subr.bf16.mxu0 0
    %2930 = vmatpush1.bf16.msra.mxu0 0
    %2931 = vmatprep.subr.bf16.mxu0 0
    %2932 = vmatpush1.bf16.msra.mxu0 0
    %2933 = vmatprep.subr.bf16.mxu0 0
    %2934 = vmatpush1.bf16.msra.mxu0 %v2868
    %2935 = vmatprep.subr.bf16.mxu0 0
    %2936 = vmatpush1.bf16.msra.mxu0 %v2865
    %2937 = vmatprep.subr.bf16.mxu0 0
    %2938 = vmatpush1.bf16.msra.mxu0 %v2862
    %2939 = vmatprep.subr.bf16.mxu0 0
    %2940 = vmatpush1.bf16.msra.mxu0 %v2859
    %2941 = vmatprep.subr.bf16.mxu0 0
    %2942 = vmatpush2.bf16.msra.mxu0 0
    %2943 = vmatprep.subr.bf16.mxu0 0
    %2944 = vmatpush2.bf16.msra.mxu0 0
    %2945 = vmatprep.subr.bf16.mxu0 0
    %2946 = vmatpush2.bf16.msra.mxu0 0
    %2947 = vmatprep.subr.bf16.mxu0 0
    %2948 = vmatpush2.bf16.msra.mxu0 0
    %2949 = vmatprep.subr.bf16.mxu0 0
    %2950 = vmatpush2.bf16.msra.mxu0 0
    %2951 = vmatprep.subr.bf16.mxu0 0
    %2952 = vmatpush2.bf16.msra.mxu0 0
    %2953 = vmatprep.subr.bf16.mxu0 0
    %2954 = vmatpush2.bf16.msra.mxu0 0
    %2955 = vmatprep.subr.bf16.mxu0 0
    %2956 = vmatpush2.bf16.msra.mxu0 0
    %2957 = vmatprep.mubr.bf16.mxu0 0
    %2958 = vmatmul.mubr.bf16.gmra.mxu0 %v2882
    %v2959 = vpop.f32.mrf.mxu0
    %v2960 = vadd.f32 0.0, %v2959
    %v2961 = vpop.f32.mrf.mxu0
    %v2962 = vpop.f32.mrf.mxu0
    %v2963 = vpop.f32.mrf.mxu0
    %2964 = vdwg.mxu0
    %v2965 = vadd.f32 %v2652, %v2960
    %v2966 = vld [vmem:[#allocation2 + $0x60] sm:$0xff]
    %v2967 = vld [vmem:[#allocation2 + $0x68] sm:$0xff]
    %v2968 = vadd.f32 %v2966, %v2722
    %v2969 = vadd.f32 %v2967, %v2724
    %v2970 = vxor.u32 %v2968, 2147483648
    %v2971 = vxor.u32 %v2969, 2147483648
    %v2972 = vmul.f32 %v2970, 1.442695
    %v2973 = vpow.pop %v2972
    %v2974 = vmul.f32 %v2971, 1.442695
    %v2975 = vpow.pop %v2974
    %v2976 = vadd.f32 %v2973, 1.0
    %v2977 = vadd.f32 %v2975, 1.0
    %v2978 = vrcp.pop %v2976
    %v2979 = vmul.f32 1.0, %v2978
    %v2980 = vrcp.pop %v2977
    %v2981 = vmul.f32 1.0, %v2980
    %v2982 = vmul.f32 %v2981, 2.0
    %v2983 = vsub.f32 %v2982, 1.0
    %v2984 = vmul.f32 %v2979, %v2677
    %v2985 = vmul.f32 %v2979, %v2983
    %2987 = vrot.lane.b32.xlu0 %v2985, 64
    %v2988 = vpop.permute.xlu0 %2987
    %v2990 = vadd.f32 %v2984, %v2988
    %v2991 = vtanh.pop %v2990
    %v2992 = vmul.f32 %v2981, %v2991
    %v2993 = vpack.c.bf16 %v2992, %v2992
    %2995 = vrot.lane.b32.xlu0 %v2993, 64
    %v2996 = vpop.permute.xlu0 %2995
    %v2998 = vsel %vm296, %v2996, 0
    %3000 = vmatprep.subr.bf16.mxu0 0
    %3001 = vmatpush1.bf16.msra.mxu0 0
    %3002 = vmatprep.subr.bf16.mxu0 0
    %3003 = vmatpush1.bf16.msra.mxu0 0
    %3004 = vmatprep.subr.bf16.mxu0 0
    %3005 = vmatpush1.bf16.msra.mxu0 0
    %3006 = vmatprep.subr.bf16.mxu0 0
    %3007 = vmatpush1.bf16.msra.mxu0 0
    %3008 = vmatprep.subr.bf16.mxu0 %v1089
    %3009 = vmatpush1.bf16.msra.mxu0 %v1088
    %3010 = vmatprep.subr.bf16.mxu0 %v1085
    %3011 = vmatpush1.bf16.msra.mxu0 %v1084
    %3012 = vmatprep.subr.bf16.mxu0 %v1081
    %3013 = vmatpush1.bf16.msra.mxu0 %v1080
    %3014 = vmatprep.subr.bf16.mxu0 %v1077
    %3015 = vmatpush1.bf16.msra.mxu0 %v1076
    %3016 = vmatprep.subr.bf16.mxu0 0
    %3017 = vmatpush2.bf16.msra.mxu0 0
    %3018 = vmatprep.subr.bf16.mxu0 0
    %3019 = vmatpush2.bf16.msra.mxu0 0
    %3020 = vmatprep.subr.bf16.mxu0 0
    %3021 = vmatpush2.bf16.msra.mxu0 0
    %3022 = vmatprep.subr.bf16.mxu0 0
    %3023 = vmatpush2.bf16.msra.mxu0 0
    %3024 = vmatprep.subr.bf16.mxu0 0
    %3025 = vmatpush2.bf16.msra.mxu0 0
    %3026 = vmatprep.subr.bf16.mxu0 0
    %3027 = vmatpush2.bf16.msra.mxu0 0
    %3028 = vmatprep.subr.bf16.mxu0 0
    %3029 = vmatpush2.bf16.msra.mxu0 0
    %3030 = vmatprep.subr.bf16.mxu0 0
    %3031 = vmatpush2.bf16.msra.mxu0 0
    %3032 = vmatprep.mubr.bf16.mxu0 0
    %3033 = vmatmul.mubr.bf16.gmra.mxu0 %v2998
    %v3034 = vpop.f32.mrf.mxu0
    %v3035 = vadd.f32 0.0, %v3034
    %v3036 = vpop.f32.mrf.mxu0
    %v3037 = vadd.f32 0.0, %v3036
    %v3038 = vpop.f32.mrf.mxu0
    %v3039 = vpop.f32.mrf.mxu0
    %3040 = vdwg.mxu0
    %3041 = vmatprep.subr.bf16.mxu0 0
    %3042 = vmatpush1.bf16.msra.mxu0 0
    %3043 = vmatprep.subr.bf16.mxu0 0
    %3044 = vmatpush1.bf16.msra.mxu0 0
    %3045 = vmatprep.subr.bf16.mxu0 0
    %3046 = vmatpush1.bf16.msra.mxu0 0
    %3047 = vmatprep.subr.bf16.mxu0 0
    %3048 = vmatpush1.bf16.msra.mxu0 0
    %3049 = vmatprep.subr.bf16.mxu0 %v1091
    %3050 = vmatpush1.bf16.msra.mxu0 %v1090
    %3051 = vmatprep.subr.bf16.mxu0 %v1087
    %3052 = vmatpush1.bf16.msra.mxu0 %v1086
    %3053 = vmatprep.subr.bf16.mxu0 %v1083
    %3054 = vmatpush1.bf16.msra.mxu0 %v1082
    %3055 = vmatprep.subr.bf16.mxu0 %v1079
    %3056 = vmatpush1.bf16.msra.mxu0 %v1078
    %3057 = vmatprep.subr.bf16.mxu0 0
    %3058 = vmatpush2.bf16.msra.mxu0 0
    %3059 = vmatprep.subr.bf16.mxu0 0
    %3060 = vmatpush2.bf16.msra.mxu0 0
    %3061 = vmatprep.subr.bf16.mxu0 0
    %3062 = vmatpush2.bf16.msra.mxu0 0
    %3063 = vmatprep.subr.bf16.mxu0 0
    %3064 = vmatpush2.bf16.msra.mxu0 0
    %3065 = vmatprep.subr.bf16.mxu0 0
    %3066 = vmatpush2.bf16.msra.mxu0 0
    %3067 = vmatprep.subr.bf16.mxu0 0
    %3068 = vmatpush2.bf16.msra.mxu0 0
    %3069 = vmatprep.subr.bf16.mxu0 0
    %3070 = vmatpush2.bf16.msra.mxu0 0
    %3071 = vmatprep.subr.bf16.mxu0 0
    %3072 = vmatpush2.bf16.msra.mxu0 0
    %3073 = vmatprep.mubr.bf16.mxu0 0
    %3074 = vmatmul.mubr.bf16.gmra.mxu0 %v2998
    %v3075 = vpop.f32.mrf.mxu0
    %v3076 = vadd.f32 0.0, %v3075
    %v3077 = vpop.f32.mrf.mxu0
    %v3078 = vadd.f32 0.0, %v3077
    %v3079 = vpop.f32.mrf.mxu0
    %v3080 = vpop.f32.mrf.mxu0
    %3081 = vdwg.mxu0
    %v3082 = vadd.f32 %v1198, %v3076
    %v3083 = vadd.f32 %v1202, %v3078
    %v3084 = vadd.f32 %v3082, %v2919
    %v3085 = vadd.f32 %v3083, %v2921
    %v3086 = vxor.u32 %v3084, 2147483648
    %v3087 = vxor.u32 %v3085, 2147483648
    %v3088 = vmul.f32 %v3086, 1.442695
    %v3089 = vpow.pop %v3088
    %v3090 = vmul.f32 %v3087, 1.442695
    %v3091 = vpow.pop %v3090
    %v3092 = vadd.f32 %v3089, 1.0
    %v3093 = vadd.f32 %v3091, 1.0
    %v3094 = vrcp.pop %v3092
    %v3095 = vmul.f32 1.0, %v3094
    %v3096 = vrcp.pop %v3093
    %v3097 = vmul.f32 1.0, %v3096
    %v3098 = vmul.f32 %v3097, 2.0
    %v3099 = vsub.f32 %v3098, 1.0
    %v3100 = vmul.f32 %v3095, %v2793
    %v3101 = vmul.f32 %v3095, %v3099
    %3103 = vrot.lane.b32.xlu0 %v3101, 64
    %v3104 = vpop.permute.xlu0 %3103
    %v3106 = vadd.f32 %v3100, %v3104
    %v3107 = vtanh.pop %v3106
    %v3108 = vmul.f32 %v3097, %v3107
    %v3109 = vpack.c.bf16 %v3108, %v3108
    %s3110 = scalar_lea.vmem [#allocation4], 576
    %v3111 = vld [vmem:[%s3110] sm:$0xff]
    %v3112 = vld [vmem:[%s3110 + $0x8] sm:$0xf]
    %v3113 = vld [vmem:[%s3110 + $0xc] sm:$0xff]
    %v3114 = vld [vmem:[%s3110 + $0x14] sm:$0xf]
    %v3115 = vld [vmem:[%s3110 + $0x18] sm:$0xff]
    %v3116 = vld [vmem:[%s3110 + $0x20] sm:$0xf]
    %v3117 = vld [vmem:[%s3110 + $0x24] sm:$0xff]
    %v3118 = vld [vmem:[%s3110 + $0x2c] sm:$0xf]
    %v3119 = vld [vmem:[%s3110 + $0x30] sm:$0xff]
    %v3120 = vld [vmem:[%s3110 + $0x38] sm:$0xf]
    %v3121 = vld [vmem:[%s3110 + $0x3c] sm:$0xff]
    %v3122 = vld [vmem:[%s3110 + $0x44] sm:$0xf]
    %v3123 = vld [vmem:[%s3110 + $0x48] sm:$0xff]
    %v3124 = vld [vmem:[%s3110 + $0x50] sm:$0xf]
    %v3125 = vld [vmem:[%s3110 + $0x54] sm:$0xff]
    %v3126 = vld [vmem:[%s3110 + $0x5c] sm:$0xf]
    %3128 = vrot.lane.b32.xlu0 %v3109, 64
    %v3129 = vpop.permute.xlu0 %3128
    %v3146 = vunpack.c.l.b16 %v3111
    %v3147 = vunpack.c.h.b16 %v3111
    %v3148 = vunpack.c.l.b16 %v3112
    %v3149 = vunpack.c.l.b16 %v3113
    %v3150 = vunpack.c.h.b16 %v3113
    %v3151 = vunpack.c.l.b16 %v3114
    %v3152 = vunpack.c.l.b16 %v3115
    %v3153 = vunpack.c.h.b16 %v3115
    %v3154 = vunpack.c.l.b16 %v3116
    %v3155 = vunpack.c.l.b16 %v3117
    %v3156 = vunpack.c.h.b16 %v3117
    %v3157 = vunpack.c.l.b16 %v3118
    %v3158 = vunpack.c.l.b16 %v3119
    %v3159 = vunpack.c.h.b16 %v3119
    %v3160 = vunpack.c.l.b16 %v3120
    %v3161 = vunpack.c.l.b16 %v3121
    %v3162 = vunpack.c.h.b16 %v3121
    %v3163 = vunpack.c.l.b16 %v3122
    %v3164 = vunpack.c.l.b16 %v3123
    %v3165 = vunpack.c.h.b16 %v3123
    %v3166 = vunpack.c.l.b16 %v3124
    %v3167 = vunpack.c.l.b16 %v3125
    %v3168 = vunpack.c.h.b16 %v3125
    %v3169 = vunpack.c.l.b16 %v3126
    %v3170 = vpack.c.b16 %v3149, %v3146
    %v3171 = vpack.c.b16 %v3150, %v3147
    %v3172 = vpack.c.b16 %v3151, %v3148
    %v3173 = vpack.c.b16 %v3155, %v3152
    %v3174 = vpack.c.b16 %v3156, %v3153
    %v3175 = vpack.c.b16 %v3157, %v3154
    %v3176 = vpack.c.b16 %v3161, %v3158
    %v3177 = vpack.c.b16 %v3162, %v3159
    %v3178 = vpack.c.b16 %v3163, %v3160
    %v3179 = vpack.c.b16 %v3167, %v3164
    %v3180 = vpack.c.b16 %v3168, %v3165
    %v3181 = vpack.c.b16 %v3169, %v3166
    %v3195 = vsel %vm296, %v3129, 0
    %3197 = vmatprep.subr.bf16.mxu0 0
    %3198 = vmatpush1.bf16.msra.mxu0 0
    %3199 = vmatprep.subr.bf16.mxu0 0
    %3200 = vmatpush1.bf16.msra.mxu0 0
    %3201 = vmatprep.subr.bf16.mxu0 0
    %3202 = vmatpush1.bf16.msra.mxu0 0
    %3203 = vmatprep.subr.bf16.mxu0 0
    %3204 = vmatpush1.bf16.msra.mxu0 0
    %3205 = vmatprep.subr.bf16.mxu0 %v3180
    %3206 = vmatpush1.bf16.msra.mxu0 %v3179
    %3207 = vmatprep.subr.bf16.mxu0 %v3177
    %3208 = vmatpush1.bf16.msra.mxu0 %v3176
    %3209 = vmatprep.subr.bf16.mxu0 %v3174
    %3210 = vmatpush1.bf16.msra.mxu0 %v3173
    %3211 = vmatprep.subr.bf16.mxu0 %v3171
    %3212 = vmatpush1.bf16.msra.mxu0 %v3170
    %3213 = vmatprep.subr.bf16.mxu0 0
    %3214 = vmatpush2.bf16.msra.mxu0 0
    %3215 = vmatprep.subr.bf16.mxu0 0
    %3216 = vmatpush2.bf16.msra.mxu0 0
    %3217 = vmatprep.subr.bf16.mxu0 0
    %3218 = vmatpush2.bf16.msra.mxu0 0
    %3219 = vmatprep.subr.bf16.mxu0 0
    %3220 = vmatpush2.bf16.msra.mxu0 0
    %3221 = vmatprep.subr.bf16.mxu0 0
    %3222 = vmatpush2.bf16.msra.mxu0 0
    %3223 = vmatprep.subr.bf16.mxu0 0
    %3224 = vmatpush2.bf16.msra.mxu0 0
    %3225 = vmatprep.subr.bf16.mxu0 0
    %3226 = vmatpush2.bf16.msra.mxu0 0
    %3227 = vmatprep.subr.bf16.mxu0 0
    %3228 = vmatpush2.bf16.msra.mxu0 0
    %3229 = vmatprep.mubr.bf16.mxu0 0
    %3230 = vmatmul.mubr.bf16.gmra.mxu0 %v3195
    %v3231 = vpop.f32.mrf.mxu0
    %v3232 = vadd.f32 0.0, %v3231
    %v3233 = vpop.f32.mrf.mxu0
    %v3234 = vadd.f32 0.0, %v3233
    %v3235 = vpop.f32.mrf.mxu0
    %v3236 = vpop.f32.mrf.mxu0
    %3237 = vdwg.mxu0
    %3238 = vmatprep.subr.bf16.mxu0 0
    %3239 = vmatpush1.bf16.msra.mxu0 0
    %3240 = vmatprep.subr.bf16.mxu0 0
    %3241 = vmatpush1.bf16.msra.mxu0 0
    %3242 = vmatprep.subr.bf16.mxu0 0
    %3243 = vmatpush1.bf16.msra.mxu0 0
    %3244 = vmatprep.subr.bf16.mxu0 0
    %3245 = vmatpush1.bf16.msra.mxu0 0
    %3246 = vmatprep.subr.bf16.mxu0 0
    %3247 = vmatpush1.bf16.msra.mxu0 %v3181
    %3248 = vmatprep.subr.bf16.mxu0 0
    %3249 = vmatpush1.bf16.msra.mxu0 %v3178
    %3250 = vmatprep.subr.bf16.mxu0 0
    %3251 = vmatpush1.bf16.msra.mxu0 %v3175
    %3252 = vmatprep.subr.bf16.mxu0 0
    %3253 = vmatpush1.bf16.msra.mxu0 %v3172
    %3254 = vmatprep.subr.bf16.mxu0 0
    %3255 = vmatpush2.bf16.msra.mxu0 0
    %3256 = vmatprep.subr.bf16.mxu0 0
    %3257 = vmatpush2.bf16.msra.mxu0 0
    %3258 = vmatprep.subr.bf16.mxu0 0
    %3259 = vmatpush2.bf16.msra.mxu0 0
    %3260 = vmatprep.subr.bf16.mxu0 0
    %3261 = vmatpush2.bf16.msra.mxu0 0
    %3262 = vmatprep.subr.bf16.mxu0 0
    %3263 = vmatpush2.bf16.msra.mxu0 0
    %3264 = vmatprep.subr.bf16.mxu0 0
    %3265 = vmatpush2.bf16.msra.mxu0 0
    %3266 = vmatprep.subr.bf16.mxu0 0
    %3267 = vmatpush2.bf16.msra.mxu0 0
    %3268 = vmatprep.subr.bf16.mxu0 0
    %3269 = vmatpush2.bf16.msra.mxu0 0
    %3270 = vmatprep.mubr.bf16.mxu0 0
    %3271 = vmatmul.mubr.bf16.gmra.mxu0 %v3195
    %v3272 = vpop.f32.mrf.mxu0
    %v3273 = vadd.f32 0.0, %v3272
    %v3274 = vpop.f32.mrf.mxu0
    %v3275 = vpop.f32.mrf.mxu0
    %v3276 = vpop.f32.mrf.mxu0
    %3277 = vdwg.mxu0
    %v3278 = vadd.f32 %v2965, %v3273
    %v3279 = vld [vmem:[#allocation2 + $0x70] sm:$0xff]
    %v3280 = vld [vmem:[#allocation2 + $0x78] sm:$0xff]
    %v3281 = vadd.f32 %v3279, %v3035
    %v3282 = vadd.f32 %v3280, %v3037
    %v3283 = vxor.u32 %v3281, 2147483648
    %v3284 = vxor.u32 %v3282, 2147483648
    %v3285 = vmul.f32 %v3283, 1.442695
    %v3286 = vpow.pop %v3285
    %v3287 = vmul.f32 %v3284, 1.442695
    %v3288 = vpow.pop %v3287
    %v3289 = vadd.f32 %v3286, 1.0
    %v3290 = vadd.f32 %v3288, 1.0
    %v3291 = vrcp.pop %v3289
    %v3292 = vmul.f32 1.0, %v3291
    %v3293 = vrcp.pop %v3290
    %v3294 = vmul.f32 1.0, %v3293
    %v3295 = vmul.f32 %v3294, 2.0
    %v3296 = vsub.f32 %v3295, 1.0
    %v3297 = vmul.f32 %v3292, %v2990
    %v3298 = vmul.f32 %v3292, %v3296
    %3300 = vrot.lane.b32.xlu0 %v3298, 64
    %v3301 = vpop.permute.xlu0 %3300
    %v3303 = vadd.f32 %v3297, %v3301
    %v3304 = vtanh.pop %v3303
    %v3305 = vmul.f32 %v3294, %v3304
    %v3306 = vpack.c.bf16 %v3305, %v3305
    %3308 = vrot.lane.b32.xlu0 %v3306, 64
    %v3309 = vpop.permute.xlu0 %3308
    %v3311 = vsel %vm296, %v3309, 0
    %3313 = vmatprep.subr.bf16.mxu0 0
    %3314 = vmatpush1.bf16.msra.mxu0 0
    %3315 = vmatprep.subr.bf16.mxu0 0
    %3316 = vmatpush1.bf16.msra.mxu0 0
    %3317 = vmatprep.subr.bf16.mxu0 0
    %3318 = vmatpush1.bf16.msra.mxu0 0
    %3319 = vmatprep.subr.bf16.mxu0 0
    %3320 = vmatpush1.bf16.msra.mxu0 0
    %3321 = vmatprep.subr.bf16.mxu0 %v1089
    %3322 = vmatpush1.bf16.msra.mxu0 %v1088
    %3323 = vmatprep.subr.bf16.mxu0 %v1085
    %3324 = vmatpush1.bf16.msra.mxu0 %v1084
    %3325 = vmatprep.subr.bf16.mxu0 %v1081
    %3326 = vmatpush1.bf16.msra.mxu0 %v1080
    %3327 = vmatprep.subr.bf16.mxu0 %v1077
    %3328 = vmatpush1.bf16.msra.mxu0 %v1076
    %3329 = vmatprep.subr.bf16.mxu0 0
    %3330 = vmatpush2.bf16.msra.mxu0 0
    %3331 = vmatprep.subr.bf16.mxu0 0
    %3332 = vmatpush2.bf16.msra.mxu0 0
    %3333 = vmatprep.subr.bf16.mxu0 0
    %3334 = vmatpush2.bf16.msra.mxu0 0
    %3335 = vmatprep.subr.bf16.mxu0 0
    %3336 = vmatpush2.bf16.msra.mxu0 0
    %3337 = vmatprep.subr.bf16.mxu0 0
    %3338 = vmatpush2.bf16.msra.mxu0 0
    %3339 = vmatprep.subr.bf16.mxu0 0
    %3340 = vmatpush2.bf16.msra.mxu0 0
    %3341 = vmatprep.subr.bf16.mxu0 0
    %3342 = vmatpush2.bf16.msra.mxu0 0
    %3343 = vmatprep.subr.bf16.mxu0 0
    %3344 = vmatpush2.bf16.msra.mxu0 0
    %3345 = vmatprep.mubr.bf16.mxu0 0
    %3346 = vmatmul.mubr.bf16.gmra.mxu0 %v3311
    %v3347 = vpop.f32.mrf.mxu0
    %v3348 = vadd.f32 0.0, %v3347
    %v3349 = vpop.f32.mrf.mxu0
    %v3350 = vadd.f32 0.0, %v3349
    %v3351 = vpop.f32.mrf.mxu0
    %v3352 = vpop.f32.mrf.mxu0
    %3353 = vdwg.mxu0
    %3354 = vmatprep.subr.bf16.mxu0 0
    %3355 = vmatpush1.bf16.msra.mxu0 0
    %3356 = vmatprep.subr.bf16.mxu0 0
    %3357 = vmatpush1.bf16.msra.mxu0 0
    %3358 = vmatprep.subr.bf16.mxu0 0
    %3359 = vmatpush1.bf16.msra.mxu0 0
    %3360 = vmatprep.subr.bf16.mxu0 0
    %3361 = vmatpush1.bf16.msra.mxu0 0
    %3362 = vmatprep.subr.bf16.mxu0 %v1091
    %3363 = vmatpush1.bf16.msra.mxu0 %v1090
    %3364 = vmatprep.subr.bf16.mxu0 %v1087
    %3365 = vmatpush1.bf16.msra.mxu0 %v1086
    %3366 = vmatprep.subr.bf16.mxu0 %v1083
    %3367 = vmatpush1.bf16.msra.mxu0 %v1082
    %3368 = vmatprep.subr.bf16.mxu0 %v1079
    %3369 = vmatpush1.bf16.msra.mxu0 %v1078
    %3370 = vmatprep.subr.bf16.mxu0 0
    %3371 = vmatpush2.bf16.msra.mxu0 0
    %3372 = vmatprep.subr.bf16.mxu0 0
    %3373 = vmatpush2.bf16.msra.mxu0 0
    %3374 = vmatprep.subr.bf16.mxu0 0
    %3375 = vmatpush2.bf16.msra.mxu0 0
    %3376 = vmatprep.subr.bf16.mxu0 0
    %3377 = vmatpush2.bf16.msra.mxu0 0
    %3378 = vmatprep.subr.bf16.mxu0 0
    %3379 = vmatpush2.bf16.msra.mxu0 0
    %3380 = vmatprep.subr.bf16.mxu0 0
    %3381 = vmatpush2.bf16.msra.mxu0 0
    %3382 = vmatprep.subr.bf16.mxu0 0
    %3383 = vmatpush2.bf16.msra.mxu0 0
    %3384 = vmatprep.subr.bf16.mxu0 0
    %3385 = vmatpush2.bf16.msra.mxu0 0
    %3386 = vmatprep.mubr.bf16.mxu0 0
    %3387 = vmatmul.mubr.bf16.gmra.mxu0 %v3311
    %v3388 = vpop.f32.mrf.mxu0
    %v3389 = vadd.f32 0.0, %v3388
    %v3390 = vpop.f32.mrf.mxu0
    %v3391 = vadd.f32 0.0, %v3390
    %v3392 = vpop.f32.mrf.mxu0
    %v3393 = vpop.f32.mrf.mxu0
    %3394 = vdwg.mxu0
    %v3395 = vadd.f32 %v1198, %v3389
    %v3396 = vadd.f32 %v1202, %v3391
    %v3397 = vadd.f32 %v3395, %v3232
    %v3398 = vadd.f32 %v3396, %v3234
    %v3399 = vxor.u32 %v3397, 2147483648
    %v3400 = vxor.u32 %v3398, 2147483648
    %v3401 = vmul.f32 %v3399, 1.442695
    %v3402 = vpow.pop %v3401
    %v3403 = vmul.f32 %v3400, 1.442695
    %v3404 = vpow.pop %v3403
    %v3405 = vadd.f32 %v3402, 1.0
    %v3406 = vadd.f32 %v3404, 1.0
    %v3407 = vrcp.pop %v3405
    %v3408 = vmul.f32 1.0, %v3407
    %v3409 = vrcp.pop %v3406
    %v3410 = vmul.f32 1.0, %v3409
    %v3411 = vmul.f32 %v3410, 2.0
    %v3412 = vsub.f32 %v3411, 1.0
    %v3413 = vmul.f32 %v3408, %v3106
    %v3414 = vmul.f32 %v3408, %v3412
    %3416 = vrot.lane.b32.xlu0 %v3414, 64
    %v3417 = vpop.permute.xlu0 %3416
    %v3419 = vadd.f32 %v3413, %v3417
    %v3420 = vtanh.pop %v3419
    %v3421 = vmul.f32 %v3410, %v3420
    %v3422 = vpack.c.bf16 %v3421, %v3421
    %s3423 = scalar_lea.vmem [#allocation4], 672
    %v3424 = vld [vmem:[%s3423] sm:$0xff]
    %v3425 = vld [vmem:[%s3423 + $0x8] sm:$0xf]
    %v3426 = vld [vmem:[%s3423 + $0xc] sm:$0xff]
    %v3427 = vld [vmem:[%s3423 + $0x14] sm:$0xf]
    %v3428 = vld [vmem:[%s3423 + $0x18] sm:$0xff]
    %v3429 = vld [vmem:[%s3423 + $0x20] sm:$0xf]
    %v3430 = vld [vmem:[%s3423 + $0x24] sm:$0xff]
    %v3431 = vld [vmem:[%s3423 + $0x2c] sm:$0xf]
    %v3432 = vld [vmem:[%s3423 + $0x30] sm:$0xff]
    %v3433 = vld [vmem:[%s3423 + $0x38] sm:$0xf]
    %v3434 = vld [vmem:[%s3423 + $0x3c] sm:$0xff]
    %v3435 = vld [vmem:[%s3423 + $0x44] sm:$0xf]
    %v3436 = vld [vmem:[%s3423 + $0x48] sm:$0xff]
    %v3437 = vld [vmem:[%s3423 + $0x50] sm:$0xf]
    %v3438 = vld [vmem:[%s3423 + $0x54] sm:$0xff]
    %v3439 = vld [vmem:[%s3423 + $0x5c] sm:$0xf]
    %3441 = vrot.lane.b32.xlu0 %v3422, 64
    %v3442 = vpop.permute.xlu0 %3441
    %v3459 = vunpack.c.l.b16 %v3424
    %v3460 = vunpack.c.h.b16 %v3424
    %v3461 = vunpack.c.l.b16 %v3425
    %v3462 = vunpack.c.l.b16 %v3426
    %v3463 = vunpack.c.h.b16 %v3426
    %v3464 = vunpack.c.l.b16 %v3427
    %v3465 = vunpack.c.l.b16 %v3428
    %v3466 = vunpack.c.h.b16 %v3428
    %v3467 = vunpack.c.l.b16 %v3429
    %v3468 = vunpack.c.l.b16 %v3430
    %v3469 = vunpack.c.h.b16 %v3430
    %v3470 = vunpack.c.l.b16 %v3431
    %v3471 = vunpack.c.l.b16 %v3432
    %v3472 = vunpack.c.h.b16 %v3432
    %v3473 = vunpack.c.l.b16 %v3433
    %v3474 = vunpack.c.l.b16 %v3434
    %v3475 = vunpack.c.h.b16 %v3434
    %v3476 = vunpack.c.l.b16 %v3435
    %v3477 = vunpack.c.l.b16 %v3436
    %v3478 = vunpack.c.h.b16 %v3436
    %v3479 = vunpack.c.l.b16 %v3437
    %v3480 = vunpack.c.l.b16 %v3438
    %v3481 = vunpack.c.h.b16 %v3438
    %v3482 = vunpack.c.l.b16 %v3439
    %v3483 = vpack.c.b16 %v3462, %v3459
    %v3484 = vpack.c.b16 %v3463, %v3460
    %v3485 = vpack.c.b16 %v3464, %v3461
    %v3486 = vpack.c.b16 %v3468, %v3465
    %v3487 = vpack.c.b16 %v3469, %v3466
    %v3488 = vpack.c.b16 %v3470, %v3467
    %v3489 = vpack.c.b16 %v3474, %v3471
    %v3490 = vpack.c.b16 %v3475, %v3472
    %v3491 = vpack.c.b16 %v3476, %v3473
    %v3492 = vpack.c.b16 %v3480, %v3477
    %v3493 = vpack.c.b16 %v3481, %v3478
    %v3494 = vpack.c.b16 %v3482, %v3479
    %v3508 = vsel %vm296, %v3442, 0
    %3510 = vmatprep.subr.bf16.mxu0 0
    %3511 = vmatpush1.bf16.msra.mxu0 0
    %3512 = vmatprep.subr.bf16.mxu0 0
    %3513 = vmatpush1.bf16.msra.mxu0 0
    %3514 = vmatprep.subr.bf16.mxu0 0
    %3515 = vmatpush1.bf16.msra.mxu0 0
    %3516 = vmatprep.subr.bf16.mxu0 0
    %3517 = vmatpush1.bf16.msra.mxu0 0
    %3518 = vmatprep.subr.bf16.mxu0 %v3493
    %3519 = vmatpush1.bf16.msra.mxu0 %v3492
    %3520 = vmatprep.subr.bf16.mxu0 %v3490
    %3521 = vmatpush1.bf16.msra.mxu0 %v3489
    %3522 = vmatprep.subr.bf16.mxu0 %v3487
    %3523 = vmatpush1.bf16.msra.mxu0 %v3486
    %3524 = vmatprep.subr.bf16.mxu0 %v3484
    %3525 = vmatpush1.bf16.msra.mxu0 %v3483
    %3526 = vmatprep.subr.bf16.mxu0 0
    %3527 = vmatpush2.bf16.msra.mxu0 0
    %3528 = vmatprep.subr.bf16.mxu0 0
    %3529 = vmatpush2.bf16.msra.mxu0 0
    %3530 = vmatprep.subr.bf16.mxu0 0
    %3531 = vmatpush2.bf16.msra.mxu0 0
    %3532 = vmatprep.subr.bf16.mxu0 0
    %3533 = vmatpush2.bf16.msra.mxu0 0
    %3534 = vmatprep.subr.bf16.mxu0 0
    %3535 = vmatpush2.bf16.msra.mxu0 0
    %3536 = vmatprep.subr.bf16.mxu0 0
    %3537 = vmatpush2.bf16.msra.mxu0 0
    %3538 = vmatprep.subr.bf16.mxu0 0
    %3539 = vmatpush2.bf16.msra.mxu0 0
    %3540 = vmatprep.subr.bf16.mxu0 0
    %3541 = vmatpush2.bf16.msra.mxu0 0
    %3542 = vmatprep.mubr.bf16.mxu0 0
    %3543 = vmatmul.mubr.bf16.gmra.mxu0 %v3508
    %v3544 = vpop.f32.mrf.mxu0
    %v3545 = vadd.f32 0.0, %v3544
    %v3546 = vpop.f32.mrf.mxu0
    %v3547 = vadd.f32 0.0, %v3546
    %v3548 = vpop.f32.mrf.mxu0
    %v3549 = vpop.f32.mrf.mxu0
    %3550 = vdwg.mxu0
    %3551 = vmatprep.subr.bf16.mxu0 0
    %3552 = vmatpush1.bf16.msra.mxu0 0
    %3553 = vmatprep.subr.bf16.mxu0 0
    %3554 = vmatpush1.bf16.msra.mxu0 0
    %3555 = vmatprep.subr.bf16.mxu0 0
    %3556 = vmatpush1.bf16.msra.mxu0 0
    %3557 = vmatprep.subr.bf16.mxu0 0
    %3558 = vmatpush1.bf16.msra.mxu0 0
    %3559 = vmatprep.subr.bf16.mxu0 0
    %3560 = vmatpush1.bf16.msra.mxu0 %v3494
    %3561 = vmatprep.subr.bf16.mxu0 0
    %3562 = vmatpush1.bf16.msra.mxu0 %v3491
    %3563 = vmatprep.subr.bf16.mxu0 0
    %3564 = vmatpush1.bf16.msra.mxu0 %v3488
    %3565 = vmatprep.subr.bf16.mxu0 0
    %3566 = vmatpush1.bf16.msra.mxu0 %v3485
    %3567 = vmatprep.subr.bf16.mxu0 0
    %3568 = vmatpush2.bf16.msra.mxu0 0
    %3569 = vmatprep.subr.bf16.mxu0 0
    %3570 = vmatpush2.bf16.msra.mxu0 0
    %3571 = vmatprep.subr.bf16.mxu0 0
    %3572 = vmatpush2.bf16.msra.mxu0 0
    %3573 = vmatprep.subr.bf16.mxu0 0
    %3574 = vmatpush2.bf16.msra.mxu0 0
    %3575 = vmatprep.subr.bf16.mxu0 0
    %3576 = vmatpush2.bf16.msra.mxu0 0
    %3577 = vmatprep.subr.bf16.mxu0 0
    %3578 = vmatpush2.bf16.msra.mxu0 0
    %3579 = vmatprep.subr.bf16.mxu0 0
    %3580 = vmatpush2.bf16.msra.mxu0 0
    %3581 = vmatprep.subr.bf16.mxu0 0
    %3582 = vmatpush2.bf16.msra.mxu0 0
    %3583 = vmatprep.mubr.bf16.mxu0 0
    %3584 = vmatmul.mubr.bf16.gmra.mxu0 %v3508
    %v3585 = vpop.f32.mrf.mxu0
    %v3586 = vadd.f32 0.0, %v3585
    %v3587 = vpop.f32.mrf.mxu0
    %v3588 = vpop.f32.mrf.mxu0
    %v3589 = vpop.f32.mrf.mxu0
    %3590 = vdwg.mxu0
    %v3591 = vadd.f32 %v3278, %v3586
    %v3592 = vld [vmem:[#allocation2 + $0x80] sm:$0xff]
    %v3593 = vld [vmem:[#allocation2 + $0x88] sm:$0xff]
    %v3594 = vadd.f32 %v3592, %v3348
    %v3595 = vadd.f32 %v3593, %v3350
    %v3596 = vxor.u32 %v3594, 2147483648
    %v3597 = vxor.u32 %v3595, 2147483648
    %v3598 = vmul.f32 %v3596, 1.442695
    %v3599 = vpow.pop %v3598
    %v3600 = vmul.f32 %v3597, 1.442695
    %v3601 = vpow.pop %v3600
    %v3602 = vadd.f32 %v3599, 1.0
    %v3603 = vadd.f32 %v3601, 1.0
    %v3604 = vrcp.pop %v3602
    %v3605 = vmul.f32 1.0, %v3604
    %v3606 = vrcp.pop %v3603
    %v3607 = vmul.f32 1.0, %v3606
    %v3608 = vmul.f32 %v3607, 2.0
    %v3609 = vsub.f32 %v3608, 1.0
    %v3610 = vmul.f32 %v3605, %v3303
    %v3611 = vmul.f32 %v3605, %v3609
    %3613 = vrot.lane.b32.xlu0 %v3611, 64
    %v3614 = vpop.permute.xlu0 %3613
    %v3616 = vadd.f32 %v3610, %v3614
    %v3617 = vtanh.pop %v3616
    %v3618 = vmul.f32 %v3607, %v3617
    %v3619 = vpack.c.bf16 %v3618, %v3618
    %3621 = vrot.lane.b32.xlu0 %v3619, 64
    %v3622 = vpop.permute.xlu0 %3621
    %v3624 = vsel %vm296, %v3622, 0
    %3626 = vmatprep.subr.bf16.mxu0 0
    %3627 = vmatpush1.bf16.msra.mxu0 0
    %3628 = vmatprep.subr.bf16.mxu0 0
    %3629 = vmatpush1.bf16.msra.mxu0 0
    %3630 = vmatprep.subr.bf16.mxu0 0
    %3631 = vmatpush1.bf16.msra.mxu0 0
    %3632 = vmatprep.subr.bf16.mxu0 0
    %3633 = vmatpush1.bf16.msra.mxu0 0
    %3634 = vmatprep.subr.bf16.mxu0 %v1089
    %3635 = vmatpush1.bf16.msra.mxu0 %v1088
    %3636 = vmatprep.subr.bf16.mxu0 %v1085
    %3637 = vmatpush1.bf16.msra.mxu0 %v1084
    %3638 = vmatprep.subr.bf16.mxu0 %v1081
    %3639 = vmatpush1.bf16.msra.mxu0 %v1080
    %3640 = vmatprep.subr.bf16.mxu0 %v1077
    %3641 = vmatpush1.bf16.msra.mxu0 %v1076
    %3642 = vmatprep.subr.bf16.mxu0 0
    %3643 = vmatpush2.bf16.msra.mxu0 0
    %3644 = vmatprep.subr.bf16.mxu0 0
    %3645 = vmatpush2.bf16.msra.mxu0 0
    %3646 = vmatprep.subr.bf16.mxu0 0
    %3647 = vmatpush2.bf16.msra.mxu0 0
    %3648 = vmatprep.subr.bf16.mxu0 0
    %3649 = vmatpush2.bf16.msra.mxu0 0
    %3650 = vmatprep.subr.bf16.mxu0 0
    %3651 = vmatpush2.bf16.msra.mxu0 0
    %3652 = vmatprep.subr.bf16.mxu0 0
    %3653 = vmatpush2.bf16.msra.mxu0 0
    %3654 = vmatprep.subr.bf16.mxu0 0
    %3655 = vmatpush2.bf16.msra.mxu0 0
    %3656 = vmatprep.subr.bf16.mxu0 0
    %3657 = vmatpush2.bf16.msra.mxu0 0
    %3658 = vmatprep.mubr.bf16.mxu0 0
    %3659 = vmatmul.mubr.bf16.gmra.mxu0 %v3624
    %v3660 = vpop.f32.mrf.mxu0
    %v3661 = vadd.f32 0.0, %v3660
    %v3662 = vpop.f32.mrf.mxu0
    %v3663 = vadd.f32 0.0, %v3662
    %v3664 = vpop.f32.mrf.mxu0
    %v3665 = vpop.f32.mrf.mxu0
    %3666 = vdwg.mxu0
    %3667 = vmatprep.subr.bf16.mxu0 0
    %3668 = vmatpush1.bf16.msra.mxu0 0
    %3669 = vmatprep.subr.bf16.mxu0 0
    %3670 = vmatpush1.bf16.msra.mxu0 0
    %3671 = vmatprep.subr.bf16.mxu0 0
    %3672 = vmatpush1.bf16.msra.mxu0 0
    %3673 = vmatprep.subr.bf16.mxu0 0
    %3674 = vmatpush1.bf16.msra.mxu0 0
    %3675 = vmatprep.subr.bf16.mxu0 %v1091
    %3676 = vmatpush1.bf16.msra.mxu0 %v1090
    %3677 = vmatprep.subr.bf16.mxu0 %v1087
    %3678 = vmatpush1.bf16.msra.mxu0 %v1086
    %3679 = vmatprep.subr.bf16.mxu0 %v1083
    %3680 = vmatpush1.bf16.msra.mxu0 %v1082
    %3681 = vmatprep.subr.bf16.mxu0 %v1079
    %3682 = vmatpush1.bf16.msra.mxu0 %v1078
    %3683 = vmatprep.subr.bf16.mxu0 0
    %3684 = vmatpush2.bf16.msra.mxu0 0
    %3685 = vmatprep.subr.bf16.mxu0 0
    %3686 = vmatpush2.bf16.msra.mxu0 0
    %3687 = vmatprep.subr.bf16.mxu0 0
    %3688 = vmatpush2.bf16.msra.mxu0 0
    %3689 = vmatprep.subr.bf16.mxu0 0
    %3690 = vmatpush2.bf16.msra.mxu0 0
    %3691 = vmatprep.subr.bf16.mxu0 0
    %3692 = vmatpush2.bf16.msra.mxu0 0
    %3693 = vmatprep.subr.bf16.mxu0 0
    %3694 = vmatpush2.bf16.msra.mxu0 0
    %3695 = vmatprep.subr.bf16.mxu0 0
    %3696 = vmatpush2.bf16.msra.mxu0 0
    %3697 = vmatprep.subr.bf16.mxu0 0
    %3698 = vmatpush2.bf16.msra.mxu0 0
    %3699 = vmatprep.mubr.bf16.mxu0 0
    %3700 = vmatmul.mubr.bf16.gmra.mxu0 %v3624
    %v3701 = vpop.f32.mrf.mxu0
    %v3702 = vadd.f32 0.0, %v3701
    %v3703 = vpop.f32.mrf.mxu0
    %v3704 = vadd.f32 0.0, %v3703
    %v3705 = vpop.f32.mrf.mxu0
    %v3706 = vpop.f32.mrf.mxu0
    %3707 = vdwg.mxu0
    %v3708 = vadd.f32 %v1198, %v3702
    %v3709 = vadd.f32 %v1202, %v3704
    %v3710 = vadd.f32 %v3708, %v3545
    %v3711 = vadd.f32 %v3709, %v3547
    %v3712 = vxor.u32 %v3710, 2147483648
    %v3713 = vxor.u32 %v3711, 2147483648
    %v3714 = vmul.f32 %v3712, 1.442695
    %v3715 = vpow.pop %v3714
    %v3716 = vmul.f32 %v3713, 1.442695
    %v3717 = vpow.pop %v3716
    %v3718 = vadd.f32 %v3715, 1.0
    %v3719 = vadd.f32 %v3717, 1.0
    %v3720 = vrcp.pop %v3718
    %v3721 = vmul.f32 1.0, %v3720
    %v3722 = vrcp.pop %v3719
    %v3723 = vmul.f32 1.0, %v3722
    %v3724 = vmul.f32 %v3723, 2.0
    %v3725 = vsub.f32 %v3724, 1.0
    %v3726 = vmul.f32 %v3721, %v3419
    %v3727 = vmul.f32 %v3721, %v3725
    %3729 = vrot.lane.b32.xlu0 %v3727, 64
    %v3730 = vpop.permute.xlu0 %3729
    %v3732 = vadd.f32 %v3726, %v3730
    %v3733 = vtanh.pop %v3732
    %v3734 = vmul.f32 %v3723, %v3733
    %v3735 = vpack.c.bf16 %v3734, %v3734
    %s3736 = scalar_lea.vmem [#allocation4], 768
    %v3737 = vld [vmem:[%s3736] sm:$0xff]
    %v3738 = vld [vmem:[%s3736 + $0x8] sm:$0xf]
    %v3739 = vld [vmem:[%s3736 + $0xc] sm:$0xff]
    %v3740 = vld [vmem:[%s3736 + $0x14] sm:$0xf]
    %v3741 = vld [vmem:[%s3736 + $0x18] sm:$0xff]
    %v3742 = vld [vmem:[%s3736 + $0x20] sm:$0xf]
    %v3743 = vld [vmem:[%s3736 + $0x24] sm:$0xff]
    %v3744 = vld [vmem:[%s3736 + $0x2c] sm:$0xf]
    %v3745 = vld [vmem:[%s3736 + $0x30] sm:$0xff]
    %v3746 = vld [vmem:[%s3736 + $0x38] sm:$0xf]
    %v3747 = vld [vmem:[%s3736 + $0x3c] sm:$0xff]
    %v3748 = vld [vmem:[%s3736 + $0x44] sm:$0xf]
    %v3749 = vld [vmem:[%s3736 + $0x48] sm:$0xff]
    %v3750 = vld [vmem:[%s3736 + $0x50] sm:$0xf]
    %v3751 = vld [vmem:[%s3736 + $0x54] sm:$0xff]
    %v3752 = vld [vmem:[%s3736 + $0x5c] sm:$0xf]
    %3754 = vrot.lane.b32.xlu0 %v3735, 64
    %v3755 = vpop.permute.xlu0 %3754
    %v3772 = vunpack.c.l.b16 %v3737
    %v3773 = vunpack.c.h.b16 %v3737
    %v3774 = vunpack.c.l.b16 %v3738
    %v3775 = vunpack.c.l.b16 %v3739
    %v3776 = vunpack.c.h.b16 %v3739
    %v3777 = vunpack.c.l.b16 %v3740
    %v3778 = vunpack.c.l.b16 %v3741
    %v3779 = vunpack.c.h.b16 %v3741
    %v3780 = vunpack.c.l.b16 %v3742
    %v3781 = vunpack.c.l.b16 %v3743
    %v3782 = vunpack.c.h.b16 %v3743
    %v3783 = vunpack.c.l.b16 %v3744
    %v3784 = vunpack.c.l.b16 %v3745
    %v3785 = vunpack.c.h.b16 %v3745
    %v3786 = vunpack.c.l.b16 %v3746
    %v3787 = vunpack.c.l.b16 %v3747
    %v3788 = vunpack.c.h.b16 %v3747
    %v3789 = vunpack.c.l.b16 %v3748
    %v3790 = vunpack.c.l.b16 %v3749
    %v3791 = vunpack.c.h.b16 %v3749
    %v3792 = vunpack.c.l.b16 %v3750
    %v3793 = vunpack.c.l.b16 %v3751
    %v3794 = vunpack.c.h.b16 %v3751
    %v3795 = vunpack.c.l.b16 %v3752
    %v3796 = vpack.c.b16 %v3775, %v3772
    %v3797 = vpack.c.b16 %v3776, %v3773
    %v3798 = vpack.c.b16 %v3777, %v3774
    %v3799 = vpack.c.b16 %v3781, %v3778
    %v3800 = vpack.c.b16 %v3782, %v3779
    %v3801 = vpack.c.b16 %v3783, %v3780
    %v3802 = vpack.c.b16 %v3787, %v3784
    %v3803 = vpack.c.b16 %v3788, %v3785
    %v3804 = vpack.c.b16 %v3789, %v3786
    %v3805 = vpack.c.b16 %v3793, %v3790
    %v3806 = vpack.c.b16 %v3794, %v3791
    %v3807 = vpack.c.b16 %v3795, %v3792
    %v3821 = vsel %vm296, %v3755, 0
    %3823 = vmatprep.subr.bf16.mxu0 0
    %3824 = vmatpush1.bf16.msra.mxu0 0
    %3825 = vmatprep.subr.bf16.mxu0 0
    %3826 = vmatpush1.bf16.msra.mxu0 0
    %3827 = vmatprep.subr.bf16.mxu0 0
    %3828 = vmatpush1.bf16.msra.mxu0 0
    %3829 = vmatprep.subr.bf16.mxu0 0
    %3830 = vmatpush1.bf16.msra.mxu0 0
    %3831 = vmatprep.subr.bf16.mxu0 %v3806
    %3832 = vmatpush1.bf16.msra.mxu0 %v3805
    %3833 = vmatprep.subr.bf16.mxu0 %v3803
    %3834 = vmatpush1.bf16.msra.mxu0 %v3802
    %3835 = vmatprep.subr.bf16.mxu0 %v3800
    %3836 = vmatpush1.bf16.msra.mxu0 %v3799
    %3837 = vmatprep.subr.bf16.mxu0 %v3797
    %3838 = vmatpush1.bf16.msra.mxu0 %v3796
    %3839 = vmatprep.subr.bf16.mxu0 0
    %3840 = vmatpush2.bf16.msra.mxu0 0
    %3841 = vmatprep.subr.bf16.mxu0 0
    %3842 = vmatpush2.bf16.msra.mxu0 0
    %3843 = vmatprep.subr.bf16.mxu0 0
    %3844 = vmatpush2.bf16.msra.mxu0 0
    %3845 = vmatprep.subr.bf16.mxu0 0
    %3846 = vmatpush2.bf16.msra.mxu0 0
    %3847 = vmatprep.subr.bf16.mxu0 0
    %3848 = vmatpush2.bf16.msra.mxu0 0
    %3849 = vmatprep.subr.bf16.mxu0 0
    %3850 = vmatpush2.bf16.msra.mxu0 0
    %3851 = vmatprep.subr.bf16.mxu0 0
    %3852 = vmatpush2.bf16.msra.mxu0 0
    %3853 = vmatprep.subr.bf16.mxu0 0
    %3854 = vmatpush2.bf16.msra.mxu0 0
    %3855 = vmatprep.mubr.bf16.mxu0 0
    %3856 = vmatmul.mubr.bf16.gmra.mxu0 %v3821
    %v3857 = vpop.f32.mrf.mxu0
    %v3858 = vadd.f32 0.0, %v3857
    %v3859 = vpop.f32.mrf.mxu0
    %v3860 = vadd.f32 0.0, %v3859
    %v3861 = vpop.f32.mrf.mxu0
    %v3862 = vpop.f32.mrf.mxu0
    %3863 = vdwg.mxu0
    %3864 = vmatprep.subr.bf16.mxu0 0
    %3865 = vmatpush1.bf16.msra.mxu0 0
    %3866 = vmatprep.subr.bf16.mxu0 0
    %3867 = vmatpush1.bf16.msra.mxu0 0
    %3868 = vmatprep.subr.bf16.mxu0 0
    %3869 = vmatpush1.bf16.msra.mxu0 0
    %3870 = vmatprep.subr.bf16.mxu0 0
    %3871 = vmatpush1.bf16.msra.mxu0 0
    %3872 = vmatprep.subr.bf16.mxu0 0
    %3873 = vmatpush1.bf16.msra.mxu0 %v3807
    %3874 = vmatprep.subr.bf16.mxu0 0
    %3875 = vmatpush1.bf16.msra.mxu0 %v3804
    %3876 = vmatprep.subr.bf16.mxu0 0
    %3877 = vmatpush1.bf16.msra.mxu0 %v3801
    %3878 = vmatprep.subr.bf16.mxu0 0
    %3879 = vmatpush1.bf16.msra.mxu0 %v3798
    %3880 = vmatprep.subr.bf16.mxu0 0
    %3881 = vmatpush2.bf16.msra.mxu0 0
    %3882 = vmatprep.subr.bf16.mxu0 0
    %3883 = vmatpush2.bf16.msra.mxu0 0
    %3884 = vmatprep.subr.bf16.mxu0 0
    %3885 = vmatpush2.bf16.msra.mxu0 0
    %3886 = vmatprep.subr.bf16.mxu0 0
    %3887 = vmatpush2.bf16.msra.mxu0 0
    %3888 = vmatprep.subr.bf16.mxu0 0
    %3889 = vmatpush2.bf16.msra.mxu0 0
    %3890 = vmatprep.subr.bf16.mxu0 0
    %3891 = vmatpush2.bf16.msra.mxu0 0
    %3892 = vmatprep.subr.bf16.mxu0 0
    %3893 = vmatpush2.bf16.msra.mxu0 0
    %3894 = vmatprep.subr.bf16.mxu0 0
    %3895 = vmatpush2.bf16.msra.mxu0 0
    %3896 = vmatprep.mubr.bf16.mxu0 0
    %3897 = vmatmul.mubr.bf16.gmra.mxu0 %v3821
    %v3898 = vpop.f32.mrf.mxu0
    %v3899 = vadd.f32 0.0, %v3898
    %v3900 = vpop.f32.mrf.mxu0
    %v3901 = vpop.f32.mrf.mxu0
    %v3902 = vpop.f32.mrf.mxu0
    %3903 = vdwg.mxu0
    %v3904 = vadd.f32 %v3591, %v3899
    %v3905 = vld [vmem:[#allocation2 + $0x90] sm:$0xff]
    %v3906 = vld [vmem:[#allocation2 + $0x98] sm:$0xff]
    %v3907 = vadd.f32 %v3905, %v3661
    %v3908 = vadd.f32 %v3906, %v3663
    %v3909 = vxor.u32 %v3907, 2147483648
    %v3910 = vxor.u32 %v3908, 2147483648
    %v3911 = vmul.f32 %v3909, 1.442695
    %v3912 = vpow.pop %v3911
    %v3913 = vmul.f32 %v3910, 1.442695
    %v3914 = vpow.pop %v3913
    %v3915 = vadd.f32 %v3912, 1.0
    %v3916 = vadd.f32 %v3914, 1.0
    %v3917 = vrcp.pop %v3915
    %v3918 = vmul.f32 1.0, %v3917
    %v3919 = vrcp.pop %v3916
    %v3920 = vmul.f32 1.0, %v3919
    %v3921 = vmul.f32 %v3920, 2.0
    %v3922 = vsub.f32 %v3921, 1.0
    %v3923 = vmul.f32 %v3918, %v3616
    %v3924 = vmul.f32 %v3918, %v3922
    %3926 = vrot.lane.b32.xlu0 %v3924, 64
    %v3927 = vpop.permute.xlu0 %3926
    %v3929 = vadd.f32 %v3923, %v3927
    %v3930 = vtanh.pop %v3929
    %v3931 = vmul.f32 %v3920, %v3930
    %v3932 = vpack.c.bf16 %v3931, %v3931
    %3934 = vrot.lane.b32.xlu0 %v3932, 64
    %v3935 = vpop.permute.xlu0 %3934
    %v3937 = vsel %vm296, %v3935, 0
    %3939 = vmatprep.subr.bf16.mxu0 0
    %3940 = vmatpush1.bf16.msra.mxu0 0
    %3941 = vmatprep.subr.bf16.mxu0 0
    %3942 = vmatpush1.bf16.msra.mxu0 0
    %3943 = vmatprep.subr.bf16.mxu0 0
    %3944 = vmatpush1.bf16.msra.mxu0 0
    %3945 = vmatprep.subr.bf16.mxu0 0
    %3946 = vmatpush1.bf16.msra.mxu0 0
    %3947 = vmatprep.subr.bf16.mxu0 %v1089
    %3948 = vmatpush1.bf16.msra.mxu0 %v1088
    %3949 = vmatprep.subr.bf16.mxu0 %v1085
    %3950 = vmatpush1.bf16.msra.mxu0 %v1084
    %3951 = vmatprep.subr.bf16.mxu0 %v1081
    %3952 = vmatpush1.bf16.msra.mxu0 %v1080
    %3953 = vmatprep.subr.bf16.mxu0 %v1077
    %3954 = vmatpush1.bf16.msra.mxu0 %v1076
    %3955 = vmatprep.subr.bf16.mxu0 0
    %3956 = vmatpush2.bf16.msra.mxu0 0
    %3957 = vmatprep.subr.bf16.mxu0 0
    %3958 = vmatpush2.bf16.msra.mxu0 0
    %3959 = vmatprep.subr.bf16.mxu0 0
    %3960 = vmatpush2.bf16.msra.mxu0 0
    %3961 = vmatprep.subr.bf16.mxu0 0
    %3962 = vmatpush2.bf16.msra.mxu0 0
    %3963 = vmatprep.subr.bf16.mxu0 0
    %3964 = vmatpush2.bf16.msra.mxu0 0
    %3965 = vmatprep.subr.bf16.mxu0 0
    %3966 = vmatpush2.bf16.msra.mxu0 0
    %3967 = vmatprep.subr.bf16.mxu0 0
    %3968 = vmatpush2.bf16.msra.mxu0 0
    %3969 = vmatprep.subr.bf16.mxu0 0
    %3970 = vmatpush2.bf16.msra.mxu0 0
    %3971 = vmatprep.mubr.bf16.mxu0 0
    %3972 = vmatmul.mubr.bf16.gmra.mxu0 %v3937
    %v3973 = vpop.f32.mrf.mxu0
    %v3974 = vadd.f32 0.0, %v3973
    %v3975 = vpop.f32.mrf.mxu0
    %v3976 = vadd.f32 0.0, %v3975
    %v3977 = vpop.f32.mrf.mxu0
    %v3978 = vpop.f32.mrf.mxu0
    %3979 = vdwg.mxu0
    %3980 = vmatprep.subr.bf16.mxu0 0
    %3981 = vmatpush1.bf16.msra.mxu0 0
    %3982 = vmatprep.subr.bf16.mxu0 0
    %3983 = vmatpush1.bf16.msra.mxu0 0
    %3984 = vmatprep.subr.bf16.mxu0 0
    %3985 = vmatpush1.bf16.msra.mxu0 0
    %3986 = vmatprep.subr.bf16.mxu0 0
    %3987 = vmatpush1.bf16.msra.mxu0 0
    %3988 = vmatprep.subr.bf16.mxu0 %v1091
    %3989 = vmatpush1.bf16.msra.mxu0 %v1090
    %3990 = vmatprep.subr.bf16.mxu0 %v1087
    %3991 = vmatpush1.bf16.msra.mxu0 %v1086
    %3992 = vmatprep.subr.bf16.mxu0 %v1083
    %3993 = vmatpush1.bf16.msra.mxu0 %v1082
    %3994 = vmatprep.subr.bf16.mxu0 %v1079
    %3995 = vmatpush1.bf16.msra.mxu0 %v1078
    %3996 = vmatprep.subr.bf16.mxu0 0
    %3997 = vmatpush2.bf16.msra.mxu0 0
    %3998 = vmatprep.subr.bf16.mxu0 0
    %3999 = vmatpush2.bf16.msra.mxu0 0
    %4000 = vmatprep.subr.bf16.mxu0 0
    %4001 = vmatpush2.bf16.msra.mxu0 0
    %4002 = vmatprep.subr.bf16.mxu0 0
    %4003 = vmatpush2.bf16.msra.mxu0 0
    %4004 = vmatprep.subr.bf16.mxu0 0
    %4005 = vmatpush2.bf16.msra.mxu0 0
    %4006 = vmatprep.subr.bf16.mxu0 0
    %4007 = vmatpush2.bf16.msra.mxu0 0
    %4008 = vmatprep.subr.bf16.mxu0 0
    %4009 = vmatpush2.bf16.msra.mxu0 0
    %4010 = vmatprep.subr.bf16.mxu0 0
    %4011 = vmatpush2.bf16.msra.mxu0 0
    %4012 = vmatprep.mubr.bf16.mxu0 0
    %4013 = vmatmul.mubr.bf16.gmra.mxu0 %v3937
    %v4014 = vpop.f32.mrf.mxu0
    %v4015 = vadd.f32 0.0, %v4014
    %v4016 = vpop.f32.mrf.mxu0
    %v4017 = vadd.f32 0.0, %v4016
    %v4018 = vpop.f32.mrf.mxu0
    %v4019 = vpop.f32.mrf.mxu0
    %4020 = vdwg.mxu0
    %v4021 = vadd.f32 %v1198, %v4015
    %v4022 = vadd.f32 %v1202, %v4017
    %v4023 = vadd.f32 %v4021, %v3858
    %v4024 = vadd.f32 %v4022, %v3860
    %v4025 = vxor.u32 %v4023, 2147483648
    %v4026 = vxor.u32 %v4024, 2147483648
    %v4027 = vmul.f32 %v4025, 1.442695
    %v4028 = vpow.pop %v4027
    %v4029 = vmul.f32 %v4026, 1.442695
    %v4030 = vpow.pop %v4029
    %v4031 = vadd.f32 %v4028, 1.0
    %v4032 = vadd.f32 %v4030, 1.0
    %v4033 = vrcp.pop %v4031
    %v4034 = vmul.f32 1.0, %v4033
    %v4035 = vrcp.pop %v4032
    %v4036 = vmul.f32 1.0, %v4035
    %v4037 = vmul.f32 %v4036, 2.0
    %v4038 = vsub.f32 %v4037, 1.0
    %v4039 = vmul.f32 %v4034, %v3732
    %v4040 = vmul.f32 %v4034, %v4038
    %4042 = vrot.lane.b32.xlu0 %v4040, 64
    %v4043 = vpop.permute.xlu0 %4042
    %v4045 = vadd.f32 %v4039, %v4043
    %v4046 = vtanh.pop %v4045
    %v4047 = vmul.f32 %v4036, %v4046
    %v4048 = vpack.c.bf16 %v4047, %v4047
    %s4049 = scalar_lea.vmem [#allocation4], 864
    %v4050 = vld [vmem:[%s4049] sm:$0xff]
    %v4051 = vld [vmem:[%s4049 + $0x8] sm:$0xf]
    %v4052 = vld [vmem:[%s4049 + $0xc] sm:$0xff]
    %v4053 = vld [vmem:[%s4049 + $0x14] sm:$0xf]
    %v4054 = vld [vmem:[%s4049 + $0x18] sm:$0xff]
    %v4055 = vld [vmem:[%s4049 + $0x20] sm:$0xf]
    %v4056 = vld [vmem:[%s4049 + $0x24] sm:$0xff]
    %v4057 = vld [vmem:[%s4049 + $0x2c] sm:$0xf]
    %v4058 = vld [vmem:[%s4049 + $0x30] sm:$0xff]
    %v4059 = vld [vmem:[%s4049 + $0x38] sm:$0xf]
    %v4060 = vld [vmem:[%s4049 + $0x3c] sm:$0xff]
    %v4061 = vld [vmem:[%s4049 + $0x44] sm:$0xf]
    %v4062 = vld [vmem:[%s4049 + $0x48] sm:$0xff]
    %v4063 = vld [vmem:[%s4049 + $0x50] sm:$0xf]
    %v4064 = vld [vmem:[%s4049 + $0x54] sm:$0xff]
    %v4065 = vld [vmem:[%s4049 + $0x5c] sm:$0xf]
    %4067 = vrot.lane.b32.xlu0 %v4048, 64
    %v4068 = vpop.permute.xlu0 %4067
    %v4085 = vunpack.c.l.b16 %v4050
    %v4086 = vunpack.c.h.b16 %v4050
    %v4087 = vunpack.c.l.b16 %v4051
    %v4088 = vunpack.c.l.b16 %v4052
    %v4089 = vunpack.c.h.b16 %v4052
    %v4090 = vunpack.c.l.b16 %v4053
    %v4091 = vunpack.c.l.b16 %v4054
    %v4092 = vunpack.c.h.b16 %v4054
    %v4093 = vunpack.c.l.b16 %v4055
    %v4094 = vunpack.c.l.b16 %v4056
    %v4095 = vunpack.c.h.b16 %v4056
    %v4096 = vunpack.c.l.b16 %v4057
    %v4097 = vunpack.c.l.b16 %v4058
    %v4098 = vunpack.c.h.b16 %v4058
    %v4099 = vunpack.c.l.b16 %v4059
    %v4100 = vunpack.c.l.b16 %v4060
    %v4101 = vunpack.c.h.b16 %v4060
    %v4102 = vunpack.c.l.b16 %v4061
    %v4103 = vunpack.c.l.b16 %v4062
    %v4104 = vunpack.c.h.b16 %v4062
    %v4105 = vunpack.c.l.b16 %v4063
    %v4106 = vunpack.c.l.b16 %v4064
    %v4107 = vunpack.c.h.b16 %v4064
    %v4108 = vunpack.c.l.b16 %v4065
    %v4109 = vpack.c.b16 %v4088, %v4085
    %v4110 = vpack.c.b16 %v4089, %v4086
    %v4111 = vpack.c.b16 %v4090, %v4087
    %v4112 = vpack.c.b16 %v4094, %v4091
    %v4113 = vpack.c.b16 %v4095, %v4092
    %v4114 = vpack.c.b16 %v4096, %v4093
    %v4115 = vpack.c.b16 %v4100, %v4097
    %v4116 = vpack.c.b16 %v4101, %v4098
    %v4117 = vpack.c.b16 %v4102, %v4099
    %v4118 = vpack.c.b16 %v4106, %v4103
    %v4119 = vpack.c.b16 %v4107, %v4104
    %v4120 = vpack.c.b16 %v4108, %v4105
    %v4134 = vsel %vm296, %v4068, 0
    %4136 = vmatprep.subr.bf16.mxu0 0
    %4137 = vmatpush1.bf16.msra.mxu0 0
    %4138 = vmatprep.subr.bf16.mxu0 0
    %4139 = vmatpush1.bf16.msra.mxu0 0
    %4140 = vmatprep.subr.bf16.mxu0 0
    %4141 = vmatpush1.bf16.msra.mxu0 0
    %4142 = vmatprep.subr.bf16.mxu0 0
    %4143 = vmatpush1.bf16.msra.mxu0 0
    %4144 = vmatprep.subr.bf16.mxu0 %v4119
    %4145 = vmatpush1.bf16.msra.mxu0 %v4118
    %4146 = vmatprep.subr.bf16.mxu0 %v4116
    %4147 = vmatpush1.bf16.msra.mxu0 %v4115
    %4148 = vmatprep.subr.bf16.mxu0 %v4113
    %4149 = vmatpush1.bf16.msra.mxu0 %v4112
    %4150 = vmatprep.subr.bf16.mxu0 %v4110
    %4151 = vmatpush1.bf16.msra.mxu0 %v4109
    %4152 = vmatprep.subr.bf16.mxu0 0
    %4153 = vmatpush2.bf16.msra.mxu0 0
    %4154 = vmatprep.subr.bf16.mxu0 0
    %4155 = vmatpush2.bf16.msra.mxu0 0
    %4156 = vmatprep.subr.bf16.mxu0 0
    %4157 = vmatpush2.bf16.msra.mxu0 0
    %4158 = vmatprep.subr.bf16.mxu0 0
    %4159 = vmatpush2.bf16.msra.mxu0 0
    %4160 = vmatprep.subr.bf16.mxu0 0
    %4161 = vmatpush2.bf16.msra.mxu0 0
    %4162 = vmatprep.subr.bf16.mxu0 0
    %4163 = vmatpush2.bf16.msra.mxu0 0
    %4164 = vmatprep.subr.bf16.mxu0 0
    %4165 = vmatpush2.bf16.msra.mxu0 0
    %4166 = vmatprep.subr.bf16.mxu0 0
    %4167 = vmatpush2.bf16.msra.mxu0 0
    %4168 = vmatprep.mubr.bf16.mxu0 0
    %4169 = vmatmul.mubr.bf16.gmra.mxu0 %v4134
    %v4170 = vpop.f32.mrf.mxu0
    %v4171 = vadd.f32 0.0, %v4170
    %v4172 = vpop.f32.mrf.mxu0
    %v4173 = vadd.f32 0.0, %v4172
    %v4174 = vpop.f32.mrf.mxu0
    %v4175 = vpop.f32.mrf.mxu0
    %4176 = vdwg.mxu0
    %4177 = vmatprep.subr.bf16.mxu0 0
    %4178 = vmatpush1.bf16.msra.mxu0 0
    %4179 = vmatprep.subr.bf16.mxu0 0
    %4180 = vmatpush1.bf16.msra.mxu0 0
    %4181 = vmatprep.subr.bf16.mxu0 0
    %4182 = vmatpush1.bf16.msra.mxu0 0
    %4183 = vmatprep.subr.bf16.mxu0 0
    %4184 = vmatpush1.bf16.msra.mxu0 0
    %4185 = vmatprep.subr.bf16.mxu0 0
    %4186 = vmatpush1.bf16.msra.mxu0 %v4120
    %4187 = vmatprep.subr.bf16.mxu0 0
    %4188 = vmatpush1.bf16.msra.mxu0 %v4117
    %4189 = vmatprep.subr.bf16.mxu0 0
    %4190 = vmatpush1.bf16.msra.mxu0 %v4114
    %4191 = vmatprep.subr.bf16.mxu0 0
    %4192 = vmatpush1.bf16.msra.mxu0 %v4111
    %4193 = vmatprep.subr.bf16.mxu0 0
    %4194 = vmatpush2.bf16.msra.mxu0 0
    %4195 = vmatprep.subr.bf16.mxu0 0
    %4196 = vmatpush2.bf16.msra.mxu0 0
    %4197 = vmatprep.subr.bf16.mxu0 0
    %4198 = vmatpush2.bf16.msra.mxu0 0
    %4199 = vmatprep.subr.bf16.mxu0 0
    %4200 = vmatpush2.bf16.msra.mxu0 0
    %4201 = vmatprep.subr.bf16.mxu0 0
    %4202 = vmatpush2.bf16.msra.mxu0 0
    %4203 = vmatprep.subr.bf16.mxu0 0
    %4204 = vmatpush2.bf16.msra.mxu0 0
    %4205 = vmatprep.subr.bf16.mxu0 0
    %4206 = vmatpush2.bf16.msra.mxu0 0
    %4207 = vmatprep.subr.bf16.mxu0 0
    %4208 = vmatpush2.bf16.msra.mxu0 0
    %4209 = vmatprep.mubr.bf16.mxu0 0
    %4210 = vmatmul.mubr.bf16.gmra.mxu0 %v4134
    %v4211 = vpop.f32.mrf.mxu0
    %v4212 = vadd.f32 0.0, %v4211
    %v4213 = vpop.f32.mrf.mxu0
    %v4214 = vpop.f32.mrf.mxu0
    %v4215 = vpop.f32.mrf.mxu0
    %4216 = vdwg.mxu0
    %v4217 = vadd.f32 %v3904, %v4212
    %v4218 = vld [vmem:[#allocation2 + $0xa0] sm:$0xff]
    %v4219 = vld [vmem:[#allocation2 + $0xa8] sm:$0xff]
    %v4220 = vadd.f32 %v4218, %v3974
    %v4221 = vadd.f32 %v4219, %v3976
    %v4222 = vxor.u32 %v4220, 2147483648
    %v4223 = vxor.u32 %v4221, 2147483648
    %v4224 = vmul.f32 %v4222, 1.442695
    %v4225 = vpow.pop %v4224
    %v4226 = vmul.f32 %v4223, 1.442695
    %v4227 = vpow.pop %v4226
    %v4228 = vadd.f32 %v4225, 1.0
    %v4229 = vadd.f32 %v4227, 1.0
    %v4230 = vrcp.pop %v4228
    %v4231 = vmul.f32 1.0, %v4230
    %v4232 = vrcp.pop %v4229
    %v4233 = vmul.f32 1.0, %v4232
    %v4234 = vmul.f32 %v4233, 2.0
    %v4235 = vsub.f32 %v4234, 1.0
    %v4236 = vmul.f32 %v4231, %v3929
    %v4237 = vmul.f32 %v4231, %v4235
    %4239 = vrot.lane.b32.xlu0 %v4237, 64
    %v4240 = vpop.permute.xlu0 %4239
    %v4242 = vadd.f32 %v4236, %v4240
    %v4243 = vtanh.pop %v4242
    %v4244 = vmul.f32 %v4233, %v4243
    %v4245 = vpack.c.bf16 %v4244, %v4244
    %4247 = vrot.lane.b32.xlu0 %v4245, 64
    %v4248 = vpop.permute.xlu0 %4247
    %v4250 = vsel %vm296, %v4248, 0
    %4252 = vmatprep.subr.bf16.mxu0 0
    %4253 = vmatpush1.bf16.msra.mxu0 0
    %4254 = vmatprep.subr.bf16.mxu0 0
    %4255 = vmatpush1.bf16.msra.mxu0 0
    %4256 = vmatprep.subr.bf16.mxu0 0
    %4257 = vmatpush1.bf16.msra.mxu0 0
    %4258 = vmatprep.subr.bf16.mxu0 0
    %4259 = vmatpush1.bf16.msra.mxu0 0
    %4260 = vmatprep.subr.bf16.mxu0 %v1089
    %4261 = vmatpush1.bf16.msra.mxu0 %v1088
    %4262 = vmatprep.subr.bf16.mxu0 %v1085
    %4263 = vmatpush1.bf16.msra.mxu0 %v1084
    %4264 = vmatprep.subr.bf16.mxu0 %v1081
    %4265 = vmatpush1.bf16.msra.mxu0 %v1080
    %4266 = vmatprep.subr.bf16.mxu0 %v1077
    %4267 = vmatpush1.bf16.msra.mxu0 %v1076
    %4268 = vmatprep.subr.bf16.mxu0 0
    %4269 = vmatpush2.bf16.msra.mxu0 0
    %4270 = vmatprep.subr.bf16.mxu0 0
    %4271 = vmatpush2.bf16.msra.mxu0 0
    %4272 = vmatprep.subr.bf16.mxu0 0
    %4273 = vmatpush2.bf16.msra.mxu0 0
    %4274 = vmatprep.subr.bf16.mxu0 0
    %4275 = vmatpush2.bf16.msra.mxu0 0
    %4276 = vmatprep.subr.bf16.mxu0 0
    %4277 = vmatpush2.bf16.msra.mxu0 0
    %4278 = vmatprep.subr.bf16.mxu0 0
    %4279 = vmatpush2.bf16.msra.mxu0 0
    %4280 = vmatprep.subr.bf16.mxu0 0
    %4281 = vmatpush2.bf16.msra.mxu0 0
    %4282 = vmatprep.subr.bf16.mxu0 0
    %4283 = vmatpush2.bf16.msra.mxu0 0
    %4284 = vmatprep.mubr.bf16.mxu0 0
    %4285 = vmatmul.mubr.bf16.gmra.mxu0 %v4250
    %v4286 = vpop.f32.mrf.mxu0
    %v4287 = vadd.f32 0.0, %v4286
    %v4288 = vpop.f32.mrf.mxu0
    %v4289 = vadd.f32 0.0, %v4288
    %v4290 = vpop.f32.mrf.mxu0
    %v4291 = vpop.f32.mrf.mxu0
    %4292 = vdwg.mxu0
    %4293 = vmatprep.subr.bf16.mxu0 0
    %4294 = vmatpush1.bf16.msra.mxu0 0
    %4295 = vmatprep.subr.bf16.mxu0 0
    %4296 = vmatpush1.bf16.msra.mxu0 0
    %4297 = vmatprep.subr.bf16.mxu0 0
    %4298 = vmatpush1.bf16.msra.mxu0 0
    %4299 = vmatprep.subr.bf16.mxu0 0
    %4300 = vmatpush1.bf16.msra.mxu0 0
    %4301 = vmatprep.subr.bf16.mxu0 %v1091
    %4302 = vmatpush1.bf16.msra.mxu0 %v1090
    %4303 = vmatprep.subr.bf16.mxu0 %v1087
    %4304 = vmatpush1.bf16.msra.mxu0 %v1086
    %4305 = vmatprep.subr.bf16.mxu0 %v1083
    %4306 = vmatpush1.bf16.msra.mxu0 %v1082
    %4307 = vmatprep.subr.bf16.mxu0 %v1079
    %4308 = vmatpush1.bf16.msra.mxu0 %v1078
    %4309 = vmatprep.subr.bf16.mxu0 0
    %4310 = vmatpush2.bf16.msra.mxu0 0
    %4311 = vmatprep.subr.bf16.mxu0 0
    %4312 = vmatpush2.bf16.msra.mxu0 0
    %4313 = vmatprep.subr.bf16.mxu0 0
    %4314 = vmatpush2.bf16.msra.mxu0 0
    %4315 = vmatprep.subr.bf16.mxu0 0
    %4316 = vmatpush2.bf16.msra.mxu0 0
    %4317 = vmatprep.subr.bf16.mxu0 0
    %4318 = vmatpush2.bf16.msra.mxu0 0
    %4319 = vmatprep.subr.bf16.mxu0 0
    %4320 = vmatpush2.bf16.msra.mxu0 0
    %4321 = vmatprep.subr.bf16.mxu0 0
    %4322 = vmatpush2.bf16.msra.mxu0 0
    %4323 = vmatprep.subr.bf16.mxu0 0
    %4324 = vmatpush2.bf16.msra.mxu0 0
    %4325 = vmatprep.mubr.bf16.mxu0 0
    %4326 = vmatmul.mubr.bf16.gmra.mxu0 %v4250
    %v4327 = vpop.f32.mrf.mxu0
    %v4328 = vadd.f32 0.0, %v4327
    %v4329 = vpop.f32.mrf.mxu0
    %v4330 = vadd.f32 0.0, %v4329
    %v4331 = vpop.f32.mrf.mxu0
    %v4332 = vpop.f32.mrf.mxu0
    %4333 = vdwg.mxu0
    %v4334 = vadd.f32 %v1198, %v4328
    %v4335 = vadd.f32 %v1202, %v4330
    %v4336 = vadd.f32 %v4334, %v4171
    %v4337 = vadd.f32 %v4335, %v4173
    %v4338 = vxor.u32 %v4336, 2147483648
    %v4339 = vxor.u32 %v4337, 2147483648
    %v4340 = vmul.f32 %v4338, 1.442695
    %v4341 = vpow.pop %v4340
    %v4342 = vmul.f32 %v4339, 1.442695
    %v4343 = vpow.pop %v4342
    %v4344 = vadd.f32 %v4341, 1.0
    %v4345 = vadd.f32 %v4343, 1.0
    %v4346 = vrcp.pop %v4344
    %v4347 = vmul.f32 1.0, %v4346
    %v4348 = vrcp.pop %v4345
    %v4349 = vmul.f32 1.0, %v4348
    %v4350 = vmul.f32 %v4349, 2.0
    %v4351 = vsub.f32 %v4350, 1.0
    %v4352 = vmul.f32 %v4347, %v4045
    %v4353 = vmul.f32 %v4347, %v4351
    %4355 = vrot.lane.b32.xlu0 %v4353, 64
    %v4356 = vpop.permute.xlu0 %4355
    %v4358 = vadd.f32 %v4352, %v4356
    %v4359 = vtanh.pop %v4358
    %v4360 = vmul.f32 %v4349, %v4359
    %v4361 = vpack.c.bf16 %v4360, %v4360
    %s4362 = scalar_lea.vmem [#allocation4], 960
    %v4363 = vld [vmem:[%s4362] sm:$0xff]
    %v4364 = vld [vmem:[%s4362 + $0x8] sm:$0xf]
    %v4365 = vld [vmem:[%s4362 + $0xc] sm:$0xff]
    %v4366 = vld [vmem:[%s4362 + $0x14] sm:$0xf]
    %v4367 = vld [vmem:[%s4362 + $0x18] sm:$0xff]
    %v4368 = vld [vmem:[%s4362 + $0x20] sm:$0xf]
    %v4369 = vld [vmem:[%s4362 + $0x24] sm:$0xff]
    %v4370 = vld [vmem:[%s4362 + $0x2c] sm:$0xf]
    %v4371 = vld [vmem:[%s4362 + $0x30] sm:$0xff]
    %v4372 = vld [vmem:[%s4362 + $0x38] sm:$0xf]
    %v4373 = vld [vmem:[%s4362 + $0x3c] sm:$0xff]
    %v4374 = vld [vmem:[%s4362 + $0x44] sm:$0xf]
    %v4375 = vld [vmem:[%s4362 + $0x48] sm:$0xff]
    %v4376 = vld [vmem:[%s4362 + $0x50] sm:$0xf]
    %v4377 = vld [vmem:[%s4362 + $0x54] sm:$0xff]
    %v4378 = vld [vmem:[%s4362 + $0x5c] sm:$0xf]
    %4380 = vrot.lane.b32.xlu0 %v4361, 64
    %v4381 = vpop.permute.xlu0 %4380
    %v4398 = vunpack.c.l.b16 %v4363
    %v4399 = vunpack.c.h.b16 %v4363
    %v4400 = vunpack.c.l.b16 %v4364
    %v4401 = vunpack.c.l.b16 %v4365
    %v4402 = vunpack.c.h.b16 %v4365
    %v4403 = vunpack.c.l.b16 %v4366
    %v4404 = vunpack.c.l.b16 %v4367
    %v4405 = vunpack.c.h.b16 %v4367
    %v4406 = vunpack.c.l.b16 %v4368
    %v4407 = vunpack.c.l.b16 %v4369
    %v4408 = vunpack.c.h.b16 %v4369
    %v4409 = vunpack.c.l.b16 %v4370
    %v4410 = vunpack.c.l.b16 %v4371
    %v4411 = vunpack.c.h.b16 %v4371
    %v4412 = vunpack.c.l.b16 %v4372
    %v4413 = vunpack.c.l.b16 %v4373
    %v4414 = vunpack.c.h.b16 %v4373
    %v4415 = vunpack.c.l.b16 %v4374
    %v4416 = vunpack.c.l.b16 %v4375
    %v4417 = vunpack.c.h.b16 %v4375
    %v4418 = vunpack.c.l.b16 %v4376
    %v4419 = vunpack.c.l.b16 %v4377
    %v4420 = vunpack.c.h.b16 %v4377
    %v4421 = vunpack.c.l.b16 %v4378
    %v4422 = vpack.c.b16 %v4401, %v4398
    %v4423 = vpack.c.b16 %v4402, %v4399
    %v4424 = vpack.c.b16 %v4403, %v4400
    %v4425 = vpack.c.b16 %v4407, %v4404
    %v4426 = vpack.c.b16 %v4408, %v4405
    %v4427 = vpack.c.b16 %v4409, %v4406
    %v4428 = vpack.c.b16 %v4413, %v4410
    %v4429 = vpack.c.b16 %v4414, %v4411
    %v4430 = vpack.c.b16 %v4415, %v4412
    %v4431 = vpack.c.b16 %v4419, %v4416
    %v4432 = vpack.c.b16 %v4420, %v4417
    %v4433 = vpack.c.b16 %v4421, %v4418
    %v4447 = vsel %vm296, %v4381, 0
    %4449 = vmatprep.subr.bf16.mxu0 0
    %4450 = vmatpush1.bf16.msra.mxu0 0
    %4451 = vmatprep.subr.bf16.mxu0 0
    %4452 = vmatpush1.bf16.msra.mxu0 0
    %4453 = vmatprep.subr.bf16.mxu0 0
    %4454 = vmatpush1.bf16.msra.mxu0 0
    %4455 = vmatprep.subr.bf16.mxu0 0
    %4456 = vmatpush1.bf16.msra.mxu0 0
    %4457 = vmatprep.subr.bf16.mxu0 %v4432
    %4458 = vmatpush1.bf16.msra.mxu0 %v4431
    %4459 = vmatprep.subr.bf16.mxu0 %v4429
    %4460 = vmatpush1.bf16.msra.mxu0 %v4428
    %4461 = vmatprep.subr.bf16.mxu0 %v4426
    %4462 = vmatpush1.bf16.msra.mxu0 %v4425
    %4463 = vmatprep.subr.bf16.mxu0 %v4423
    %4464 = vmatpush1.bf16.msra.mxu0 %v4422
    %4465 = vmatprep.subr.bf16.mxu0 0
    %4466 = vmatpush2.bf16.msra.mxu0 0
    %4467 = vmatprep.subr.bf16.mxu0 0
    %4468 = vmatpush2.bf16.msra.mxu0 0
    %4469 = vmatprep.subr.bf16.mxu0 0
    %4470 = vmatpush2.bf16.msra.mxu0 0
    %4471 = vmatprep.subr.bf16.mxu0 0
    %4472 = vmatpush2.bf16.msra.mxu0 0
    %4473 = vmatprep.subr.bf16.mxu0 0
    %4474 = vmatpush2.bf16.msra.mxu0 0
    %4475 = vmatprep.subr.bf16.mxu0 0
    %4476 = vmatpush2.bf16.msra.mxu0 0
    %4477 = vmatprep.subr.bf16.mxu0 0
    %4478 = vmatpush2.bf16.msra.mxu0 0
    %4479 = vmatprep.subr.bf16.mxu0 0
    %4480 = vmatpush2.bf16.msra.mxu0 0
    %4481 = vmatprep.mubr.bf16.mxu0 0
    %4482 = vmatmul.mubr.bf16.gmra.mxu0 %v4447
    %v4483 = vpop.f32.mrf.mxu0
    %v4484 = vadd.f32 0.0, %v4483
    %v4485 = vpop.f32.mrf.mxu0
    %v4486 = vadd.f32 0.0, %v4485
    %v4487 = vpop.f32.mrf.mxu0
    %v4488 = vpop.f32.mrf.mxu0
    %4489 = vdwg.mxu0
    %4490 = vmatprep.subr.bf16.mxu0 0
    %4491 = vmatpush1.bf16.msra.mxu0 0
    %4492 = vmatprep.subr.bf16.mxu0 0
    %4493 = vmatpush1.bf16.msra.mxu0 0
    %4494 = vmatprep.subr.bf16.mxu0 0
    %4495 = vmatpush1.bf16.msra.mxu0 0
    %4496 = vmatprep.subr.bf16.mxu0 0
    %4497 = vmatpush1.bf16.msra.mxu0 0
    %4498 = vmatprep.subr.bf16.mxu0 0
    %4499 = vmatpush1.bf16.msra.mxu0 %v4433
    %4500 = vmatprep.subr.bf16.mxu0 0
    %4501 = vmatpush1.bf16.msra.mxu0 %v4430
    %4502 = vmatprep.subr.bf16.mxu0 0
    %4503 = vmatpush1.bf16.msra.mxu0 %v4427
    %4504 = vmatprep.subr.bf16.mxu0 0
    %4505 = vmatpush1.bf16.msra.mxu0 %v4424
    %4506 = vmatprep.subr.bf16.mxu0 0
    %4507 = vmatpush2.bf16.msra.mxu0 0
    %4508 = vmatprep.subr.bf16.mxu0 0
    %4509 = vmatpush2.bf16.msra.mxu0 0
    %4510 = vmatprep.subr.bf16.mxu0 0
    %4511 = vmatpush2.bf16.msra.mxu0 0
    %4512 = vmatprep.subr.bf16.mxu0 0
    %4513 = vmatpush2.bf16.msra.mxu0 0
    %4514 = vmatprep.subr.bf16.mxu0 0
    %4515 = vmatpush2.bf16.msra.mxu0 0
    %4516 = vmatprep.subr.bf16.mxu0 0
    %4517 = vmatpush2.bf16.msra.mxu0 0
    %4518 = vmatprep.subr.bf16.mxu0 0
    %4519 = vmatpush2.bf16.msra.mxu0 0
    %4520 = vmatprep.subr.bf16.mxu0 0
    %4521 = vmatpush2.bf16.msra.mxu0 0
    %4522 = vmatprep.mubr.bf16.mxu0 0
    %4523 = vmatmul.mubr.bf16.gmra.mxu0 %v4447
    %v4524 = vpop.f32.mrf.mxu0
    %v4525 = vadd.f32 0.0, %v4524
    %v4526 = vpop.f32.mrf.mxu0
    %v4527 = vpop.f32.mrf.mxu0
    %v4528 = vpop.f32.mrf.mxu0
    %4529 = vdwg.mxu0
    %v4530 = vadd.f32 %v4217, %v4525
    %v4531 = vld [vmem:[#allocation2 + $0xb0] sm:$0xff]
    %v4532 = vld [vmem:[#allocation2 + $0xb8] sm:$0xff]
    %v4533 = vadd.f32 %v4531, %v4287
    %v4534 = vadd.f32 %v4532, %v4289
    %v4535 = vxor.u32 %v4533, 2147483648
    %v4536 = vxor.u32 %v4534, 2147483648
    %v4537 = vmul.f32 %v4535, 1.442695
    %v4538 = vpow.pop %v4537
    %v4539 = vmul.f32 %v4536, 1.442695
    %v4540 = vpow.pop %v4539
    %v4541 = vadd.f32 %v4538, 1.0
    %v4542 = vadd.f32 %v4540, 1.0
    %v4543 = vrcp.pop %v4541
    %v4544 = vmul.f32 1.0, %v4543
    %v4545 = vrcp.pop %v4542
    %v4546 = vmul.f32 1.0, %v4545
    %v4547 = vmul.f32 %v4546, 2.0
    %v4548 = vsub.f32 %v4547, 1.0
    %v4549 = vmul.f32 %v4544, %v4242
    %v4550 = vmul.f32 %v4544, %v4548
    %4552 = vrot.lane.b32.xlu0 %v4550, 64
    %v4553 = vpop.permute.xlu0 %4552
    %v4555 = vadd.f32 %v4549, %v4553
    %v4556 = vtanh.pop %v4555
    %v4557 = vmul.f32 %v4546, %v4556
    %v4558 = vpack.c.bf16 %v4557, %v4557
    %4560 = vrot.lane.b32.xlu0 %v4558, 64
    %v4561 = vpop.permute.xlu0 %4560
    %v4563 = vsel %vm296, %v4561, 0
    %4565 = vmatprep.subr.bf16.mxu0 0
    %4566 = vmatpush1.bf16.msra.mxu0 0
    %4567 = vmatprep.subr.bf16.mxu0 0
    %4568 = vmatpush1.bf16.msra.mxu0 0
    %4569 = vmatprep.subr.bf16.mxu0 0
    %4570 = vmatpush1.bf16.msra.mxu0 0
    %4571 = vmatprep.subr.bf16.mxu0 0
    %4572 = vmatpush1.bf16.msra.mxu0 0
    %4573 = vmatprep.subr.bf16.mxu0 %v1091
    %4574 = vmatpush1.bf16.msra.mxu0 %v1090
    %4575 = vmatprep.subr.bf16.mxu0 %v1087
    %4576 = vmatpush1.bf16.msra.mxu0 %v1086
    %4577 = vmatprep.subr.bf16.mxu0 %v1083
    %4578 = vmatpush1.bf16.msra.mxu0 %v1082
    %4579 = vmatprep.subr.bf16.mxu0 %v1079
    %4580 = vmatpush1.bf16.msra.mxu0 %v1078
    %4581 = vmatprep.subr.bf16.mxu0 0
    %4582 = vmatpush2.bf16.msra.mxu0 0
    %4583 = vmatprep.subr.bf16.mxu0 0
    %4584 = vmatpush2.bf16.msra.mxu0 0
    %4585 = vmatprep.subr.bf16.mxu0 0
    %4586 = vmatpush2.bf16.msra.mxu0 0
    %4587 = vmatprep.subr.bf16.mxu0 0
    %4588 = vmatpush2.bf16.msra.mxu0 0
    %4589 = vmatprep.subr.bf16.mxu0 0
    %4590 = vmatpush2.bf16.msra.mxu0 0
    %4591 = vmatprep.subr.bf16.mxu0 0
    %4592 = vmatpush2.bf16.msra.mxu0 0
    %4593 = vmatprep.subr.bf16.mxu0 0
    %4594 = vmatpush2.bf16.msra.mxu0 0
    %4595 = vmatprep.subr.bf16.mxu0 0
    %4596 = vmatpush2.bf16.msra.mxu0 0
    %4597 = vmatprep.mubr.bf16.mxu0 0
    %4598 = vmatmul.mubr.bf16.gmra.mxu0 %v4563
    %v4599 = vpop.f32.mrf.mxu0
    %v4600 = vadd.f32 0.0, %v4599
    %v4601 = vpop.f32.mrf.mxu0
    %v4602 = vadd.f32 0.0, %v4601
    %v4603 = vpop.f32.mrf.mxu0
    %v4604 = vpop.f32.mrf.mxu0
    %4605 = vdwg.mxu0
    %v4606 = vadd.f32 %v1198, %v4600
    %v4607 = vadd.f32 %v1202, %v4602
    %v4608 = vadd.f32 %v4606, %v4484
    %v4609 = vadd.f32 %v4607, %v4486
    %v4610 = vxor.u32 %v4608, 2147483648
    %v4611 = vxor.u32 %v4609, 2147483648
    %v4612 = vmul.f32 %v4610, 1.442695
    %v4613 = vpow.pop %v4612
    %v4614 = vmul.f32 %v4611, 1.442695
    %v4615 = vpow.pop %v4614
    %v4616 = vadd.f32 %v4613, 1.0
    %v4617 = vadd.f32 %v4615, 1.0
    %v4618 = vrcp.pop %v4616
    %v4619 = vmul.f32 1.0, %v4618
    %v4620 = vrcp.pop %v4617
    %v4621 = vmul.f32 1.0, %v4620
    %v4622 = vmul.f32 %v4621, 2.0
    %v4623 = vsub.f32 %v4622, 1.0
    %v4624 = vmul.f32 %v4619, %v4358
    %v4625 = vmul.f32 %v4619, %v4623
    %4627 = vrot.lane.b32.xlu0 %v4625, 64
    %v4628 = vpop.permute.xlu0 %4627
    %v4630 = vadd.f32 %v4624, %v4628
    %v4631 = vtanh.pop %v4630
    %v4632 = vmul.f32 %v4621, %v4631
    %v4633 = vpack.c.bf16 %v4632, %v4632
    %s4634 = scalar_lea.vmem [#allocation4], 1056
    %v4635 = vld [vmem:[%s4634 + $0x8] sm:$0xf]
    %v4636 = vld [vmem:[%s4634 + $0x14] sm:$0xf]
    %v4637 = vld [vmem:[%s4634 + $0x20] sm:$0xf]
    %v4638 = vld [vmem:[%s4634 + $0x2c] sm:$0xf]
    %v4639 = vld [vmem:[%s4634 + $0x38] sm:$0xf]
    %v4640 = vld [vmem:[%s4634 + $0x44] sm:$0xf]
    %v4641 = vld [vmem:[%s4634 + $0x50] sm:$0xf]
    %v4642 = vld [vmem:[%s4634 + $0x5c] sm:$0xf]
    %4644 = vrot.lane.b32.xlu0 %v4633, 64
    %v4645 = vpop.permute.xlu0 %4644
    %v4654 = vunpack.c.l.b16 %v4635
    %v4655 = vunpack.c.l.b16 %v4636
    %v4656 = vunpack.c.l.b16 %v4637
    %v4657 = vunpack.c.l.b16 %v4638
    %v4658 = vunpack.c.l.b16 %v4639
    %v4659 = vunpack.c.l.b16 %v4640
    %v4660 = vunpack.c.l.b16 %v4641
    %v4661 = vunpack.c.l.b16 %v4642
    %v4662 = vpack.c.b16 %v4655, %v4654
    %v4663 = vpack.c.b16 %v4657, %v4656
    %v4664 = vpack.c.b16 %v4659, %v4658
    %v4665 = vpack.c.b16 %v4661, %v4660
    %v4671 = vsel %vm296, %v4645, 0
    %4673 = vmatprep.subr.bf16.mxu0 0
    %4674 = vmatpush1.bf16.msra.mxu0 0
    %4675 = vmatprep.subr.bf16.mxu0 0
    %4676 = vmatpush1.bf16.msra.mxu0 0
    %4677 = vmatprep.subr.bf16.mxu0 0
    %4678 = vmatpush1.bf16.msra.mxu0 0
    %4679 = vmatprep.subr.bf16.mxu0 0
    %4680 = vmatpush1.bf16.msra.mxu0 0
    %4681 = vmatprep.subr.bf16.mxu0 0
    %4682 = vmatpush1.bf16.msra.mxu0 %v4665
    %4683 = vmatprep.subr.bf16.mxu0 0
    %4684 = vmatpush1.bf16.msra.mxu0 %v4664
    %4685 = vmatprep.subr.bf16.mxu0 0
    %4686 = vmatpush1.bf16.msra.mxu0 %v4663
    %4687 = vmatprep.subr.bf16.mxu0 0
    %4688 = vmatpush1.bf16.msra.mxu0 %v4662
    %4689 = vmatprep.subr.bf16.mxu0 0
    %4690 = vmatpush2.bf16.msra.mxu0 0
    %4691 = vmatprep.subr.bf16.mxu0 0
    %4692 = vmatpush2.bf16.msra.mxu0 0
    %4693 = vmatprep.subr.bf16.mxu0 0
    %4694 = vmatpush2.bf16.msra.mxu0 0
    %4695 = vmatprep.subr.bf16.mxu0 0
    %4696 = vmatpush2.bf16.msra.mxu0 0
    %4697 = vmatprep.subr.bf16.mxu0 0
    %4698 = vmatpush2.bf16.msra.mxu0 0
    %4699 = vmatprep.subr.bf16.mxu0 0
    %4700 = vmatpush2.bf16.msra.mxu0 0
    %4701 = vmatprep.subr.bf16.mxu0 0
    %4702 = vmatpush2.bf16.msra.mxu0 0
    %4703 = vmatprep.subr.bf16.mxu0 0
    %4704 = vmatpush2.bf16.msra.mxu0 0
    %4705 = vmatprep.mubr.bf16.mxu0 0
    %4706 = vmatmul.mubr.bf16.gmra.mxu0 %v4671
    %v4707 = vpop.f32.mrf.mxu0
    %v4708 = vadd.f32 0.0, %v4707
    %v4709 = vpop.f32.mrf.mxu0
    %v4710 = vpop.f32.mrf.mxu0
    %v4711 = vpop.f32.mrf.mxu0
    %4712 = vdwg.mxu0
    %v4713 = vadd.f32 %v4530, %v4708
    %v4714 = vld [vmem:[%s10] sm:$0x1]
    %v4716 = vlaneseq
    %v4717 = vshrl.u32 %v4716, 7
    %v4718 = vsub.s32 0, %v4717
    %v4719 = vrot.slane %v4714, %v4718
    %v4721 = vadd.f32 %v4713, %v4719
    %v4722 = vmax.f32 %v4721, 0.0
    %v4723 = vld [vmem:[%s11] sm:$0x1]
    %v4725 = vlaneseq
    %v4726 = vshrl.u32 %v4725, 7
    %v4727 = vsub.s32 0, %v4726
    %v4728 = vrot.slane %v4723, %v4727
    %v4730 = vmul.f32 %v4722, %v4728
    %4731 = vadd.xlane.f32.xlu0 %v4730
    %v4732 = vpop.xlane.xlu0 %4731
    %v4733 = vld [vmem:[#allocation3] sm:$0x1]
    %v4735 = vlaneseq
    %v4736 = vshrl.u32 %v4735, 7
    %v4737 = vsub.s32 0, %v4736
    %v4738 = vrot.slane %v4733, %v4737
    %v4740 = vadd.f32 %v4732, %v4738
    %vm4741 = vcmask 7168
    %4742 = vst.msk [vmem:[%s13] sm:$0xff] %vm4741, %v4740
    // Predicated region
    $region58: #{cnn_lstm_forward.1} parent=1 // pred_check
      _
    $region59: #{cnn_lstm_forward.1} parent=1 // pred_check_branch
      %4744 = sbr.rel (0) target = $region61
    $region60: #{cnn_lstm_forward.1} parent=1 // pred_region
      _
    $region61: #{cnn_lstm_forward.1} parent=1 // pred_fallthru
      _
    // Predicated region
    $region62: #{cnn_lstm_forward.1} parent=1 // pred_check
      _
    $region63: #{cnn_lstm_forward.1} parent=1 // pred_check_branch
      %4746 = sbr.rel (0) target = $region65
    $region64: #{cnn_lstm_forward.1} parent=1 // pred_region
      _
    $region65: #{cnn_lstm_forward.1} parent=1 // pred_fallthru
      _
    %4747 = vsyncpa [#allocation5], 1

</llo_original>
